<compile_context>
chip_gen: v6e
topology: v6e:2x2x1
jax: 0.10.0
libtpu: 0.0.40
codegen_flags: <defaults>
</compile_context>

<pallas_src>
import math

import jax
import jax.numpy as jnp
from jax.experimental import pallas as pl
from jax.experimental.pallas import tpu as pltpu


def _round_up(x, m):
    return (x + m - 1) // m * m


# ----------------------------- Pallas kernel ------------------------------- #
def _make_tcn_kernel(layer_cfgs, k, L, btl, mxu_dtype):
    """layer_cfgs: tuple of (c_in_p, c_out_p, dilation, has_downsample),
    channel counts already padded to the dtype sublane tile."""
    f32 = jnp.float32
    prec = jax.lax.Precision.HIGHEST if mxu_dtype == jnp.float32 else None

    # Distinct in-range shifts used by any conv in the stack (masks are shared
    # between conv1/conv2 of a block and across blocks with equal shift).
    shifts = sorted({(k - 1 - j) * d
                     for (_, _, d, _) in layer_cfgs
                     for j in range(k)
                     if 0 < (k - 1 - j) * d < L})

    def kernel(x_ref, *refs):
        o_ref = refs[-1]
        wrefs = refs[:-1]

        # Lane position within each length-L segment (B-major, L-minor lanes).
        l_pos = jax.lax.broadcasted_iota(jnp.int32, (1, btl), 1) % L
        # Hoisted causal masks — built once per grid step, reused by every conv.
        masks = {s: l_pos >= s for s in shifts}

        def shifted(inp, s):
            # shifted[:, t] = inp[:, t - s] within each length-L segment, 0 for
            # t < s  (== "pad left by s, chomp right by s").
            if s == 0:
                return inp
            if s >= L:                                   # fully-chomped tap
                return jnp.zeros_like(inp)
            rolled = pltpu.roll(inp, shift=s, axis=1)    # XLU rotate, not MXU
            return jnp.where(masks[s], rolled, jnp.zeros_like(rolled))  # VPU sel

        def causal_conv(inp_m, w_stacked, b, d):
            # inp_m: (c_in_p, btl) already in MXU dtype
            # w_stacked: (c_out_p, k*c_in_p);  b: (c_out_p, 1) f32
            taps = [shifted(inp_m, (k - 1 - j) * d) for j in range(k)]
            xs = taps[0] if k == 1 else jnp.concatenate(taps, axis=0)
            acc = jnp.dot(w_stacked, xs, preferred_element_type=f32,
                          precision=prec)
            return acc + b                               # bias folded once (f32)

        x = x_ref[...].astype(f32)
        idx = 0
        for (c_in_p, c_out_p, d, has_ds) in layer_cfgs:
            w1 = wrefs[idx][...]
            b1 = wrefs[idx + 1][...]
            w2 = wrefs[idx + 2][...]
            b2 = wrefs[idx + 3][...]
            idx += 4
            x_m = x.astype(mxu_dtype)                    # cast once per layer input
            y = jnp.maximum(causal_conv(x_m, w1, b1, d), 0.0)
            # TODO(synk): nn.Dropout is identity in eval mode; train-mode dropout omitted.
            y = jnp.maximum(causal_conv(y.astype(mxu_dtype), w2, b2, d), 0.0)
            if has_ds:
                wd = wrefs[idx][...]
                bd = wrefs[idx + 1][...]
                idx += 2
                res = jnp.dot(wd, x_m, preferred_element_type=f32,
                              precision=prec) + bd
            else:
                res = x                                  # residual stays f32
            x = jnp.maximum(y + res, 0.0)                # elementwise in f32 (VPU)
        o_ref[...] = x.astype(o_ref.dtype)

    return kernel


def _choose_batch_tile(B, L, max_lanes=2048):
    """How many batch elements share one grid step (lane width = BT*L)."""
    if B * L <= max_lanes:
        return B
    bt = max(1, max_lanes // L)
    while bt > 1 and (bt * L) % 128 != 0:
        bt -= 1
    if (bt * L) % 128 != 0:
        return B
    return bt


def tcn_forward_pallas(x, params_list, kernel_size, mxu_dtype=jnp.float32):
    """Fused TemporalConvNet forward. x: (B, C_in, L) f32 -> (B, C_last, L) f32."""
    B, c_in0, L = x.shape
    k = kernel_size
    cmul = 16 if mxu_dtype == jnp.bfloat16 else 8        # sublane tile per dtype

    bt = _choose_batch_tile(B, L)
    bp = _round_up(B, bt)
    btl = bt * L

    # ---- wrapper-side layout plumbing (plain JAX glue) ----
    c_in0_p = _round_up(c_in0, cmul)
    if bp != B:
        x = jnp.pad(x, ((0, bp - B), (0, 0), (0, 0)))
    if c_in0_p != c_in0:
        x = jnp.pad(x, ((0, 0), (0, c_in0_p - c_in0), (0, 0)))
    x2d = jnp.transpose(x, (1, 0, 2)).reshape(c_in0_p, bp * L)

    layer_cfgs = []
    args = [x2d]
    in_specs = [pl.BlockSpec((c_in0_p, btl), lambda b: (0, b))]

    def stack_w(w, co_p, ci_p):
        # (C_out, C_in, k) -> zero-pad channels -> (C_out_p, k*C_in_p),
        # tap-major columns, pre-cast to the MXU dtype.
        co, ci, kk = w.shape
        w = jnp.pad(w, ((0, co_p - co), (0, ci_p - ci), (0, 0)))
        return jnp.transpose(w, (0, 2, 1)).reshape(co_p, kk * ci_p).astype(mxu_dtype)

    def pad_b(b, co_p):
        return jnp.pad(b, (0, co_p - b.shape[0])).reshape(co_p, 1)

    c_prev_p = c_in0_p
    for i, p in enumerate(params_list):
        c_out, c_in, _k = p["w1"].shape
        d = 2 ** i
        has_ds = p["wd"] is not None
        c_in_p = c_prev_p
        c_out_p = _round_up(c_out, cmul)
        layer_cfgs.append((c_in_p, c_out_p, d, has_ds))

        w1s = stack_w(p["w1"], c_out_p, c_in_p)
        w2s = stack_w(p["w2"], c_out_p, c_out_p)
        b1 = pad_b(p["b1"], c_out_p)
        b2 = pad_b(p["b2"], c_out_p)
        args += [w1s, b1, w2s, b2]
        in_specs += [
            pl.BlockSpec(w1s.shape, lambda b: (0, 0)),
            pl.BlockSpec(b1.shape, lambda b: (0, 0)),
            pl.BlockSpec(w2s.shape, lambda b: (0, 0)),
            pl.BlockSpec(b2.shape, lambda b: (0, 0)),
        ]
        if has_ds:
            wd = jnp.pad(p["wd"][:, :, 0],
                         ((0, c_out_p - c_out), (0, c_in_p - c_in))).astype(mxu_dtype)
            bd = pad_b(p["bd"], c_out_p)
            args += [wd, bd]
            in_specs += [pl.BlockSpec(wd.shape, lambda b: (0, 0)),
                         pl.BlockSpec(bd.shape, lambda b: (0, 0))]
        c_prev_p = c_out_p

    c_last = params_list[-1]["w1"].shape[0]
    c_last_p = c_prev_p

    # NOTE: for large L, tile along L with a left halo of (k-1)*d per block and
    # set pltpu.CompilerParams(vmem_limit_bytes=...) (tighter budget on v7x's
    # 64 MiB VMEM).  At the current lane budget (<= 2048 lanes/step) the default
    # scoped-VMEM limit is ample on all of v5e/v6e/v7x.
    out2d = pl.pallas_call(
        _make_tcn_kernel(tuple(layer_cfgs), k, L, btl, mxu_dtype),
        out_shape=jax.ShapeDtypeStruct((c_last_p, bp * L), jnp.float32),
        grid=(bp // bt,),
        in_specs=in_specs,
        out_specs=pl.BlockSpec((c_last_p, btl), lambda b: (0, b)),
        compiler_params=pltpu.CompilerParams(dimension_semantics=("parallel",)),
    )(*args)

    out = out2d.reshape(c_last_p, bp, L).transpose(1, 0, 2)
    return out[:B, :c_last, :]


# -------------------------- parameter construction ------------------------- #
def _apply_weight_norm(v):
    # weight_norm(dim=0): w = g * v / ||v||_(in,k); at init g = ||v||, so w == v.
    norm = jnp.sqrt(jnp.sum(v * v, axis=(1, 2), keepdims=True))
    return norm * v / norm


def _xavier_uniform(key, shape):
    # shape = (C_out, C_in, k): fan_in = C_in*k, fan_out = C_out*k
    fan_out = shape[0] * shape[2]
    fan_in = shape[1] * shape[2]
    bound = math.sqrt(6.0 / (fan_in + fan_out))
    return jax.random.uniform(key, shape, jnp.float32, -bound, bound)


def init_tcn_params(key, num_inputs, num_channels, k):
    params = []
    for i, c_out in enumerate(num_channels):
        c_in = num_inputs if i == 0 else num_channels[i - 1]
        key, k1, k2, k3, k4, k5, k6 = jax.random.split(key, 7)
        w1 = _apply_weight_norm(_xavier_uniform(k1, (c_out, c_in, k)))
        b1 = jax.random.uniform(k2, (c_out,), jnp.float32,
                                -1.0 / math.sqrt(c_in * k), 1.0 / math.sqrt(c_in * k))
        w2 = _apply_weight_norm(_xavier_uniform(k3, (c_out, c_out, k)))
        b2 = jax.random.uniform(k4, (c_out,), jnp.float32,
                                -1.0 / math.sqrt(c_out * k), 1.0 / math.sqrt(c_out * k))
        if c_in != c_out:
            wd = _xavier_uniform(k5, (c_out, c_in, 1))
            bd = jax.random.uniform(k6, (c_out,), jnp.float32,
                                    -1.0 / math.sqrt(c_in), 1.0 / math.sqrt(c_in))
        else:
            wd, bd = None, None
        params.append(dict(w1=w1, b1=b1, w2=w2, b2=b2, wd=wd, bd=bd))
    return params


# ----------------------- pure-JAX reference (checking) --------------------- #
def _ref_causal_conv(x, w, b, dilation):
    k = w.shape[2]
    pad = (k - 1) * dilation
    y = jax.lax.conv_general_dilated(
        x, w, window_strides=(1,), padding=[(pad, pad)],
        rhs_dilation=(dilation,), dimension_numbers=("NCH", "OIH", "NCH"),
        precision=jax.lax.Precision.HIGHEST)
    y = y + b[None, :, None]
    return y if pad == 0 else y[:, :, :-pad]                    # Chomp1d


def tcn_forward_ref(x, params_list, kernel_size):
    for i, p in enumerate(params_list):
        d = 2 ** i
        y = jax.nn.relu(_ref_causal_conv(x, p["w1"], p["b1"], d))
        y = jax.nn.relu(_ref_causal_conv(y, p["w2"], p["b2"], d))
        if p["wd"] is not None:
            res = jnp.einsum("oi,bil->bol", p["wd"][:, :, 0], x,
                             precision=jax.lax.Precision.HIGHEST) + p["bd"][None, :, None]
        else:
            res = x
        x = jax.nn.relu(y + res)
    return x


# ----------------------------------- main ----------------------------------- #
if __name__ == "__main__":
    key = jax.random.PRNGKey(0)
    num_inputs, num_channels, kernel_size = 4, (8, 8, 16), 2
    B, L = 2, 16

    key, kx = jax.random.split(key)
    x = jax.random.normal(kx, (B, num_inputs, L), jnp.float32)
    params = init_tcn_params(key, num_inputs, num_channels, kernel_size)

    ref = tcn_forward_ref(x, params, kernel_size)

    # f32 MXU operands (precision=HIGHEST) — exact-semantics path (v5e-friendly).
    out = jax.block_until_ready(tcn_forward_pallas(x, params, kernel_size,
                                                   mxu_dtype=jnp.float32))
    assert out.shape == (B, num_channels[-1], L)
    assert jnp.allclose(out, ref, atol=1e-4, rtol=1e-4), float(jnp.max(jnp.abs(out - ref)))

    # bf16 MXU operands with f32 accumulation — high-throughput path for v6e/v7x.
    out_bf16 = jax.block_until_ready(tcn_forward_pallas(x, params, kernel_size,
                                                        mxu_dtype=jnp.bfloat16))
    assert out_bf16.shape == (B, num_channels[-1], L)
    assert jnp.allclose(out_bf16, ref, atol=2e-1, rtol=1e-1), \
        float(jnp.max(jnp.abs(out_bf16 - ref)))

    print("KERNEL_OK")
</pallas_src>

<mosaic_0001>
module attributes {stable_mosaic.version = 11 : i64} {
  func.func @kernel(%arg0: i32, %arg1: memref<8x32xf32, #tpu.memory_space<vmem>>, %arg2: memref<8x16xf32, #tpu.memory_space<vmem>>, %arg3: memref<8x1xf32, #tpu.memory_space<vmem>>, %arg4: memref<8x16xf32, #tpu.memory_space<vmem>>, %arg5: memref<8x1xf32, #tpu.memory_space<vmem>>, %arg6: memref<8x8xf32, #tpu.memory_space<vmem>>, %arg7: memref<8x1xf32, #tpu.memory_space<vmem>>, %arg8: memref<8x16xf32, #tpu.memory_space<vmem>>, %arg9: memref<8x1xf32, #tpu.memory_space<vmem>>, %arg10: memref<8x16xf32, #tpu.memory_space<vmem>>, %arg11: memref<8x1xf32, #tpu.memory_space<vmem>>, %arg12: memref<16x16xf32, #tpu.memory_space<vmem>>, %arg13: memref<16x1xf32, #tpu.memory_space<vmem>>, %arg14: memref<16x32xf32, #tpu.memory_space<vmem>>, %arg15: memref<16x1xf32, #tpu.memory_space<vmem>>, %arg16: memref<16x8xf32, #tpu.memory_space<vmem>>, %arg17: memref<16x1xf32, #tpu.memory_space<vmem>>, %arg18: memref<16x32xf32, #tpu.memory_space<vmem>>) attributes {dimension_semantics = [#tpu.dimension_semantics<parallel>], iteration_bounds = array<i64: 1>, scalar_prefetch = 0 : i64, scratch_operands = 0 : i64, tpu.core_type = #tpu.core_type<tc>, window_params = [{transform_indices = @transform_0, window_bounds = array<i64: 8, 32>}, {pipeline_mode = #tpu.pipeline_mode<synchronous>, transform_indices = @transform_1, window_bounds = array<i64: 8, 16>}, {pipeline_mode = #tpu.pipeline_mode<synchronous>, transform_indices = @transform_2, window_bounds = array<i64: 8, 1>}, {pipeline_mode = #tpu.pipeline_mode<synchronous>, transform_indices = @transform_3, window_bounds = array<i64: 8, 16>}, {pipeline_mode = #tpu.pipeline_mode<synchronous>, transform_indices = @transform_4, window_bounds = array<i64: 8, 1>}, {pipeline_mode = #tpu.pipeline_mode<synchronous>, transform_indices = @transform_5, window_bounds = array<i64: 8, 8>}, {pipeline_mode = #tpu.pipeline_mode<synchronous>, transform_indices = @transform_6, window_bounds = array<i64: 8, 1>}, {pipeline_mode = #tpu.pipeline_mode<synchronous>, transform_indices = @transform_7, window_bounds = array<i64: 8, 16>}, {pipeline_mode = #tpu.pipeline_mode<synchronous>, transform_indices = @transform_8, window_bounds = array<i64: 8, 1>}, {pipeline_mode = #tpu.pipeline_mode<synchronous>, transform_indices = @transform_9, window_bounds = array<i64: 8, 16>}, {pipeline_mode = #tpu.pipeline_mode<synchronous>, transform_indices = @transform_10, window_bounds = array<i64: 8, 1>}, {pipeline_mode = #tpu.pipeline_mode<synchronous>, transform_indices = @transform_11, window_bounds = array<i64: 16, 16>}, {pipeline_mode = #tpu.pipeline_mode<synchronous>, transform_indices = @transform_12, window_bounds = array<i64: 16, 1>}, {pipeline_mode = #tpu.pipeline_mode<synchronous>, transform_indices = @transform_13, window_bounds = array<i64: 16, 32>}, {pipeline_mode = #tpu.pipeline_mode<synchronous>, transform_indices = @transform_14, window_bounds = array<i64: 16, 1>}, {pipeline_mode = #tpu.pipeline_mode<synchronous>, transform_indices = @transform_15, window_bounds = array<i64: 16, 8>}, {pipeline_mode = #tpu.pipeline_mode<synchronous>, transform_indices = @transform_16, window_bounds = array<i64: 16, 1>}, {transform_indices = @transform_17, window_bounds = array<i64: 16, 32>}]} {
    %0 = tpu.iota {dimensions = array<i32: 1>} : vector<1x32xi32>
    %c16_i32 = arith.constant 16 : i32
    %c0_i32 = arith.constant 0 : i32
    %1 = arith.cmpi eq, %c16_i32, %c0_i32 : i32
    %c1_i32 = arith.constant 1 : i32
    %2 = arith.select %1, %c1_i32, %c16_i32 : i32
    %3 = vector.broadcast %2 : i32 to vector<1x32xi32>
    %4 = arith.remsi %0, %3 : vector<1x32xi32>
    %c0_i32_0 = arith.constant 0 : i32
    %5 = vector.broadcast %c0_i32_0 : i32 to vector<1x32xi32>
    %6 = arith.cmpi ne, %4, %5 : vector<1x32xi32>
    %c0_i32_1 = arith.constant 0 : i32
    %7 = vector.broadcast %c0_i32_1 : i32 to vector<1x32xi32>
    %8 = arith.cmpi slt, %4, %7 : vector<1x32xi32>
    %c0_i32_2 = arith.constant 0 : i32
    %9 = arith.cmpi slt, %2, %c0_i32_2 : i32
    %10 = vector.broadcast %9 : i1 to vector<1x32xi1>
    %11 = vector.broadcast %10 : vector<1x32xi1> to vector<1x32xi1>
    %12 = arith.xori %8, %11 : vector<1x32xi1>
    %13 = arith.andi %12, %6 : vector<1x32xi1>
    %14 = vector.broadcast %2 : i32 to vector<1x32xi32>
    %15 = arith.addi %4, %14 : vector<1x32xi32>
    %16 = arith.select %13, %15, %4 : vector<1x32xi1>, vector<1x32xi32>
    %c1_i32_3 = arith.constant 1 : i32
    %17 = vector.broadcast %c1_i32_3 : i32 to vector<1x32xi32>
    %18 = arith.cmpi sge, %16, %17 : vector<1x32xi32>
    %c2_i32 = arith.constant 2 : i32
    %19 = vector.broadcast %c2_i32 : i32 to vector<1x32xi32>
    %20 = arith.cmpi sge, %16, %19 : vector<1x32xi32>
    %c4_i32 = arith.constant 4 : i32
    %21 = vector.broadcast %c4_i32 : i32 to vector<1x32xi32>
    %22 = arith.cmpi sge, %16, %21 : vector<1x32xi32>
    %c0 = arith.constant 0 : index
    %c0_4 = arith.constant 0 : index
    %23 = vector.load %arg1[%c0, %c0_4] : memref<8x32xf32, #tpu.memory_space<vmem>>, vector<8x32xf32>
    %c0_5 = arith.constant 0 : index
    %c0_6 = arith.constant 0 : index
    %24 = vector.load %arg2[%c0_5, %c0_6] : memref<8x16xf32, #tpu.memory_space<vmem>>, vector<8x16xf32>
    %c0_7 = arith.constant 0 : index
    %c0_8 = arith.constant 0 : index
    %25 = vector.load %arg3[%c0_7, %c0_8] : memref<8x1xf32, #tpu.memory_space<vmem>>, vector<8x1xf32>
    %c0_9 = arith.constant 0 : index
    %c0_10 = arith.constant 0 : index
    %26 = vector.load %arg4[%c0_9, %c0_10] : memref<8x16xf32, #tpu.memory_space<vmem>>, vector<8x16xf32>
    %c0_11 = arith.constant 0 : index
    %c0_12 = arith.constant 0 : index
    %27 = vector.load %arg5[%c0_11, %c0_12] : memref<8x1xf32, #tpu.memory_space<vmem>>, vector<8x1xf32>
    %c1_i32_13 = arith.constant 1 : i32
    %28 = tpu.dynamic_rotate %23 by %c1_i32_13 dim 1 : vector<8x32xf32>, i32 -> vector<8x32xf32>
    %cst = arith.constant 0.000000e+00 : f32
    %29 = vector.broadcast %cst : f32 to vector<8x32xf32>
    %30 = vector.shape_cast %18 : vector<1x32xi1> to vector<1x32xi1>
    %31 = vector.broadcast %30 : vector<1x32xi1> to vector<8x32xi1>
    %32 = arith.select %31, %28, %29 : vector<8x32xi1>, vector<8x32xf32>
    %33 = tpu.concatenate %32, %23 in 0 : vector<8x32xf32>, vector<8x32xf32> -> vector<16x32xf32>
    %cst_14 = arith.constant dense<0.000000e+00> : vector<8x32xf32>
    %34 = tpu.matmul %24, %33, %cst_14 {dimension_numbers = #tpu.dot_dimension_numbers<[1], [0], [0], [1], [0, 0, 1, 1], [], []>, precision = #tpu.contract_precision<fp32>} : vector<8x16xf32>, vector<16x32xf32>, vector<8x32xf32> -> vector<8x32xf32>
    %35 = vector.broadcast %25 : vector<8x1xf32> to vector<8x32xf32>
    %36 = arith.addf %34, %35 : vector<8x32xf32>
    %cst_15 = arith.constant 0.000000e+00 : f32
    %37 = vector.broadcast %cst_15 : f32 to vector<8x32xf32>
    %38 = arith.maximumf %36, %37 : vector<8x32xf32>
    %c1_i32_16 = arith.constant 1 : i32
    %39 = tpu.dynamic_rotate %38 by %c1_i32_16 dim 1 : vector<8x32xf32>, i32 -> vector<8x32xf32>
    %cst_17 = arith.constant 0.000000e+00 : f32
    %40 = vector.broadcast %cst_17 : f32 to vector<8x32xf32>
    %41 = vector.shape_cast %18 : vector<1x32xi1> to vector<1x32xi1>
    %42 = vector.broadcast %41 : vector<1x32xi1> to vector<8x32xi1>
    %43 = arith.select %42, %39, %40 : vector<8x32xi1>, vector<8x32xf32>
    %44 = tpu.concatenate %43, %38 in 0 : vector<8x32xf32>, vector<8x32xf32> -> vector<16x32xf32>
    %cst_18 = arith.constant dense<0.000000e+00> : vector<8x32xf32>
    %45 = tpu.matmul %26, %44, %cst_18 {dimension_numbers = #tpu.dot_dimension_numbers<[1], [0], [0], [1], [0, 0, 1, 1], [], []>, precision = #tpu.contract_precision<fp32>} : vector<8x16xf32>, vector<16x32xf32>, vector<8x32xf32> -> vector<8x32xf32>
    %46 = vector.broadcast %27 : vector<8x1xf32> to vector<8x32xf32>
    %47 = arith.addf %45, %46 : vector<8x32xf32>
    %cst_19 = arith.constant 0.000000e+00 : f32
    %48 = vector.broadcast %cst_19 : f32 to vector<8x32xf32>
    %49 = arith.maximumf %47, %48 : vector<8x32xf32>
    %c0_20 = arith.constant 0 : index
    %c0_21 = arith.constant 0 : index
    %50 = vector.load %arg6[%c0_20, %c0_21] : memref<8x8xf32, #tpu.memory_space<vmem>>, vector<8x8xf32>
    %c0_22 = arith.constant 0 : index
    %c0_23 = arith.constant 0 : index
    %51 = vector.load %arg7[%c0_22, %c0_23] : memref<8x1xf32, #tpu.memory_space<vmem>>, vector<8x1xf32>
    %cst_24 = arith.constant dense<0.000000e+00> : vector<8x32xf32>
    %52 = tpu.matmul %50, %23, %cst_24 {dimension_numbers = #tpu.dot_dimension_numbers<[1], [0], [0], [1], [0, 0, 1, 1], [], []>, precision = #tpu.contract_precision<fp32>} : vector<8x8xf32>, vector<8x32xf32>, vector<8x32xf32> -> vector<8x32xf32>
    %53 = vector.broadcast %51 : vector<8x1xf32> to vector<8x32xf32>
    %54 = arith.addf %52, %53 : vector<8x32xf32>
    %55 = arith.addf %49, %54 : vector<8x32xf32>
    %cst_25 = arith.constant 0.000000e+00 : f32
    %56 = vector.broadcast %cst_25 : f32 to vector<8x32xf32>
    %57 = arith.maximumf %55, %56 : vector<8x32xf32>
    %c0_26 = arith.constant 0 : index
    %c0_27 = arith.constant 0 : index
    %58 = vector.load %arg8[%c0_26, %c0_27] : memref<8x16xf32, #tpu.memory_space<vmem>>, vector<8x16xf32>
    %c0_28 = arith.constant 0 : index
    %c0_29 = arith.constant 0 : index
    %59 = vector.load %arg9[%c0_28, %c0_29] : memref<8x1xf32, #tpu.memory_space<vmem>>, vector<8x1xf32>
    %c0_30 = arith.constant 0 : index
    %c0_31 = arith.constant 0 : index
    %60 = vector.load %arg10[%c0_30, %c0_31] : memref<8x16xf32, #tpu.memory_space<vmem>>, vector<8x16xf32>
    %c0_32 = arith.constant 0 : index
    %c0_33 = arith.constant 0 : index
    %61 = vector.load %arg11[%c0_32, %c0_33] : memref<8x1xf32, #tpu.memory_space<vmem>>, vector<8x1xf32>
    %c2_i32_34 = arith.constant 2 : i32
    %62 = tpu.dynamic_rotate %57 by %c2_i32_34 dim 1 : vector<8x32xf32>, i32 -> vector<8x32xf32>
    %cst_35 = arith.constant 0.000000e+00 : f32
    %63 = vector.broadcast %cst_35 : f32 to vector<8x32xf32>
    %64 = vector.shape_cast %20 : vector<1x32xi1> to vector<1x32xi1>
    %65 = vector.broadcast %64 : vector<1x32xi1> to vector<8x32xi1>
    %66 = arith.select %65, %62, %63 : vector<8x32xi1>, vector<8x32xf32>
    %67 = tpu.concatenate %66, %57 in 0 : vector<8x32xf32>, vector<8x32xf32> -> vector<16x32xf32>
    %cst_36 = arith.constant dense<0.000000e+00> : vector<8x32xf32>
    %68 = tpu.matmul %58, %67, %cst_36 {dimension_numbers = #tpu.dot_dimension_numbers<[1], [0], [0], [1], [0, 0, 1, 1], [], []>, precision = #tpu.contract_precision<fp32>} : vector<8x16xf32>, vector<16x32xf32>, vector<8x32xf32> -> vector<8x32xf32>
    %69 = vector.broadcast %59 : vector<8x1xf32> to vector<8x32xf32>
    %70 = arith.addf %68, %69 : vector<8x32xf32>
    %cst_37 = arith.constant 0.000000e+00 : f32
    %71 = vector.broadcast %cst_37 : f32 to vector<8x32xf32>
    %72 = arith.maximumf %70, %71 : vector<8x32xf32>
    %c2_i32_38 = arith.constant 2 : i32
    %73 = tpu.dynamic_rotate %72 by %c2_i32_38 dim 1 : vector<8x32xf32>, i32 -> vector<8x32xf32>
    %cst_39 = arith.constant 0.000000e+00 : f32
    %74 = vector.broadcast %cst_39 : f32 to vector<8x32xf32>
    %75 = vector.shape_cast %20 : vector<1x32xi1> to vector<1x32xi1>
    %76 = vector.broadcast %75 : vector<1x32xi1> to vector<8x32xi1>
    %77 = arith.select %76, %73, %74 : vector<8x32xi1>, vector<8x32xf32>
    %78 = tpu.concatenate %77, %72 in 0 : vector<8x32xf32>, vector<8x32xf32> -> vector<16x32xf32>
    %cst_40 = arith.constant dense<0.000000e+00> : vector<8x32xf32>
    %79 = tpu.matmul %60, %78, %cst_40 {dimension_numbers = #tpu.dot_dimension_numbers<[1], [0], [0], [1], [0, 0, 1, 1], [], []>, precision = #tpu.contract_precision<fp32>} : vector<8x16xf32>, vector<16x32xf32>, vector<8x32xf32> -> vector<8x32xf32>
    %80 = vector.broadcast %61 : vector<8x1xf32> to vector<8x32xf32>
    %81 = arith.addf %79, %80 : vector<8x32xf32>
    %cst_41 = arith.constant 0.000000e+00 : f32
    %82 = vector.broadcast %cst_41 : f32 to vector<8x32xf32>
    %83 = arith.maximumf %81, %82 : vector<8x32xf32>
    %84 = arith.addf %83, %57 : vector<8x32xf32>
    %cst_42 = arith.constant 0.000000e+00 : f32
    %85 = vector.broadcast %cst_42 : f32 to vector<8x32xf32>
    %86 = arith.maximumf %84, %85 : vector<8x32xf32>
    %c0_43 = arith.constant 0 : index
    %c0_44 = arith.constant 0 : index
    %87 = vector.load %arg12[%c0_43, %c0_44] : memref<16x16xf32, #tpu.memory_space<vmem>>, vector<16x16xf32>
    %c0_45 = arith.constant 0 : index
    %c0_46 = arith.constant 0 : index
    %88 = vector.load %arg13[%c0_45, %c0_46] : memref<16x1xf32, #tpu.memory_space<vmem>>, vector<16x1xf32>
    %c0_47 = arith.constant 0 : index
    %c0_48 = arith.constant 0 : index
    %89 = vector.load %arg14[%c0_47, %c0_48] : memref<16x32xf32, #tpu.memory_space<vmem>>, vector<16x32xf32>
    %c0_49 = arith.constant 0 : index
    %c0_50 = arith.constant 0 : index
    %90 = vector.load %arg15[%c0_49, %c0_50] : memref<16x1xf32, #tpu.memory_space<vmem>>, vector<16x1xf32>
    %c4_i32_51 = arith.constant 4 : i32
    %91 = tpu.dynamic_rotate %86 by %c4_i32_51 dim 1 : vector<8x32xf32>, i32 -> vector<8x32xf32>
    %cst_52 = arith.constant 0.000000e+00 : f32
    %92 = vector.broadcast %cst_52 : f32 to vector<8x32xf32>
    %93 = vector.shape_cast %22 : vector<1x32xi1> to vector<1x32xi1>
    %94 = vector.broadcast %93 : vector<1x32xi1> to vector<8x32xi1>
    %95 = arith.select %94, %91, %92 : vector<8x32xi1>, vector<8x32xf32>
    %96 = tpu.concatenate %95, %86 in 0 : vector<8x32xf32>, vector<8x32xf32> -> vector<16x32xf32>
    %cst_53 = arith.constant dense<0.000000e+00> : vector<16x32xf32>
    %97 = tpu.matmul %87, %96, %cst_53 {dimension_numbers = #tpu.dot_dimension_numbers<[1], [0], [0], [1], [0, 0, 1, 1], [], []>, precision = #tpu.contract_precision<fp32>} : vector<16x16xf32>, vector<16x32xf32>, vector<16x32xf32> -> vector<16x32xf32>
    %98 = vector.broadcast %88 : vector<16x1xf32> to vector<16x32xf32>
    %99 = arith.addf %97, %98 : vector<16x32xf32>
    %cst_54 = arith.constant 0.000000e+00 : f32
    %100 = vector.broadcast %cst_54 : f32 to vector<16x32xf32>
    %101 = arith.maximumf %99, %100 : vector<16x32xf32>
    %c4_i32_55 = arith.constant 4 : i32
    %102 = tpu.dynamic_rotate %101 by %c4_i32_55 dim 1 : vector<16x32xf32>, i32 -> vector<16x32xf32>
    %cst_56 = arith.constant 0.000000e+00 : f32
    %103 = vector.broadcast %cst_56 : f32 to vector<16x32xf32>
    %104 = vector.shape_cast %22 : vector<1x32xi1> to vector<1x32xi1>
    %105 = vector.broadcast %104 : vector<1x32xi1> to vector<16x32xi1>
    %106 = arith.select %105, %102, %103 : vector<16x32xi1>, vector<16x32xf32>
    %107 = tpu.concatenate %106, %101 in 0 : vector<16x32xf32>, vector<16x32xf32> -> vector<32x32xf32>
    %cst_57 = arith.constant dense<0.000000e+00> : vector<16x32xf32>
    %108 = tpu.matmul %89, %107, %cst_57 {dimension_numbers = #tpu.dot_dimension_numbers<[1], [0], [0], [1], [0, 0, 1, 1], [], []>, precision = #tpu.contract_precision<fp32>} : vector<16x32xf32>, vector<32x32xf32>, vector<16x32xf32> -> vector<16x32xf32>
    %109 = vector.broadcast %90 : vector<16x1xf32> to vector<16x32xf32>
    %110 = arith.addf %108, %109 : vector<16x32xf32>
    %cst_58 = arith.constant 0.000000e+00 : f32
    %111 = vector.broadcast %cst_58 : f32 to vector<16x32xf32>
    %112 = arith.maximumf %110, %111 : vector<16x32xf32>
    %c0_59 = arith.constant 0 : index
    %c0_60 = arith.constant 0 : index
    %113 = vector.load %arg16[%c0_59, %c0_60] : memref<16x8xf32, #tpu.memory_space<vmem>>, vector<16x8xf32>
    %c0_61 = arith.constant 0 : index
    %c0_62 = arith.constant 0 : index
    %114 = vector.load %arg17[%c0_61, %c0_62] : memref<16x1xf32, #tpu.memory_space<vmem>>, vector<16x1xf32>
    %cst_63 = arith.constant dense<0.000000e+00> : vector<16x32xf32>
    %115 = tpu.matmul %113, %86, %cst_63 {dimension_numbers = #tpu.dot_dimension_numbers<[1], [0], [0], [1], [0, 0, 1, 1], [], []>, precision = #tpu.contract_precision<fp32>} : vector<16x8xf32>, vector<8x32xf32>, vector<16x32xf32> -> vector<16x32xf32>
    %116 = vector.broadcast %114 : vector<16x1xf32> to vector<16x32xf32>
    %117 = arith.addf %115, %116 : vector<16x32xf32>
    %118 = arith.addf %112, %117 : vector<16x32xf32>
    %cst_64 = arith.constant 0.000000e+00 : f32
    %119 = vector.broadcast %cst_64 : f32 to vector<16x32xf32>
    %120 = arith.maximumf %118, %119 : vector<16x32xf32>
    %c0_65 = arith.constant 0 : index
    %c0_66 = arith.constant 0 : index
    %121 = vector.load %arg18[%c0_65, %c0_66] : memref<16x32xf32, #tpu.memory_space<vmem>>, vector<16x32xf32>
    tpu.vector_store %arg18[%c0_65, %c0_66], %120 {strides = array<i32>} : memref<16x32xf32, #tpu.memory_space<vmem>>, vector<16x32xf32>,
    return
  }
  func.func @transform_0(%arg0: i32) -> (i32, i32) {
    %c0_i32 = arith.constant 0 : i32
    %c0_i32_0 = arith.constant 0 : i32
    return %c0_i32, %arg0 : i32, i32
  }
  func.func @transform_1(%arg0: i32) -> (i32, i32) {
    %c0_i32 = arith.constant 0 : i32
    %c0_i32_0 = arith.constant 0 : i32
    %c0_i32_1 = arith.constant 0 : i32
    return %c0_i32, %c0_i32_0 : i32, i32
  }
  func.func @transform_2(%arg0: i32) -> (i32, i32) {
    %c0_i32 = arith.constant 0 : i32
    %c0_i32_0 = arith.constant 0 : i32
    %c0_i32_1 = arith.constant 0 : i32
    return %c0_i32, %c0_i32_0 : i32, i32
  }
  func.func @transform_3(%arg0: i32) -> (i32, i32) {
    %c0_i32 = arith.constant 0 : i32
    %c0_i32_0 = arith.constant 0 : i32
    %c0_i32_1 = arith.constant 0 : i32
    return %c0_i32, %c0_i32_0 : i32, i32
  }
  func.func @transform_4(%arg0: i32) -> (i32, i32) {
    %c0_i32 = arith.constant 0 : i32
    %c0_i32_0 = arith.constant 0 : i32
    %c0_i32_1 = arith.constant 0 : i32
    return %c0_i32, %c0_i32_0 : i32, i32
  }
  func.func @transform_5(%arg0: i32) -> (i32, i32) {
    %c0_i32 = arith.constant 0 : i32
    %c0_i32_0 = arith.constant 0 : i32
    %c0_i32_1 = arith.constant 0 : i32
    return %c0_i32, %c0_i32_0 : i32, i32
  }
  func.func @transform_6(%arg0: i32) -> (i32, i32) {
    %c0_i32 = arith.constant 0 : i32
    %c0_i32_0 = arith.constant 0 : i32
    %c0_i32_1 = arith.constant 0 : i32
    return %c0_i32, %c0_i32_0 : i32, i32
  }
  func.func @transform_7(%arg0: i32) -> (i32, i32) {
    %c0_i32 = arith.constant 0 : i32
    %c0_i32_0 = arith.constant 0 : i32
    %c0_i32_1 = arith.constant 0 : i32
    return %c0_i32, %c0_i32_0 : i32, i32
  }
  func.func @transform_8(%arg0: i32) -> (i32, i32) {
    %c0_i32 = arith.constant 0 : i32
    %c0_i32_0 = arith.constant 0 : i32
    %c0_i32_1 = arith.constant 0 : i32
    return %c0_i32, %c0_i32_0 : i32, i32
  }
  func.func @transform_9(%arg0: i32) -> (i32, i32) {
    %c0_i32 = arith.constant 0 : i32
    %c0_i32_0 = arith.constant 0 : i32
    %c0_i32_1 = arith.constant 0 : i32
    return %c0_i32, %c0_i32_0 : i32, i32
  }
  func.func @transform_10(%arg0: i32) -> (i32, i32) {
    %c0_i32 = arith.constant 0 : i32
    %c0_i32_0 = arith.constant 0 : i32
    %c0_i32_1 = arith.constant 0 : i32
    return %c0_i32, %c0_i32_0 : i32, i32
  }
  func.func @transform_11(%arg0: i32) -> (i32, i32) {
    %c0_i32 = arith.constant 0 : i32
    %c0_i32_0 = arith.constant 0 : i32
    %c0_i32_1 = arith.constant 0 : i32
    return %c0_i32, %c0_i32_0 : i32, i32
  }
  func.func @transform_12(%arg0: i32) -> (i32, i32) {
    %c0_i32 = arith.constant 0 : i32
    %c0_i32_0 = arith.constant 0 : i32
    %c0_i32_1 = arith.constant 0 : i32
    return %c0_i32, %c0_i32_0 : i32, i32
  }
  func.func @transform_13(%arg0: i32) -> (i32, i32) {
    %c0_i32 = arith.constant 0 : i32
    %c0_i32_0 = arith.constant 0 : i32
    %c0_i32_1 = arith.constant 0 : i32
    return %c0_i32, %c0_i32_0 : i32, i32
  }
  func.func @transform_14(%arg0: i32) -> (i32, i32) {
    %c0_i32 = arith.constant 0 : i32
    %c0_i32_0 = arith.constant 0 : i32
    %c0_i32_1 = arith.constant 0 : i32
    return %c0_i32, %c0_i32_0 : i32, i32
  }
  func.func @transform_15(%arg0: i32) -> (i32, i32) {
    %c0_i32 = arith.constant 0 : i32
    %c0_i32_0 = arith.constant 0 : i32
    %c0_i32_1 = arith.constant 0 : i32
    return %c0_i32, %c0_i32_0 : i32, i32
  }
  func.func @transform_16(%arg0: i32) -> (i32, i32) {
    %c0_i32 = arith.constant 0 : i32
    %c0_i32_0 = arith.constant 0 : i32
    %c0_i32_1 = arith.constant 0 : i32
    return %c0_i32, %c0_i32_0 : i32, i32
  }
  func.func @transform_17(%arg0: i32) -> (i32, i32) {
    %c0_i32 = arith.constant 0 : i32
    %c0_i32_0 = arith.constant 0 : i32
    return %c0_i32, %arg0 : i32, i32
  }
}

</mosaic_0001>

<llo_original>
// kernel: tpu_custom_call.1
$region0: #{tpu_custom_call.1}
  #allocation0 [shape = 'u32[]', space=smem, size = 0x4, offset = 0x4, fixed_abs, tag = 'smem constant byte address 0x4 - core index']
  #allocation1 [shape = 'u32[144,128]{1,0:T(1,128)}', space=vmem, size = 0x12000, scoped, tag = 'internal scratch']
  %s0 = inlined_call_operand.vmem [shape: f32[8,32], index: 0, kind: input, shape index: {}]
  %s1 = inlined_call_operand.vmem [shape: f32[8,16], index: 1, kind: input, shape index: {}]
  %s2 = inlined_call_operand.vmem [shape: f32[8,1], index: 2, kind: input, shape index: {}]
  %s3 = inlined_call_operand.vmem [shape: f32[8,16], index: 3, kind: input, shape index: {}]
  %s4 = inlined_call_operand.vmem [shape: f32[8,1], index: 4, kind: input, shape index: {}]
  %s5 = inlined_call_operand.vmem [shape: f32[8,8], index: 5, kind: input, shape index: {}]
  %s6 = inlined_call_operand.vmem [shape: f32[8,1], index: 6, kind: input, shape index: {}]
  %s7 = inlined_call_operand.vmem [shape: f32[8,16], index: 7, kind: input, shape index: {}]
  %s8 = inlined_call_operand.vmem [shape: f32[8,1], index: 8, kind: input, shape index: {}]
  %s9 = inlined_call_operand.vmem [shape: f32[8,16], index: 9, kind: input, shape index: {}]
  %s10 = inlined_call_operand.vmem [shape: f32[8,1], index: 10, kind: input, shape index: {}]
  %s11 = inlined_call_operand.vmem [shape: f32[16,16], index: 11, kind: input, shape index: {}]
  %s12 = inlined_call_operand.vmem [shape: f32[16,1], index: 12, kind: input, shape index: {}]
  %s13 = inlined_call_operand.vmem [shape: f32[16,32], index: 13, kind: input, shape index: {}]
  %s14 = inlined_call_operand.vmem [shape: f32[16,1], index: 14, kind: input, shape index: {}]
  %s15 = inlined_call_operand.vmem [shape: f32[16,8], index: 15, kind: input, shape index: {}]
  %s16 = inlined_call_operand.vmem [shape: f32[16,1], index: 16, kind: input, shape index: {}]
  %s17 = inlined_call_operand.hbm [shape: f32[16,32], index: 17, kind: output, shape index: {}]
  %s18 = sld [smem:[#allocation0]]
  $region78: #{tpu_custom_call.1} parent=0
    _
  %s20 = ssub.s32 1, %s18
  %s21 = scalar_select 0, %s20, %s18
  $region1: #{tpu_custom_call.1} parent=0
    #allocation2 [shape = 'u8[8192]{0}', space=vmem, size = 0x2000, scoped, tag = 'output window, operand 0, single buffered']
    #allocation3 [shape = 's32[1]{0}', space=sflag, size = 0x4, scoped, tag = 'scoped memory for tpu_custom_call.1']
    %22 = vsyncpa [#allocation3], 0
    // Predicated region
    $region2: #{tpu_custom_call.1} parent=1 // pred_check
      _
    $region3: #{tpu_custom_call.1} parent=1 // pred_check_branch
      %24 = sbr.rel (0) target = $region5
    $region4: #{tpu_custom_call.1} parent=1 // pred_region
      _
    $region5: #{tpu_custom_call.1} parent=1 // pred_fallthru
      _
    // Predicated region
    $region6: #{tpu_custom_call.1} parent=1 // pred_check
      _
    $region7: #{tpu_custom_call.1} parent=1 // pred_check_branch
      %26 = sbr.rel (0) target = $region9
    $region8: #{tpu_custom_call.1} parent=1 // pred_region
      _
    $region9: #{tpu_custom_call.1} parent=1 // pred_fallthru
      _
    // Predicated region
    $region10: #{tpu_custom_call.1} parent=1 // pred_check
      _
    $region11: #{tpu_custom_call.1} parent=1 // pred_check_branch
      %28 = sbr.rel (0) target = $region13
    $region12: #{tpu_custom_call.1} parent=1 // pred_region
      _
    $region13: #{tpu_custom_call.1} parent=1 // pred_fallthru
      _
    // Predicated region
    $region14: #{tpu_custom_call.1} parent=1 // pred_check
      _
    $region15: #{tpu_custom_call.1} parent=1 // pred_check_branch
      %30 = sbr.rel (0) target = $region17
    $region16: #{tpu_custom_call.1} parent=1 // pred_region
      _
    $region17: #{tpu_custom_call.1} parent=1 // pred_fallthru
      _
    // Predicated region
    $region18: #{tpu_custom_call.1} parent=1 // pred_check
      _
    $region19: #{tpu_custom_call.1} parent=1 // pred_check_branch
      %32 = sbr.rel (0) target = $region21
    $region20: #{tpu_custom_call.1} parent=1 // pred_region
      _
    $region21: #{tpu_custom_call.1} parent=1 // pred_fallthru
      _
    // Predicated region
    $region22: #{tpu_custom_call.1} parent=1 // pred_check
      _
    $region23: #{tpu_custom_call.1} parent=1 // pred_check_branch
      %34 = sbr.rel (0) target = $region25
    $region24: #{tpu_custom_call.1} parent=1 // pred_region
      _
    $region25: #{tpu_custom_call.1} parent=1 // pred_fallthru
      _
    // Predicated region
    $region26: #{tpu_custom_call.1} parent=1 // pred_check
      _
    $region27: #{tpu_custom_call.1} parent=1 // pred_check_branch
      %36 = sbr.rel (0) target = $region29
    $region28: #{tpu_custom_call.1} parent=1 // pred_region
      _
    $region29: #{tpu_custom_call.1} parent=1 // pred_fallthru
      _
    // Predicated region
    $region30: #{tpu_custom_call.1} parent=1 // pred_check
      _
    $region31: #{tpu_custom_call.1} parent=1 // pred_check_branch
      %38 = sbr.rel (0) target = $region33
    $region32: #{tpu_custom_call.1} parent=1 // pred_region
      _
    $region33: #{tpu_custom_call.1} parent=1 // pred_fallthru
      _
    // Predicated region
    $region34: #{tpu_custom_call.1} parent=1 // pred_check
      _
    $region35: #{tpu_custom_call.1} parent=1 // pred_check_branch
      %40 = sbr.rel (0) target = $region37
    $region36: #{tpu_custom_call.1} parent=1 // pred_region
      _
    $region37: #{tpu_custom_call.1} parent=1 // pred_fallthru
      _
    // Predicated region
    $region38: #{tpu_custom_call.1} parent=1 // pred_check
      _
    $region39: #{tpu_custom_call.1} parent=1 // pred_check_branch
      %42 = sbr.rel (0) target = $region41
    $region40: #{tpu_custom_call.1} parent=1 // pred_region
      _
    $region41: #{tpu_custom_call.1} parent=1 // pred_fallthru
      _
    // Predicated region
    $region42: #{tpu_custom_call.1} parent=1 // pred_check
      _
    $region43: #{tpu_custom_call.1} parent=1 // pred_check_branch
      %44 = sbr.rel (0) target = $region45
    $region44: #{tpu_custom_call.1} parent=1 // pred_region
      _
    $region45: #{tpu_custom_call.1} parent=1 // pred_fallthru
      _
    // Predicated region
    $region46: #{tpu_custom_call.1} parent=1 // pred_check
      _
    $region47: #{tpu_custom_call.1} parent=1 // pred_check_branch
      %46 = sbr.rel (0) target = $region49
    $region48: #{tpu_custom_call.1} parent=1 // pred_region
      _
    $region49: #{tpu_custom_call.1} parent=1 // pred_fallthru
      _
    // Predicated region
    $region50: #{tpu_custom_call.1} parent=1 // pred_check
      _
    $region51: #{tpu_custom_call.1} parent=1 // pred_check_branch
      %48 = sbr.rel (0) target = $region53
    $region52: #{tpu_custom_call.1} parent=1 // pred_region
      _
    $region53: #{tpu_custom_call.1} parent=1 // pred_fallthru
      _
    // Predicated region
    $region54: #{tpu_custom_call.1} parent=1 // pred_check
      _
    $region55: #{tpu_custom_call.1} parent=1 // pred_check_branch
      %50 = sbr.rel (0) target = $region57
    $region56: #{tpu_custom_call.1} parent=1 // pred_region
      _
    $region57: #{tpu_custom_call.1} parent=1 // pred_fallthru
      _
    // Predicated region
    $region58: #{tpu_custom_call.1} parent=1 // pred_check
      _
    $region59: #{tpu_custom_call.1} parent=1 // pred_check_branch
      %52 = sbr.rel (0) target = $region61
    $region60: #{tpu_custom_call.1} parent=1 // pred_region
      _
    $region61: #{tpu_custom_call.1} parent=1 // pred_fallthru
      _
    // Predicated region
    $region62: #{tpu_custom_call.1} parent=1 // pred_check
      _
    $region63: #{tpu_custom_call.1} parent=1 // pred_check_branch
      %54 = sbr.rel (0) target = $region65
    $region64: #{tpu_custom_call.1} parent=1 // pred_region
      _
    $region65: #{tpu_custom_call.1} parent=1 // pred_fallthru
      _
    // Predicated region
    $region66: #{tpu_custom_call.1} parent=1 // pred_check
      _
    $region67: #{tpu_custom_call.1} parent=1 // pred_check_branch
      %56 = sbr.rel (0) target = $region69
    $region68: #{tpu_custom_call.1} parent=1 // pred_region
      _
    $region69: #{tpu_custom_call.1} parent=1 // pred_fallthru
      _
    %v57 = vlaneseq
    %v58 = vand.u32 %v57, 127
    %vm59 = vcmp.lt.s32.totalorder %v58, 0
    %v60 = vsub.s32 0, %v58
    %v61 = vsel %vm59, %v60, %v58
    %v62 = vshrl.u32 %v61, 4
    %v63 = vand.u32 %v61, 15
    %v64 = vsub.s32 0, %v63
    %v65 = vsel %vm59, %v64, %v63
    %vm66 = vcmp.ne.s32.totalorder %v65, 0
    %vm67 = vcmp.lt.s32.totalorder %v65, 0
    %vm68 = vmand %vm67, %vm66
    %v69 = vadd.s32 %v65, 16
    %v70 = vsel %vm68, %v69, %v65
    %vm71 = vcmp.ge.s32.totalorder %v70, 1
    %vm72 = vcmp.ge.s32.totalorder %v70, 2
    %vm73 = vcmp.ge.s32.totalorder %v70, 4
    %v74 = vld [vmem:[%s0] sm:$0xff]
    %v75 = vld [vmem:[%s1] sm:$0xff]
    %v76 = vld [vmem:[%s2] sm:$0xff]
    %v77 = vld [vmem:[%s3] sm:$0xff]
    %v78 = vld [vmem:[%s4] sm:$0xff]
    %vm79 = vcmask 1047808
    %80 = vrot.lane.b32.xlu0 %v74, 32
    %v81 = vpop.permute.xlu0 %80
    %v82 = vsel %vm79, %v81, %v74
    %83 = vrot.lane.b32.xlu0 %v82, 32
    %v84 = vpop.permute.xlu0 %83
    %v85 = vsel %vm79, %v84, %v74
    %v86 = vsel %vm71, 1, 0
    %vm87 = vcmp.eq.s32.totalorder %v86, 1
    %89 = vrot.lane.b32.xlu0 %v85, 97
    %v90 = vpop.permute.xlu0 %89
    %v92 = vsel %vm87, %v90, 0.0
    %94 = vset.pattern.permute.xlu0 0
    %95 = vperm.xlu0 %94, %v76
    %v96 = vpop.permute.xlu0 %95
    %vm98 = vcmask 130048
    %v100 = vsel %vm98, %v75, 0
    %102 = vmatprep.subr.mxu0 0.0
    %103 = vmatpush1.msra.mxu0 0.0
    %104 = vmatprep.subr.mxu0 0.0
    %105 = vmatpush1.msra.mxu0 0.0
    %106 = vmatprep.subr.mxu0 0.0
    %107 = vmatpush1.msra.mxu0 0.0
    %108 = vmatprep.subr.mxu0 0.0
    %109 = vmatpush1.msra.mxu0 0.0
    %110 = vmatprep.subr.mxu0 0.0
    %111 = vmatpush1.msra.mxu0 0.0
    %112 = vmatprep.subr.mxu0 0.0
    %113 = vmatpush1.msra.mxu0 0.0
    %114 = vmatprep.subr.mxu0 0.0
    %115 = vmatpush1.msra.mxu0 0.0
    %116 = vmatprep.subr.mxu0 0.0
    %117 = vmatpush1.msra.mxu0 0.0
    %118 = vmatprep.subr.mxu0 0.0
    %119 = vmatpush1.msra.mxu0 0.0
    %120 = vmatprep.subr.mxu0 0.0
    %121 = vmatpush1.msra.mxu0 0.0
    %122 = vmatprep.subr.mxu0 0.0
    %123 = vmatpush1.msra.mxu0 0.0
    %124 = vmatprep.subr.mxu0 0.0
    %125 = vmatpush1.msra.mxu0 0.0
    %126 = vmatprep.subr.mxu0 0.0
    %127 = vmatpush1.msra.mxu0 0.0
    %128 = vmatprep.subr.mxu0 0.0
    %129 = vmatpush1.msra.mxu0 0.0
    %130 = vmatprep.subr.mxu0 0.0
    %v131 = vand.u32 %v74, 4294901760
    %132 = vmatpush1.msra.mxu0 %v131
    %133 = vmatprep.subr.mxu0 0.0
    %v134 = vand.u32 %v92, 4294901760
    %135 = vmatpush1.msra.mxu0 %v134
    %136 = vmatprep.subr.mxu0 0.0
    %137 = vmatpush2.msra.mxu0 0.0
    %138 = vmatprep.subr.mxu0 0.0
    %139 = vmatpush2.msra.mxu0 0.0
    %140 = vmatprep.subr.mxu0 0.0
    %141 = vmatpush2.msra.mxu0 0.0
    %142 = vmatprep.subr.mxu0 0.0
    %143 = vmatpush2.msra.mxu0 0.0
    %144 = vmatprep.subr.mxu0 0.0
    %145 = vmatpush2.msra.mxu0 0.0
    %146 = vmatprep.subr.mxu0 0.0
    %147 = vmatpush2.msra.mxu0 0.0
    %148 = vmatprep.subr.mxu0 0.0
    %149 = vmatpush2.msra.mxu0 0.0
    %150 = vmatprep.subr.mxu0 0.0
    %151 = vmatpush2.msra.mxu0 0.0
    %152 = vmatprep.subr.mxu0 0.0
    %153 = vmatpush2.msra.mxu0 0.0
    %154 = vmatprep.subr.mxu0 0.0
    %155 = vmatpush2.msra.mxu0 0.0
    %156 = vmatprep.subr.mxu0 0.0
    %157 = vmatpush2.msra.mxu0 0.0
    %158 = vmatprep.subr.mxu0 0.0
    %159 = vmatpush2.msra.mxu0 0.0
    %160 = vmatprep.subr.mxu0 0.0
    %161 = vmatpush2.msra.mxu0 0.0
    %162 = vmatprep.subr.mxu0 0.0
    %163 = vmatpush2.msra.mxu0 0.0
    %164 = vmatprep.subr.mxu0 0.0
    %165 = vmatpush2.msra.mxu0 0.0
    %166 = vmatprep.subr.mxu0 0.0
    %167 = vmatpush2.msra.mxu0 0.0
    %168 = vmatprep.mubr.f32.mxu0 0.0
    %v169 = vand.u32 %v100, 4294901760
    %v170 = vsub.f32 %v100, %v169
    %v171 = vand.u32 %v170, 4294901760
    %v172 = vsub.f32 %v170, %v171
    %v173 = vand.u32 %v172, 4294901760
    %174 = vmatmul.mubr.f32.gmra.mxu0 %v173
    %v175 = vpop.f32.mrf.mxu0
    %v176 = vadd.f32 %v96, %v175
    %v177 = vpop.f32.mrf.mxu0
    %178 = vdwg.mxu0
    %179 = vmatprep.subr.mxu0 0.0
    %180 = vmatpush1.msra.mxu0 0.0
    %181 = vmatprep.subr.mxu0 0.0
    %182 = vmatpush1.msra.mxu0 0.0
    %183 = vmatprep.subr.mxu0 0.0
    %184 = vmatpush1.msra.mxu0 0.0
    %185 = vmatprep.subr.mxu0 0.0
    %186 = vmatpush1.msra.mxu0 0.0
    %187 = vmatprep.subr.mxu0 0.0
    %188 = vmatpush1.msra.mxu0 0.0
    %189 = vmatprep.subr.mxu0 0.0
    %190 = vmatpush1.msra.mxu0 0.0
    %191 = vmatprep.subr.mxu0 0.0
    %192 = vmatpush1.msra.mxu0 0.0
    %193 = vmatprep.subr.mxu0 0.0
    %194 = vmatpush1.msra.mxu0 0.0
    %195 = vmatprep.subr.mxu0 0.0
    %196 = vmatpush1.msra.mxu0 0.0
    %197 = vmatprep.subr.mxu0 0.0
    %198 = vmatpush1.msra.mxu0 0.0
    %199 = vmatprep.subr.mxu0 0.0
    %200 = vmatpush1.msra.mxu0 0.0
    %201 = vmatprep.subr.mxu0 0.0
    %202 = vmatpush1.msra.mxu0 0.0
    %203 = vmatprep.subr.mxu0 0.0
    %204 = vmatpush1.msra.mxu0 0.0
    %205 = vmatprep.subr.mxu0 0.0
    %206 = vmatpush1.msra.mxu0 0.0
    %207 = vmatprep.subr.mxu0 0.0
    %v208 = vand.u32 %v74, 4294901760
    %v209 = vsub.f32 %v74, %v208
    %v210 = vand.u32 %v209, 4294901760
    %v211 = vsub.f32 %v209, %v210
    %v212 = vand.u32 %v211, 4294901760
    %213 = vmatpush1.msra.mxu0 %v212
    %214 = vmatprep.subr.mxu0 0.0
    %v215 = vand.u32 %v92, 4294901760
    %v216 = vsub.f32 %v92, %v215
    %v217 = vand.u32 %v216, 4294901760
    %v218 = vsub.f32 %v216, %v217
    %v219 = vand.u32 %v218, 4294901760
    %220 = vmatpush1.msra.mxu0 %v219
    %221 = vmatprep.subr.mxu0 0.0
    %222 = vmatpush2.msra.mxu0 0.0
    %223 = vmatprep.subr.mxu0 0.0
    %224 = vmatpush2.msra.mxu0 0.0
    %225 = vmatprep.subr.mxu0 0.0
    %226 = vmatpush2.msra.mxu0 0.0
    %227 = vmatprep.subr.mxu0 0.0
    %228 = vmatpush2.msra.mxu0 0.0
    %229 = vmatprep.subr.mxu0 0.0
    %230 = vmatpush2.msra.mxu0 0.0
    %231 = vmatprep.subr.mxu0 0.0
    %232 = vmatpush2.msra.mxu0 0.0
    %233 = vmatprep.subr.mxu0 0.0
    %234 = vmatpush2.msra.mxu0 0.0
    %235 = vmatprep.subr.mxu0 0.0
    %236 = vmatpush2.msra.mxu0 0.0
    %237 = vmatprep.subr.mxu0 0.0
    %238 = vmatpush2.msra.mxu0 0.0
    %239 = vmatprep.subr.mxu0 0.0
    %240 = vmatpush2.msra.mxu0 0.0
    %241 = vmatprep.subr.mxu0 0.0
    %242 = vmatpush2.msra.mxu0 0.0
    %243 = vmatprep.subr.mxu0 0.0
    %244 = vmatpush2.msra.mxu0 0.0
    %245 = vmatprep.subr.mxu0 0.0
    %246 = vmatpush2.msra.mxu0 0.0
    %247 = vmatprep.subr.mxu0 0.0
    %248 = vmatpush2.msra.mxu0 0.0
    %249 = vmatprep.subr.mxu0 0.0
    %250 = vmatpush2.msra.mxu0 0.0
    %251 = vmatprep.subr.mxu0 0.0
    %252 = vmatpush2.msra.mxu0 0.0
    %253 = vmatprep.mubr.f32.mxu0 0.0
    %v254 = vand.u32 %v100, 4294901760
    %255 = vmatmul.mubr.f32.gmra.mxu0 %v254
    %v256 = vpop.f32.mrf.mxu0
    %v257 = vadd.f32 %v176, %v256
    %v258 = vpop.f32.mrf.mxu0
    %259 = vdwg.mxu0
    %260 = vmatprep.subr.mxu0 0.0
    %261 = vmatpush1.msra.mxu0 0.0
    %262 = vmatprep.subr.mxu0 0.0
    %263 = vmatpush1.msra.mxu0 0.0
    %264 = vmatprep.subr.mxu0 0.0
    %265 = vmatpush1.msra.mxu0 0.0
    %266 = vmatprep.subr.mxu0 0.0
    %267 = vmatpush1.msra.mxu0 0.0
    %268 = vmatprep.subr.mxu0 0.0
    %269 = vmatpush1.msra.mxu0 0.0
    %270 = vmatprep.subr.mxu0 0.0
    %271 = vmatpush1.msra.mxu0 0.0
    %272 = vmatprep.subr.mxu0 0.0
    %273 = vmatpush1.msra.mxu0 0.0
    %274 = vmatprep.subr.mxu0 0.0
    %275 = vmatpush1.msra.mxu0 0.0
    %276 = vmatprep.subr.mxu0 0.0
    %277 = vmatpush1.msra.mxu0 0.0
    %278 = vmatprep.subr.mxu0 0.0
    %279 = vmatpush1.msra.mxu0 0.0
    %280 = vmatprep.subr.mxu0 0.0
    %281 = vmatpush1.msra.mxu0 0.0
    %282 = vmatprep.subr.mxu0 0.0
    %283 = vmatpush1.msra.mxu0 0.0
    %284 = vmatprep.subr.mxu0 0.0
    %285 = vmatpush1.msra.mxu0 0.0
    %286 = vmatprep.subr.mxu0 0.0
    %287 = vmatpush1.msra.mxu0 0.0
    %288 = vmatprep.subr.mxu0 0.0
    %v289 = vand.u32 %v74, 4294901760
    %v290 = vsub.f32 %v74, %v289
    %291 = vmatpush1.msra.mxu0 %v290
    %292 = vmatprep.subr.mxu0 0.0
    %v293 = vand.u32 %v92, 4294901760
    %v294 = vsub.f32 %v92, %v293
    %295 = vmatpush1.msra.mxu0 %v294
    %296 = vmatprep.subr.mxu0 0.0
    %297 = vmatpush2.msra.mxu0 0.0
    %298 = vmatprep.subr.mxu0 0.0
    %299 = vmatpush2.msra.mxu0 0.0
    %300 = vmatprep.subr.mxu0 0.0
    %301 = vmatpush2.msra.mxu0 0.0
    %302 = vmatprep.subr.mxu0 0.0
    %303 = vmatpush2.msra.mxu0 0.0
    %304 = vmatprep.subr.mxu0 0.0
    %305 = vmatpush2.msra.mxu0 0.0
    %306 = vmatprep.subr.mxu0 0.0
    %307 = vmatpush2.msra.mxu0 0.0
    %308 = vmatprep.subr.mxu0 0.0
    %309 = vmatpush2.msra.mxu0 0.0
    %310 = vmatprep.subr.mxu0 0.0
    %311 = vmatpush2.msra.mxu0 0.0
    %312 = vmatprep.subr.mxu0 0.0
    %313 = vmatpush2.msra.mxu0 0.0
    %314 = vmatprep.subr.mxu0 0.0
    %315 = vmatpush2.msra.mxu0 0.0
    %316 = vmatprep.subr.mxu0 0.0
    %317 = vmatpush2.msra.mxu0 0.0
    %318 = vmatprep.subr.mxu0 0.0
    %319 = vmatpush2.msra.mxu0 0.0
    %320 = vmatprep.subr.mxu0 0.0
    %321 = vmatpush2.msra.mxu0 0.0
    %322 = vmatprep.subr.mxu0 0.0
    %323 = vmatpush2.msra.mxu0 0.0
    %324 = vmatprep.subr.mxu0 0.0
    %325 = vmatpush2.msra.mxu0 0.0
    %326 = vmatprep.subr.mxu0 0.0
    %327 = vmatpush2.msra.mxu0 0.0
    %328 = vmatprep.mubr.f32.mxu0 0.0
    %v329 = vand.u32 %v100, 4294901760
    %v330 = vsub.f32 %v100, %v329
    %331 = vmatmul.mubr.f32.gmra.mxu0 %v330
    %v332 = vpop.f32.mrf.mxu0
    %v333 = vadd.f32 %v257, %v332
    %v334 = vpop.f32.mrf.mxu0
    %335 = vdwg.mxu0
    %336 = vmatprep.subr.mxu0 0.0
    %337 = vmatpush1.msra.mxu0 0.0
    %338 = vmatprep.subr.mxu0 0.0
    %339 = vmatpush1.msra.mxu0 0.0
    %340 = vmatprep.subr.mxu0 0.0
    %341 = vmatpush1.msra.mxu0 0.0
    %342 = vmatprep.subr.mxu0 0.0
    %343 = vmatpush1.msra.mxu0 0.0
    %344 = vmatprep.subr.mxu0 0.0
    %345 = vmatpush1.msra.mxu0 0.0
    %346 = vmatprep.subr.mxu0 0.0
    %347 = vmatpush1.msra.mxu0 0.0
    %348 = vmatprep.subr.mxu0 0.0
    %349 = vmatpush1.msra.mxu0 0.0
    %350 = vmatprep.subr.mxu0 0.0
    %351 = vmatpush1.msra.mxu0 0.0
    %352 = vmatprep.subr.mxu0 0.0
    %353 = vmatpush1.msra.mxu0 0.0
    %354 = vmatprep.subr.mxu0 0.0
    %355 = vmatpush1.msra.mxu0 0.0
    %356 = vmatprep.subr.mxu0 0.0
    %357 = vmatpush1.msra.mxu0 0.0
    %358 = vmatprep.subr.mxu0 0.0
    %359 = vmatpush1.msra.mxu0 0.0
    %360 = vmatprep.subr.mxu0 0.0
    %361 = vmatpush1.msra.mxu0 0.0
    %362 = vmatprep.subr.mxu0 0.0
    %363 = vmatpush1.msra.mxu0 0.0
    %364 = vmatprep.subr.mxu0 0.0
    %v365 = vand.u32 %v74, 4294901760
    %366 = vmatpush1.msra.mxu0 %v365
    %367 = vmatprep.subr.mxu0 0.0
    %v368 = vand.u32 %v92, 4294901760
    %369 = vmatpush1.msra.mxu0 %v368
    %370 = vmatprep.subr.mxu0 0.0
    %371 = vmatpush2.msra.mxu0 0.0
    %372 = vmatprep.subr.mxu0 0.0
    %373 = vmatpush2.msra.mxu0 0.0
    %374 = vmatprep.subr.mxu0 0.0
    %375 = vmatpush2.msra.mxu0 0.0
    %376 = vmatprep.subr.mxu0 0.0
    %377 = vmatpush2.msra.mxu0 0.0
    %378 = vmatprep.subr.mxu0 0.0
    %379 = vmatpush2.msra.mxu0 0.0
    %380 = vmatprep.subr.mxu0 0.0
    %381 = vmatpush2.msra.mxu0 0.0
    %382 = vmatprep.subr.mxu0 0.0
    %383 = vmatpush2.msra.mxu0 0.0
    %384 = vmatprep.subr.mxu0 0.0
    %385 = vmatpush2.msra.mxu0 0.0
    %386 = vmatprep.subr.mxu0 0.0
    %387 = vmatpush2.msra.mxu0 0.0
    %388 = vmatprep.subr.mxu0 0.0
    %389 = vmatpush2.msra.mxu0 0.0
    %390 = vmatprep.subr.mxu0 0.0
    %391 = vmatpush2.msra.mxu0 0.0
    %392 = vmatprep.subr.mxu0 0.0
    %393 = vmatpush2.msra.mxu0 0.0
    %394 = vmatprep.subr.mxu0 0.0
    %395 = vmatpush2.msra.mxu0 0.0
    %396 = vmatprep.subr.mxu0 0.0
    %397 = vmatpush2.msra.mxu0 0.0
    %398 = vmatprep.subr.mxu0 0.0
    %399 = vmatpush2.msra.mxu0 0.0
    %400 = vmatprep.subr.mxu0 0.0
    %401 = vmatpush2.msra.mxu0 0.0
    %402 = vmatprep.mubr.f32.mxu0 0.0
    %v403 = vand.u32 %v100, 4294901760
    %v404 = vsub.f32 %v100, %v403
    %v405 = vand.u32 %v404, 4294901760
    %406 = vmatmul.mubr.f32.gmra.mxu0 %v405
    %v407 = vpop.f32.mrf.mxu0
    %v408 = vadd.f32 %v333, %v407
    %v409 = vpop.f32.mrf.mxu0
    %410 = vdwg.mxu0
    %411 = vmatprep.subr.mxu0 0.0
    %412 = vmatpush1.msra.mxu0 0.0
    %413 = vmatprep.subr.mxu0 0.0
    %414 = vmatpush1.msra.mxu0 0.0
    %415 = vmatprep.subr.mxu0 0.0
    %416 = vmatpush1.msra.mxu0 0.0
    %417 = vmatprep.subr.mxu0 0.0
    %418 = vmatpush1.msra.mxu0 0.0
    %419 = vmatprep.subr.mxu0 0.0
    %420 = vmatpush1.msra.mxu0 0.0
    %421 = vmatprep.subr.mxu0 0.0
    %422 = vmatpush1.msra.mxu0 0.0
    %423 = vmatprep.subr.mxu0 0.0
    %424 = vmatpush1.msra.mxu0 0.0
    %425 = vmatprep.subr.mxu0 0.0
    %426 = vmatpush1.msra.mxu0 0.0
    %427 = vmatprep.subr.mxu0 0.0
    %428 = vmatpush1.msra.mxu0 0.0
    %429 = vmatprep.subr.mxu0 0.0
    %430 = vmatpush1.msra.mxu0 0.0
    %431 = vmatprep.subr.mxu0 0.0
    %432 = vmatpush1.msra.mxu0 0.0
    %433 = vmatprep.subr.mxu0 0.0
    %434 = vmatpush1.msra.mxu0 0.0
    %435 = vmatprep.subr.mxu0 0.0
    %436 = vmatpush1.msra.mxu0 0.0
    %437 = vmatprep.subr.mxu0 0.0
    %438 = vmatpush1.msra.mxu0 0.0
    %439 = vmatprep.subr.mxu0 0.0
    %v440 = vand.u32 %v74, 4294901760
    %v441 = vsub.f32 %v74, %v440
    %v442 = vand.u32 %v441, 4294901760
    %443 = vmatpush1.msra.mxu0 %v442
    %444 = vmatprep.subr.mxu0 0.0
    %v445 = vand.u32 %v92, 4294901760
    %v446 = vsub.f32 %v92, %v445
    %v447 = vand.u32 %v446, 4294901760
    %448 = vmatpush1.msra.mxu0 %v447
    %449 = vmatprep.subr.mxu0 0.0
    %450 = vmatpush2.msra.mxu0 0.0
    %451 = vmatprep.subr.mxu0 0.0
    %452 = vmatpush2.msra.mxu0 0.0
    %453 = vmatprep.subr.mxu0 0.0
    %454 = vmatpush2.msra.mxu0 0.0
    %455 = vmatprep.subr.mxu0 0.0
    %456 = vmatpush2.msra.mxu0 0.0
    %457 = vmatprep.subr.mxu0 0.0
    %458 = vmatpush2.msra.mxu0 0.0
    %459 = vmatprep.subr.mxu0 0.0
    %460 = vmatpush2.msra.mxu0 0.0
    %461 = vmatprep.subr.mxu0 0.0
    %462 = vmatpush2.msra.mxu0 0.0
    %463 = vmatprep.subr.mxu0 0.0
    %464 = vmatpush2.msra.mxu0 0.0
    %465 = vmatprep.subr.mxu0 0.0
    %466 = vmatpush2.msra.mxu0 0.0
    %467 = vmatprep.subr.mxu0 0.0
    %468 = vmatpush2.msra.mxu0 0.0
    %469 = vmatprep.subr.mxu0 0.0
    %470 = vmatpush2.msra.mxu0 0.0
    %471 = vmatprep.subr.mxu0 0.0
    %472 = vmatpush2.msra.mxu0 0.0
    %473 = vmatprep.subr.mxu0 0.0
    %474 = vmatpush2.msra.mxu0 0.0
    %475 = vmatprep.subr.mxu0 0.0
    %476 = vmatpush2.msra.mxu0 0.0
    %477 = vmatprep.subr.mxu0 0.0
    %478 = vmatpush2.msra.mxu0 0.0
    %479 = vmatprep.subr.mxu0 0.0
    %480 = vmatpush2.msra.mxu0 0.0
    %481 = vmatprep.mubr.f32.mxu0 0.0
    %v482 = vand.u32 %v100, 4294901760
    %483 = vmatmul.mubr.f32.gmra.mxu0 %v482
    %v484 = vpop.f32.mrf.mxu0
    %v485 = vadd.f32 %v408, %v484
    %v486 = vpop.f32.mrf.mxu0
    %487 = vdwg.mxu0
    %488 = vmatprep.subr.mxu0 0.0
    %489 = vmatpush1.msra.mxu0 0.0
    %490 = vmatprep.subr.mxu0 0.0
    %491 = vmatpush1.msra.mxu0 0.0
    %492 = vmatprep.subr.mxu0 0.0
    %493 = vmatpush1.msra.mxu0 0.0
    %494 = vmatprep.subr.mxu0 0.0
    %495 = vmatpush1.msra.mxu0 0.0
    %496 = vmatprep.subr.mxu0 0.0
    %497 = vmatpush1.msra.mxu0 0.0
    %498 = vmatprep.subr.mxu0 0.0
    %499 = vmatpush1.msra.mxu0 0.0
    %500 = vmatprep.subr.mxu0 0.0
    %501 = vmatpush1.msra.mxu0 0.0
    %502 = vmatprep.subr.mxu0 0.0
    %503 = vmatpush1.msra.mxu0 0.0
    %504 = vmatprep.subr.mxu0 0.0
    %505 = vmatpush1.msra.mxu0 0.0
    %506 = vmatprep.subr.mxu0 0.0
    %507 = vmatpush1.msra.mxu0 0.0
    %508 = vmatprep.subr.mxu0 0.0
    %509 = vmatpush1.msra.mxu0 0.0
    %510 = vmatprep.subr.mxu0 0.0
    %511 = vmatpush1.msra.mxu0 0.0
    %512 = vmatprep.subr.mxu0 0.0
    %513 = vmatpush1.msra.mxu0 0.0
    %514 = vmatprep.subr.mxu0 0.0
    %515 = vmatpush1.msra.mxu0 0.0
    %516 = vmatprep.subr.mxu0 0.0
    %v517 = vand.u32 %v74, 4294901760
    %518 = vmatpush1.msra.mxu0 %v517
    %519 = vmatprep.subr.mxu0 0.0
    %v520 = vand.u32 %v92, 4294901760
    %521 = vmatpush1.msra.mxu0 %v520
    %522 = vmatprep.subr.mxu0 0.0
    %523 = vmatpush2.msra.mxu0 0.0
    %524 = vmatprep.subr.mxu0 0.0
    %525 = vmatpush2.msra.mxu0 0.0
    %526 = vmatprep.subr.mxu0 0.0
    %527 = vmatpush2.msra.mxu0 0.0
    %528 = vmatprep.subr.mxu0 0.0
    %529 = vmatpush2.msra.mxu0 0.0
    %530 = vmatprep.subr.mxu0 0.0
    %531 = vmatpush2.msra.mxu0 0.0
    %532 = vmatprep.subr.mxu0 0.0
    %533 = vmatpush2.msra.mxu0 0.0
    %534 = vmatprep.subr.mxu0 0.0
    %535 = vmatpush2.msra.mxu0 0.0
    %536 = vmatprep.subr.mxu0 0.0
    %537 = vmatpush2.msra.mxu0 0.0
    %538 = vmatprep.subr.mxu0 0.0
    %539 = vmatpush2.msra.mxu0 0.0
    %540 = vmatprep.subr.mxu0 0.0
    %541 = vmatpush2.msra.mxu0 0.0
    %542 = vmatprep.subr.mxu0 0.0
    %543 = vmatpush2.msra.mxu0 0.0
    %544 = vmatprep.subr.mxu0 0.0
    %545 = vmatpush2.msra.mxu0 0.0
    %546 = vmatprep.subr.mxu0 0.0
    %547 = vmatpush2.msra.mxu0 0.0
    %548 = vmatprep.subr.mxu0 0.0
    %549 = vmatpush2.msra.mxu0 0.0
    %550 = vmatprep.subr.mxu0 0.0
    %551 = vmatpush2.msra.mxu0 0.0
    %552 = vmatprep.subr.mxu0 0.0
    %553 = vmatpush2.msra.mxu0 0.0
    %554 = vmatprep.mubr.f32.mxu0 0.0
    %v555 = vand.u32 %v100, 4294901760
    %556 = vmatmul.mubr.f32.gmra.mxu0 %v555
    %v557 = vpop.f32.mrf.mxu0
    %v558 = vadd.f32 %v485, %v557
    %v559 = vpop.f32.mrf.mxu0
    %560 = vdwg.mxu0
    %v561 = vmax.f32 %v558, 0.0
    %562 = vrot.lane.b32.xlu0 %v561, 32
    %v563 = vpop.permute.xlu0 %562
    %v564 = vsel %vm79, %v563, %v561
    %565 = vrot.lane.b32.xlu0 %v564, 32
    %v566 = vpop.permute.xlu0 %565
    %v567 = vsel %vm79, %v566, %v561
    %569 = vrot.lane.b32.xlu0 %v567, 97
    %v570 = vpop.permute.xlu0 %569
    %v572 = vsel %vm87, %v570, 0.0
    %574 = vset.pattern.permute.xlu0 0
    %575 = vperm.xlu0 %574, %v78
    %v576 = vpop.permute.xlu0 %575
    %v579 = vsel %vm98, %v77, 0
    %581 = vmatprep.subr.mxu0 0.0
    %582 = vmatpush1.msra.mxu0 0.0
    %583 = vmatprep.subr.mxu0 0.0
    %584 = vmatpush1.msra.mxu0 0.0
    %585 = vmatprep.subr.mxu0 0.0
    %586 = vmatpush1.msra.mxu0 0.0
    %587 = vmatprep.subr.mxu0 0.0
    %588 = vmatpush1.msra.mxu0 0.0
    %589 = vmatprep.subr.mxu0 0.0
    %590 = vmatpush1.msra.mxu0 0.0
    %591 = vmatprep.subr.mxu0 0.0
    %592 = vmatpush1.msra.mxu0 0.0
    %593 = vmatprep.subr.mxu0 0.0
    %594 = vmatpush1.msra.mxu0 0.0
    %595 = vmatprep.subr.mxu0 0.0
    %596 = vmatpush1.msra.mxu0 0.0
    %597 = vmatprep.subr.mxu0 0.0
    %598 = vmatpush1.msra.mxu0 0.0
    %599 = vmatprep.subr.mxu0 0.0
    %600 = vmatpush1.msra.mxu0 0.0
    %601 = vmatprep.subr.mxu0 0.0
    %602 = vmatpush1.msra.mxu0 0.0
    %603 = vmatprep.subr.mxu0 0.0
    %604 = vmatpush1.msra.mxu0 0.0
    %605 = vmatprep.subr.mxu0 0.0
    %606 = vmatpush1.msra.mxu0 0.0
    %607 = vmatprep.subr.mxu0 0.0
    %608 = vmatpush1.msra.mxu0 0.0
    %609 = vmatprep.subr.mxu0 0.0
    %v610 = vand.u32 %v561, 4294901760
    %611 = vmatpush1.msra.mxu0 %v610
    %612 = vmatprep.subr.mxu0 0.0
    %v613 = vand.u32 %v572, 4294901760
    %614 = vmatpush1.msra.mxu0 %v613
    %615 = vmatprep.subr.mxu0 0.0
    %616 = vmatpush2.msra.mxu0 0.0
    %617 = vmatprep.subr.mxu0 0.0
    %618 = vmatpush2.msra.mxu0 0.0
    %619 = vmatprep.subr.mxu0 0.0
    %620 = vmatpush2.msra.mxu0 0.0
    %621 = vmatprep.subr.mxu0 0.0
    %622 = vmatpush2.msra.mxu0 0.0
    %623 = vmatprep.subr.mxu0 0.0
    %624 = vmatpush2.msra.mxu0 0.0
    %625 = vmatprep.subr.mxu0 0.0
    %626 = vmatpush2.msra.mxu0 0.0
    %627 = vmatprep.subr.mxu0 0.0
    %628 = vmatpush2.msra.mxu0 0.0
    %629 = vmatprep.subr.mxu0 0.0
    %630 = vmatpush2.msra.mxu0 0.0
    %631 = vmatprep.subr.mxu0 0.0
    %632 = vmatpush2.msra.mxu0 0.0
    %633 = vmatprep.subr.mxu0 0.0
    %634 = vmatpush2.msra.mxu0 0.0
    %635 = vmatprep.subr.mxu0 0.0
    %636 = vmatpush2.msra.mxu0 0.0
    %637 = vmatprep.subr.mxu0 0.0
    %638 = vmatpush2.msra.mxu0 0.0
    %639 = vmatprep.subr.mxu0 0.0
    %640 = vmatpush2.msra.mxu0 0.0
    %641 = vmatprep.subr.mxu0 0.0
    %642 = vmatpush2.msra.mxu0 0.0
    %643 = vmatprep.subr.mxu0 0.0
    %644 = vmatpush2.msra.mxu0 0.0
    %645 = vmatprep.subr.mxu0 0.0
    %646 = vmatpush2.msra.mxu0 0.0
    %647 = vmatprep.mubr.f32.mxu0 0.0
    %v648 = vand.u32 %v579, 4294901760
    %v649 = vsub.f32 %v579, %v648
    %v650 = vand.u32 %v649, 4294901760
    %v651 = vsub.f32 %v649, %v650
    %v652 = vand.u32 %v651, 4294901760
    %653 = vmatmul.mubr.f32.gmra.mxu0 %v652
    %v654 = vpop.f32.mrf.mxu0
    %v655 = vadd.f32 %v576, %v654
    %v656 = vpop.f32.mrf.mxu0
    %657 = vdwg.mxu0
    %658 = vmatprep.subr.mxu0 0.0
    %659 = vmatpush1.msra.mxu0 0.0
    %660 = vmatprep.subr.mxu0 0.0
    %661 = vmatpush1.msra.mxu0 0.0
    %662 = vmatprep.subr.mxu0 0.0
    %663 = vmatpush1.msra.mxu0 0.0
    %664 = vmatprep.subr.mxu0 0.0
    %665 = vmatpush1.msra.mxu0 0.0
    %666 = vmatprep.subr.mxu0 0.0
    %667 = vmatpush1.msra.mxu0 0.0
    %668 = vmatprep.subr.mxu0 0.0
    %669 = vmatpush1.msra.mxu0 0.0
    %670 = vmatprep.subr.mxu0 0.0
    %671 = vmatpush1.msra.mxu0 0.0
    %672 = vmatprep.subr.mxu0 0.0
    %673 = vmatpush1.msra.mxu0 0.0
    %674 = vmatprep.subr.mxu0 0.0
    %675 = vmatpush1.msra.mxu0 0.0
    %676 = vmatprep.subr.mxu0 0.0
    %677 = vmatpush1.msra.mxu0 0.0
    %678 = vmatprep.subr.mxu0 0.0
    %679 = vmatpush1.msra.mxu0 0.0
    %680 = vmatprep.subr.mxu0 0.0
    %681 = vmatpush1.msra.mxu0 0.0
    %682 = vmatprep.subr.mxu0 0.0
    %683 = vmatpush1.msra.mxu0 0.0
    %684 = vmatprep.subr.mxu0 0.0
    %685 = vmatpush1.msra.mxu0 0.0
    %686 = vmatprep.subr.mxu0 0.0
    %v687 = vand.u32 %v561, 4294901760
    %v688 = vsub.f32 %v561, %v687
    %v689 = vand.u32 %v688, 4294901760
    %v690 = vsub.f32 %v688, %v689
    %v691 = vand.u32 %v690, 4294901760
    %692 = vmatpush1.msra.mxu0 %v691
    %693 = vmatprep.subr.mxu0 0.0
    %v694 = vand.u32 %v572, 4294901760
    %v695 = vsub.f32 %v572, %v694
    %v696 = vand.u32 %v695, 4294901760
    %v697 = vsub.f32 %v695, %v696
    %v698 = vand.u32 %v697, 4294901760
    %699 = vmatpush1.msra.mxu0 %v698
    %700 = vmatprep.subr.mxu0 0.0
    %701 = vmatpush2.msra.mxu0 0.0
    %702 = vmatprep.subr.mxu0 0.0
    %703 = vmatpush2.msra.mxu0 0.0
    %704 = vmatprep.subr.mxu0 0.0
    %705 = vmatpush2.msra.mxu0 0.0
    %706 = vmatprep.subr.mxu0 0.0
    %707 = vmatpush2.msra.mxu0 0.0
    %708 = vmatprep.subr.mxu0 0.0
    %709 = vmatpush2.msra.mxu0 0.0
    %710 = vmatprep.subr.mxu0 0.0
    %711 = vmatpush2.msra.mxu0 0.0
    %712 = vmatprep.subr.mxu0 0.0
    %713 = vmatpush2.msra.mxu0 0.0
    %714 = vmatprep.subr.mxu0 0.0
    %715 = vmatpush2.msra.mxu0 0.0
    %716 = vmatprep.subr.mxu0 0.0
    %717 = vmatpush2.msra.mxu0 0.0
    %718 = vmatprep.subr.mxu0 0.0
    %719 = vmatpush2.msra.mxu0 0.0
    %720 = vmatprep.subr.mxu0 0.0
    %721 = vmatpush2.msra.mxu0 0.0
    %722 = vmatprep.subr.mxu0 0.0
    %723 = vmatpush2.msra.mxu0 0.0
    %724 = vmatprep.subr.mxu0 0.0
    %725 = vmatpush2.msra.mxu0 0.0
    %726 = vmatprep.subr.mxu0 0.0
    %727 = vmatpush2.msra.mxu0 0.0
    %728 = vmatprep.subr.mxu0 0.0
    %729 = vmatpush2.msra.mxu0 0.0
    %730 = vmatprep.subr.mxu0 0.0
    %731 = vmatpush2.msra.mxu0 0.0
    %732 = vmatprep.mubr.f32.mxu0 0.0
    %v733 = vand.u32 %v579, 4294901760
    %734 = vmatmul.mubr.f32.gmra.mxu0 %v733
    %v735 = vpop.f32.mrf.mxu0
    %v736 = vadd.f32 %v655, %v735
    %v737 = vpop.f32.mrf.mxu0
    %738 = vdwg.mxu0
    %739 = vmatprep.subr.mxu0 0.0
    %740 = vmatpush1.msra.mxu0 0.0
    %741 = vmatprep.subr.mxu0 0.0
    %742 = vmatpush1.msra.mxu0 0.0
    %743 = vmatprep.subr.mxu0 0.0
    %744 = vmatpush1.msra.mxu0 0.0
    %745 = vmatprep.subr.mxu0 0.0
    %746 = vmatpush1.msra.mxu0 0.0
    %747 = vmatprep.subr.mxu0 0.0
    %748 = vmatpush1.msra.mxu0 0.0
    %749 = vmatprep.subr.mxu0 0.0
    %750 = vmatpush1.msra.mxu0 0.0
    %751 = vmatprep.subr.mxu0 0.0
    %752 = vmatpush1.msra.mxu0 0.0
    %753 = vmatprep.subr.mxu0 0.0
    %754 = vmatpush1.msra.mxu0 0.0
    %755 = vmatprep.subr.mxu0 0.0
    %756 = vmatpush1.msra.mxu0 0.0
    %757 = vmatprep.subr.mxu0 0.0
    %758 = vmatpush1.msra.mxu0 0.0
    %759 = vmatprep.subr.mxu0 0.0
    %760 = vmatpush1.msra.mxu0 0.0
    %761 = vmatprep.subr.mxu0 0.0
    %762 = vmatpush1.msra.mxu0 0.0
    %763 = vmatprep.subr.mxu0 0.0
    %764 = vmatpush1.msra.mxu0 0.0
    %765 = vmatprep.subr.mxu0 0.0
    %766 = vmatpush1.msra.mxu0 0.0
    %767 = vmatprep.subr.mxu0 0.0
    %v768 = vand.u32 %v561, 4294901760
    %v769 = vsub.f32 %v561, %v768
    %770 = vmatpush1.msra.mxu0 %v769
    %771 = vmatprep.subr.mxu0 0.0
    %v772 = vand.u32 %v572, 4294901760
    %v773 = vsub.f32 %v572, %v772
    %774 = vmatpush1.msra.mxu0 %v773
    %775 = vmatprep.subr.mxu0 0.0
    %776 = vmatpush2.msra.mxu0 0.0
    %777 = vmatprep.subr.mxu0 0.0
    %778 = vmatpush2.msra.mxu0 0.0
    %779 = vmatprep.subr.mxu0 0.0
    %780 = vmatpush2.msra.mxu0 0.0
    %781 = vmatprep.subr.mxu0 0.0
    %782 = vmatpush2.msra.mxu0 0.0
    %783 = vmatprep.subr.mxu0 0.0
    %784 = vmatpush2.msra.mxu0 0.0
    %785 = vmatprep.subr.mxu0 0.0
    %786 = vmatpush2.msra.mxu0 0.0
    %787 = vmatprep.subr.mxu0 0.0
    %788 = vmatpush2.msra.mxu0 0.0
    %789 = vmatprep.subr.mxu0 0.0
    %790 = vmatpush2.msra.mxu0 0.0
    %791 = vmatprep.subr.mxu0 0.0
    %792 = vmatpush2.msra.mxu0 0.0
    %793 = vmatprep.subr.mxu0 0.0
    %794 = vmatpush2.msra.mxu0 0.0
    %795 = vmatprep.subr.mxu0 0.0
    %796 = vmatpush2.msra.mxu0 0.0
    %797 = vmatprep.subr.mxu0 0.0
    %798 = vmatpush2.msra.mxu0 0.0
    %799 = vmatprep.subr.mxu0 0.0
    %800 = vmatpush2.msra.mxu0 0.0
    %801 = vmatprep.subr.mxu0 0.0
    %802 = vmatpush2.msra.mxu0 0.0
    %803 = vmatprep.subr.mxu0 0.0
    %804 = vmatpush2.msra.mxu0 0.0
    %805 = vmatprep.subr.mxu0 0.0
    %806 = vmatpush2.msra.mxu0 0.0
    %807 = vmatprep.mubr.f32.mxu0 0.0
    %v808 = vand.u32 %v579, 4294901760
    %v809 = vsub.f32 %v579, %v808
    %810 = vmatmul.mubr.f32.gmra.mxu0 %v809
    %v811 = vpop.f32.mrf.mxu0
    %v812 = vadd.f32 %v736, %v811
    %v813 = vpop.f32.mrf.mxu0
    %814 = vdwg.mxu0
    %815 = vmatprep.subr.mxu0 0.0
    %816 = vmatpush1.msra.mxu0 0.0
    %817 = vmatprep.subr.mxu0 0.0
    %818 = vmatpush1.msra.mxu0 0.0
    %819 = vmatprep.subr.mxu0 0.0
    %820 = vmatpush1.msra.mxu0 0.0
    %821 = vmatprep.subr.mxu0 0.0
    %822 = vmatpush1.msra.mxu0 0.0
    %823 = vmatprep.subr.mxu0 0.0
    %824 = vmatpush1.msra.mxu0 0.0
    %825 = vmatprep.subr.mxu0 0.0
    %826 = vmatpush1.msra.mxu0 0.0
    %827 = vmatprep.subr.mxu0 0.0
    %828 = vmatpush1.msra.mxu0 0.0
    %829 = vmatprep.subr.mxu0 0.0
    %830 = vmatpush1.msra.mxu0 0.0
    %831 = vmatprep.subr.mxu0 0.0
    %832 = vmatpush1.msra.mxu0 0.0
    %833 = vmatprep.subr.mxu0 0.0
    %834 = vmatpush1.msra.mxu0 0.0
    %835 = vmatprep.subr.mxu0 0.0
    %836 = vmatpush1.msra.mxu0 0.0
    %837 = vmatprep.subr.mxu0 0.0
    %838 = vmatpush1.msra.mxu0 0.0
    %839 = vmatprep.subr.mxu0 0.0
    %840 = vmatpush1.msra.mxu0 0.0
    %841 = vmatprep.subr.mxu0 0.0
    %842 = vmatpush1.msra.mxu0 0.0
    %843 = vmatprep.subr.mxu0 0.0
    %v844 = vand.u32 %v561, 4294901760
    %845 = vmatpush1.msra.mxu0 %v844
    %846 = vmatprep.subr.mxu0 0.0
    %v847 = vand.u32 %v572, 4294901760
    %848 = vmatpush1.msra.mxu0 %v847
    %849 = vmatprep.subr.mxu0 0.0
    %850 = vmatpush2.msra.mxu0 0.0
    %851 = vmatprep.subr.mxu0 0.0
    %852 = vmatpush2.msra.mxu0 0.0
    %853 = vmatprep.subr.mxu0 0.0
    %854 = vmatpush2.msra.mxu0 0.0
    %855 = vmatprep.subr.mxu0 0.0
    %856 = vmatpush2.msra.mxu0 0.0
    %857 = vmatprep.subr.mxu0 0.0
    %858 = vmatpush2.msra.mxu0 0.0
    %859 = vmatprep.subr.mxu0 0.0
    %860 = vmatpush2.msra.mxu0 0.0
    %861 = vmatprep.subr.mxu0 0.0
    %862 = vmatpush2.msra.mxu0 0.0
    %863 = vmatprep.subr.mxu0 0.0
    %864 = vmatpush2.msra.mxu0 0.0
    %865 = vmatprep.subr.mxu0 0.0
    %866 = vmatpush2.msra.mxu0 0.0
    %867 = vmatprep.subr.mxu0 0.0
    %868 = vmatpush2.msra.mxu0 0.0
    %869 = vmatprep.subr.mxu0 0.0
    %870 = vmatpush2.msra.mxu0 0.0
    %871 = vmatprep.subr.mxu0 0.0
    %872 = vmatpush2.msra.mxu0 0.0
    %873 = vmatprep.subr.mxu0 0.0
    %874 = vmatpush2.msra.mxu0 0.0
    %875 = vmatprep.subr.mxu0 0.0
    %876 = vmatpush2.msra.mxu0 0.0
    %877 = vmatprep.subr.mxu0 0.0
    %878 = vmatpush2.msra.mxu0 0.0
    %879 = vmatprep.subr.mxu0 0.0
    %880 = vmatpush2.msra.mxu0 0.0
    %881 = vmatprep.mubr.f32.mxu0 0.0
    %v882 = vand.u32 %v579, 4294901760
    %v883 = vsub.f32 %v579, %v882
    %v884 = vand.u32 %v883, 4294901760
    %885 = vmatmul.mubr.f32.gmra.mxu0 %v884
    %v886 = vpop.f32.mrf.mxu0
    %v887 = vadd.f32 %v812, %v886
    %v888 = vpop.f32.mrf.mxu0
    %889 = vdwg.mxu0
    %890 = vmatprep.subr.mxu0 0.0
    %891 = vmatpush1.msra.mxu0 0.0
    %892 = vmatprep.subr.mxu0 0.0
    %893 = vmatpush1.msra.mxu0 0.0
    %894 = vmatprep.subr.mxu0 0.0
    %895 = vmatpush1.msra.mxu0 0.0
    %896 = vmatprep.subr.mxu0 0.0
    %897 = vmatpush1.msra.mxu0 0.0
    %898 = vmatprep.subr.mxu0 0.0
    %899 = vmatpush1.msra.mxu0 0.0
    %900 = vmatprep.subr.mxu0 0.0
    %901 = vmatpush1.msra.mxu0 0.0
    %902 = vmatprep.subr.mxu0 0.0
    %903 = vmatpush1.msra.mxu0 0.0
    %904 = vmatprep.subr.mxu0 0.0
    %905 = vmatpush1.msra.mxu0 0.0
    %906 = vmatprep.subr.mxu0 0.0
    %907 = vmatpush1.msra.mxu0 0.0
    %908 = vmatprep.subr.mxu0 0.0
    %909 = vmatpush1.msra.mxu0 0.0
    %910 = vmatprep.subr.mxu0 0.0
    %911 = vmatpush1.msra.mxu0 0.0
    %912 = vmatprep.subr.mxu0 0.0
    %913 = vmatpush1.msra.mxu0 0.0
    %914 = vmatprep.subr.mxu0 0.0
    %915 = vmatpush1.msra.mxu0 0.0
    %916 = vmatprep.subr.mxu0 0.0
    %917 = vmatpush1.msra.mxu0 0.0
    %918 = vmatprep.subr.mxu0 0.0
    %v919 = vand.u32 %v561, 4294901760
    %v920 = vsub.f32 %v561, %v919
    %v921 = vand.u32 %v920, 4294901760
    %922 = vmatpush1.msra.mxu0 %v921
    %923 = vmatprep.subr.mxu0 0.0
    %v924 = vand.u32 %v572, 4294901760
    %v925 = vsub.f32 %v572, %v924
    %v926 = vand.u32 %v925, 4294901760
    %927 = vmatpush1.msra.mxu0 %v926
    %928 = vmatprep.subr.mxu0 0.0
    %929 = vmatpush2.msra.mxu0 0.0
    %930 = vmatprep.subr.mxu0 0.0
    %931 = vmatpush2.msra.mxu0 0.0
    %932 = vmatprep.subr.mxu0 0.0
    %933 = vmatpush2.msra.mxu0 0.0
    %934 = vmatprep.subr.mxu0 0.0
    %935 = vmatpush2.msra.mxu0 0.0
    %936 = vmatprep.subr.mxu0 0.0
    %937 = vmatpush2.msra.mxu0 0.0
    %938 = vmatprep.subr.mxu0 0.0
    %939 = vmatpush2.msra.mxu0 0.0
    %940 = vmatprep.subr.mxu0 0.0
    %941 = vmatpush2.msra.mxu0 0.0
    %942 = vmatprep.subr.mxu0 0.0
    %943 = vmatpush2.msra.mxu0 0.0
    %944 = vmatprep.subr.mxu0 0.0
    %945 = vmatpush2.msra.mxu0 0.0
    %946 = vmatprep.subr.mxu0 0.0
    %947 = vmatpush2.msra.mxu0 0.0
    %948 = vmatprep.subr.mxu0 0.0
    %949 = vmatpush2.msra.mxu0 0.0
    %950 = vmatprep.subr.mxu0 0.0
    %951 = vmatpush2.msra.mxu0 0.0
    %952 = vmatprep.subr.mxu0 0.0
    %953 = vmatpush2.msra.mxu0 0.0
    %954 = vmatprep.subr.mxu0 0.0
    %955 = vmatpush2.msra.mxu0 0.0
    %956 = vmatprep.subr.mxu0 0.0
    %957 = vmatpush2.msra.mxu0 0.0
    %958 = vmatprep.subr.mxu0 0.0
    %959 = vmatpush2.msra.mxu0 0.0
    %960 = vmatprep.mubr.f32.mxu0 0.0
    %v961 = vand.u32 %v579, 4294901760
    %962 = vmatmul.mubr.f32.gmra.mxu0 %v961
    %v963 = vpop.f32.mrf.mxu0
    %v964 = vadd.f32 %v887, %v963
    %v965 = vpop.f32.mrf.mxu0
    %966 = vdwg.mxu0
    %967 = vmatprep.subr.mxu0 0.0
    %968 = vmatpush1.msra.mxu0 0.0
    %969 = vmatprep.subr.mxu0 0.0
    %970 = vmatpush1.msra.mxu0 0.0
    %971 = vmatprep.subr.mxu0 0.0
    %972 = vmatpush1.msra.mxu0 0.0
    %973 = vmatprep.subr.mxu0 0.0
    %974 = vmatpush1.msra.mxu0 0.0
    %975 = vmatprep.subr.mxu0 0.0
    %976 = vmatpush1.msra.mxu0 0.0
    %977 = vmatprep.subr.mxu0 0.0
    %978 = vmatpush1.msra.mxu0 0.0
    %979 = vmatprep.subr.mxu0 0.0
    %980 = vmatpush1.msra.mxu0 0.0
    %981 = vmatprep.subr.mxu0 0.0
    %982 = vmatpush1.msra.mxu0 0.0
    %983 = vmatprep.subr.mxu0 0.0
    %984 = vmatpush1.msra.mxu0 0.0
    %985 = vmatprep.subr.mxu0 0.0
    %986 = vmatpush1.msra.mxu0 0.0
    %987 = vmatprep.subr.mxu0 0.0
    %988 = vmatpush1.msra.mxu0 0.0
    %989 = vmatprep.subr.mxu0 0.0
    %990 = vmatpush1.msra.mxu0 0.0
    %991 = vmatprep.subr.mxu0 0.0
    %992 = vmatpush1.msra.mxu0 0.0
    %993 = vmatprep.subr.mxu0 0.0
    %994 = vmatpush1.msra.mxu0 0.0
    %995 = vmatprep.subr.mxu0 0.0
    %v996 = vand.u32 %v561, 4294901760
    %997 = vmatpush1.msra.mxu0 %v996
    %998 = vmatprep.subr.mxu0 0.0
    %v999 = vand.u32 %v572, 4294901760
    %1000 = vmatpush1.msra.mxu0 %v999
    %1001 = vmatprep.subr.mxu0 0.0
    %1002 = vmatpush2.msra.mxu0 0.0
    %1003 = vmatprep.subr.mxu0 0.0
    %1004 = vmatpush2.msra.mxu0 0.0
    %1005 = vmatprep.subr.mxu0 0.0
    %1006 = vmatpush2.msra.mxu0 0.0
    %1007 = vmatprep.subr.mxu0 0.0
    %1008 = vmatpush2.msra.mxu0 0.0
    %1009 = vmatprep.subr.mxu0 0.0
    %1010 = vmatpush2.msra.mxu0 0.0
    %1011 = vmatprep.subr.mxu0 0.0
    %1012 = vmatpush2.msra.mxu0 0.0
    %1013 = vmatprep.subr.mxu0 0.0
    %1014 = vmatpush2.msra.mxu0 0.0
    %1015 = vmatprep.subr.mxu0 0.0
    %1016 = vmatpush2.msra.mxu0 0.0
    %1017 = vmatprep.subr.mxu0 0.0
    %1018 = vmatpush2.msra.mxu0 0.0
    %1019 = vmatprep.subr.mxu0 0.0
    %1020 = vmatpush2.msra.mxu0 0.0
    %1021 = vmatprep.subr.mxu0 0.0
    %1022 = vmatpush2.msra.mxu0 0.0
    %1023 = vmatprep.subr.mxu0 0.0
    %1024 = vmatpush2.msra.mxu0 0.0
    %1025 = vmatprep.subr.mxu0 0.0
    %1026 = vmatpush2.msra.mxu0 0.0
    %1027 = vmatprep.subr.mxu0 0.0
    %1028 = vmatpush2.msra.mxu0 0.0
    %1029 = vmatprep.subr.mxu0 0.0
    %1030 = vmatpush2.msra.mxu0 0.0
    %1031 = vmatprep.subr.mxu0 0.0
    %1032 = vmatpush2.msra.mxu0 0.0
    %1033 = vmatprep.mubr.f32.mxu0 0.0
    %v1034 = vand.u32 %v579, 4294901760
    %1035 = vmatmul.mubr.f32.gmra.mxu0 %v1034
    %v1036 = vpop.f32.mrf.mxu0
    %v1037 = vadd.f32 %v964, %v1036
    %v1038 = vpop.f32.mrf.mxu0
    %1039 = vdwg.mxu0
    %v1040 = vmax.f32 %v1037, 0.0
    %v1041 = vld [vmem:[%s5] sm:$0xff]
    %v1042 = vld [vmem:[%s6] sm:$0xff]
    %1044 = vset.pattern.permute.xlu0 0
    %1045 = vperm.xlu0 %1044, %v1042
    %v1046 = vpop.permute.xlu0 %1045
    %vm1048 = vcmask 64512
    %v1050 = vsel %vm1048, %v1041, 0
    %1052 = vmatprep.subr.mxu0 0.0
    %1053 = vmatpush1.msra.mxu0 0.0
    %1054 = vmatprep.subr.mxu0 0.0
    %1055 = vmatpush1.msra.mxu0 0.0
    %1056 = vmatprep.subr.mxu0 0.0
    %1057 = vmatpush1.msra.mxu0 0.0
    %1058 = vmatprep.subr.mxu0 0.0
    %1059 = vmatpush1.msra.mxu0 0.0
    %1060 = vmatprep.subr.mxu0 0.0
    %1061 = vmatpush1.msra.mxu0 0.0
    %1062 = vmatprep.subr.mxu0 0.0
    %1063 = vmatpush1.msra.mxu0 0.0
    %1064 = vmatprep.subr.mxu0 0.0
    %1065 = vmatpush1.msra.mxu0 0.0
    %1066 = vmatprep.subr.mxu0 0.0
    %1067 = vmatpush1.msra.mxu0 0.0
    %1068 = vmatprep.subr.mxu0 0.0
    %1069 = vmatpush1.msra.mxu0 0.0
    %1070 = vmatprep.subr.mxu0 0.0
    %1071 = vmatpush1.msra.mxu0 0.0
    %1072 = vmatprep.subr.mxu0 0.0
    %1073 = vmatpush1.msra.mxu0 0.0
    %1074 = vmatprep.subr.mxu0 0.0
    %1075 = vmatpush1.msra.mxu0 0.0
    %1076 = vmatprep.subr.mxu0 0.0
    %1077 = vmatpush1.msra.mxu0 0.0
    %1078 = vmatprep.subr.mxu0 0.0
    %1079 = vmatpush1.msra.mxu0 0.0
    %1080 = vmatprep.subr.mxu0 0.0
    %1081 = vmatpush1.msra.mxu0 0.0
    %1082 = vmatprep.subr.mxu0 0.0
    %v1083 = vand.u32 %v74, 4294901760
    %1084 = vmatpush1.msra.mxu0 %v1083
    %1085 = vmatprep.subr.mxu0 0.0
    %1086 = vmatpush2.msra.mxu0 0.0
    %1087 = vmatprep.subr.mxu0 0.0
    %1088 = vmatpush2.msra.mxu0 0.0
    %1089 = vmatprep.subr.mxu0 0.0
    %1090 = vmatpush2.msra.mxu0 0.0
    %1091 = vmatprep.subr.mxu0 0.0
    %1092 = vmatpush2.msra.mxu0 0.0
    %1093 = vmatprep.subr.mxu0 0.0
    %1094 = vmatpush2.msra.mxu0 0.0
    %1095 = vmatprep.subr.mxu0 0.0
    %1096 = vmatpush2.msra.mxu0 0.0
    %1097 = vmatprep.subr.mxu0 0.0
    %1098 = vmatpush2.msra.mxu0 0.0
    %1099 = vmatprep.subr.mxu0 0.0
    %1100 = vmatpush2.msra.mxu0 0.0
    %1101 = vmatprep.subr.mxu0 0.0
    %1102 = vmatpush2.msra.mxu0 0.0
    %1103 = vmatprep.subr.mxu0 0.0
    %1104 = vmatpush2.msra.mxu0 0.0
    %1105 = vmatprep.subr.mxu0 0.0
    %1106 = vmatpush2.msra.mxu0 0.0
    %1107 = vmatprep.subr.mxu0 0.0
    %1108 = vmatpush2.msra.mxu0 0.0
    %1109 = vmatprep.subr.mxu0 0.0
    %1110 = vmatpush2.msra.mxu0 0.0
    %1111 = vmatprep.subr.mxu0 0.0
    %1112 = vmatpush2.msra.mxu0 0.0
    %1113 = vmatprep.subr.mxu0 0.0
    %1114 = vmatpush2.msra.mxu0 0.0
    %1115 = vmatprep.subr.mxu0 0.0
    %1116 = vmatpush2.msra.mxu0 0.0
    %1117 = vmatprep.mubr.f32.mxu0 0.0
    %v1118 = vand.u32 %v1050, 4294901760
    %v1119 = vsub.f32 %v1050, %v1118
    %v1120 = vand.u32 %v1119, 4294901760
    %v1121 = vsub.f32 %v1119, %v1120
    %v1122 = vand.u32 %v1121, 4294901760
    %1123 = vmatmul.mubr.f32.gmra.mxu0 %v1122
    %v1124 = vpop.f32.mrf.mxu0
    %v1125 = vadd.f32 %v1046, %v1124
    %v1126 = vpop.f32.mrf.mxu0
    %1127 = vdwg.mxu0
    %1128 = vmatprep.subr.mxu0 0.0
    %1129 = vmatpush1.msra.mxu0 0.0
    %1130 = vmatprep.subr.mxu0 0.0
    %1131 = vmatpush1.msra.mxu0 0.0
    %1132 = vmatprep.subr.mxu0 0.0
    %1133 = vmatpush1.msra.mxu0 0.0
    %1134 = vmatprep.subr.mxu0 0.0
    %1135 = vmatpush1.msra.mxu0 0.0
    %1136 = vmatprep.subr.mxu0 0.0
    %1137 = vmatpush1.msra.mxu0 0.0
    %1138 = vmatprep.subr.mxu0 0.0
    %1139 = vmatpush1.msra.mxu0 0.0
    %1140 = vmatprep.subr.mxu0 0.0
    %1141 = vmatpush1.msra.mxu0 0.0
    %1142 = vmatprep.subr.mxu0 0.0
    %1143 = vmatpush1.msra.mxu0 0.0
    %1144 = vmatprep.subr.mxu0 0.0
    %1145 = vmatpush1.msra.mxu0 0.0
    %1146 = vmatprep.subr.mxu0 0.0
    %1147 = vmatpush1.msra.mxu0 0.0
    %1148 = vmatprep.subr.mxu0 0.0
    %1149 = vmatpush1.msra.mxu0 0.0
    %1150 = vmatprep.subr.mxu0 0.0
    %1151 = vmatpush1.msra.mxu0 0.0
    %1152 = vmatprep.subr.mxu0 0.0
    %1153 = vmatpush1.msra.mxu0 0.0
    %1154 = vmatprep.subr.mxu0 0.0
    %1155 = vmatpush1.msra.mxu0 0.0
    %1156 = vmatprep.subr.mxu0 0.0
    %1157 = vmatpush1.msra.mxu0 0.0
    %1158 = vmatprep.subr.mxu0 0.0
    %v1159 = vand.u32 %v74, 4294901760
    %v1160 = vsub.f32 %v74, %v1159
    %v1161 = vand.u32 %v1160, 4294901760
    %v1162 = vsub.f32 %v1160, %v1161
    %v1163 = vand.u32 %v1162, 4294901760
    %1164 = vmatpush1.msra.mxu0 %v1163
    %1165 = vmatprep.subr.mxu0 0.0
    %1166 = vmatpush2.msra.mxu0 0.0
    %1167 = vmatprep.subr.mxu0 0.0
    %1168 = vmatpush2.msra.mxu0 0.0
    %1169 = vmatprep.subr.mxu0 0.0
    %1170 = vmatpush2.msra.mxu0 0.0
    %1171 = vmatprep.subr.mxu0 0.0
    %1172 = vmatpush2.msra.mxu0 0.0
    %1173 = vmatprep.subr.mxu0 0.0
    %1174 = vmatpush2.msra.mxu0 0.0
    %1175 = vmatprep.subr.mxu0 0.0
    %1176 = vmatpush2.msra.mxu0 0.0
    %1177 = vmatprep.subr.mxu0 0.0
    %1178 = vmatpush2.msra.mxu0 0.0
    %1179 = vmatprep.subr.mxu0 0.0
    %1180 = vmatpush2.msra.mxu0 0.0
    %1181 = vmatprep.subr.mxu0 0.0
    %1182 = vmatpush2.msra.mxu0 0.0
    %1183 = vmatprep.subr.mxu0 0.0
    %1184 = vmatpush2.msra.mxu0 0.0
    %1185 = vmatprep.subr.mxu0 0.0
    %1186 = vmatpush2.msra.mxu0 0.0
    %1187 = vmatprep.subr.mxu0 0.0
    %1188 = vmatpush2.msra.mxu0 0.0
    %1189 = vmatprep.subr.mxu0 0.0
    %1190 = vmatpush2.msra.mxu0 0.0
    %1191 = vmatprep.subr.mxu0 0.0
    %1192 = vmatpush2.msra.mxu0 0.0
    %1193 = vmatprep.subr.mxu0 0.0
    %1194 = vmatpush2.msra.mxu0 0.0
    %1195 = vmatprep.subr.mxu0 0.0
    %1196 = vmatpush2.msra.mxu0 0.0
    %1197 = vmatprep.mubr.f32.mxu0 0.0
    %v1198 = vand.u32 %v1050, 4294901760
    %1199 = vmatmul.mubr.f32.gmra.mxu0 %v1198
    %v1200 = vpop.f32.mrf.mxu0
    %v1201 = vadd.f32 %v1125, %v1200
    %v1202 = vpop.f32.mrf.mxu0
    %1203 = vdwg.mxu0
    %1204 = vmatprep.subr.mxu0 0.0
    %1205 = vmatpush1.msra.mxu0 0.0
    %1206 = vmatprep.subr.mxu0 0.0
    %1207 = vmatpush1.msra.mxu0 0.0
    %1208 = vmatprep.subr.mxu0 0.0
    %1209 = vmatpush1.msra.mxu0 0.0
    %1210 = vmatprep.subr.mxu0 0.0
    %1211 = vmatpush1.msra.mxu0 0.0
    %1212 = vmatprep.subr.mxu0 0.0
    %1213 = vmatpush1.msra.mxu0 0.0
    %1214 = vmatprep.subr.mxu0 0.0
    %1215 = vmatpush1.msra.mxu0 0.0
    %1216 = vmatprep.subr.mxu0 0.0
    %1217 = vmatpush1.msra.mxu0 0.0
    %1218 = vmatprep.subr.mxu0 0.0
    %1219 = vmatpush1.msra.mxu0 0.0
    %1220 = vmatprep.subr.mxu0 0.0
    %1221 = vmatpush1.msra.mxu0 0.0
    %1222 = vmatprep.subr.mxu0 0.0
    %1223 = vmatpush1.msra.mxu0 0.0
    %1224 = vmatprep.subr.mxu0 0.0
    %1225 = vmatpush1.msra.mxu0 0.0
    %1226 = vmatprep.subr.mxu0 0.0
    %1227 = vmatpush1.msra.mxu0 0.0
    %1228 = vmatprep.subr.mxu0 0.0
    %1229 = vmatpush1.msra.mxu0 0.0
    %1230 = vmatprep.subr.mxu0 0.0
    %1231 = vmatpush1.msra.mxu0 0.0
    %1232 = vmatprep.subr.mxu0 0.0
    %1233 = vmatpush1.msra.mxu0 0.0
    %1234 = vmatprep.subr.mxu0 0.0
    %v1235 = vand.u32 %v74, 4294901760
    %v1236 = vsub.f32 %v74, %v1235
    %1237 = vmatpush1.msra.mxu0 %v1236
    %1238 = vmatprep.subr.mxu0 0.0
    %1239 = vmatpush2.msra.mxu0 0.0
    %1240 = vmatprep.subr.mxu0 0.0
    %1241 = vmatpush2.msra.mxu0 0.0
    %1242 = vmatprep.subr.mxu0 0.0
    %1243 = vmatpush2.msra.mxu0 0.0
    %1244 = vmatprep.subr.mxu0 0.0
    %1245 = vmatpush2.msra.mxu0 0.0
    %1246 = vmatprep.subr.mxu0 0.0
    %1247 = vmatpush2.msra.mxu0 0.0
    %1248 = vmatprep.subr.mxu0 0.0
    %1249 = vmatpush2.msra.mxu0 0.0
    %1250 = vmatprep.subr.mxu0 0.0
    %1251 = vmatpush2.msra.mxu0 0.0
    %1252 = vmatprep.subr.mxu0 0.0
    %1253 = vmatpush2.msra.mxu0 0.0
    %1254 = vmatprep.subr.mxu0 0.0
    %1255 = vmatpush2.msra.mxu0 0.0
    %1256 = vmatprep.subr.mxu0 0.0
    %1257 = vmatpush2.msra.mxu0 0.0
    %1258 = vmatprep.subr.mxu0 0.0
    %1259 = vmatpush2.msra.mxu0 0.0
    %1260 = vmatprep.subr.mxu0 0.0
    %1261 = vmatpush2.msra.mxu0 0.0
    %1262 = vmatprep.subr.mxu0 0.0
    %1263 = vmatpush2.msra.mxu0 0.0
    %1264 = vmatprep.subr.mxu0 0.0
    %1265 = vmatpush2.msra.mxu0 0.0
    %1266 = vmatprep.subr.mxu0 0.0
    %1267 = vmatpush2.msra.mxu0 0.0
    %1268 = vmatprep.subr.mxu0 0.0
    %1269 = vmatpush2.msra.mxu0 0.0
    %1270 = vmatprep.mubr.f32.mxu0 0.0
    %v1271 = vand.u32 %v1050, 4294901760
    %v1272 = vsub.f32 %v1050, %v1271
    %1273 = vmatmul.mubr.f32.gmra.mxu0 %v1272
    %v1274 = vpop.f32.mrf.mxu0
    %v1275 = vadd.f32 %v1201, %v1274
    %v1276 = vpop.f32.mrf.mxu0
    %1277 = vdwg.mxu0
    %1278 = vmatprep.subr.mxu0 0.0
    %1279 = vmatpush1.msra.mxu0 0.0
    %1280 = vmatprep.subr.mxu0 0.0
    %1281 = vmatpush1.msra.mxu0 0.0
    %1282 = vmatprep.subr.mxu0 0.0
    %1283 = vmatpush1.msra.mxu0 0.0
    %1284 = vmatprep.subr.mxu0 0.0
    %1285 = vmatpush1.msra.mxu0 0.0
    %1286 = vmatprep.subr.mxu0 0.0
    %1287 = vmatpush1.msra.mxu0 0.0
    %1288 = vmatprep.subr.mxu0 0.0
    %1289 = vmatpush1.msra.mxu0 0.0
    %1290 = vmatprep.subr.mxu0 0.0
    %1291 = vmatpush1.msra.mxu0 0.0
    %1292 = vmatprep.subr.mxu0 0.0
    %1293 = vmatpush1.msra.mxu0 0.0
    %1294 = vmatprep.subr.mxu0 0.0
    %1295 = vmatpush1.msra.mxu0 0.0
    %1296 = vmatprep.subr.mxu0 0.0
    %1297 = vmatpush1.msra.mxu0 0.0
    %1298 = vmatprep.subr.mxu0 0.0
    %1299 = vmatpush1.msra.mxu0 0.0
    %1300 = vmatprep.subr.mxu0 0.0
    %1301 = vmatpush1.msra.mxu0 0.0
    %1302 = vmatprep.subr.mxu0 0.0
    %1303 = vmatpush1.msra.mxu0 0.0
    %1304 = vmatprep.subr.mxu0 0.0
    %1305 = vmatpush1.msra.mxu0 0.0
    %1306 = vmatprep.subr.mxu0 0.0
    %1307 = vmatpush1.msra.mxu0 0.0
    %1308 = vmatprep.subr.mxu0 0.0
    %v1309 = vand.u32 %v74, 4294901760
    %1310 = vmatpush1.msra.mxu0 %v1309
    %1311 = vmatprep.subr.mxu0 0.0
    %1312 = vmatpush2.msra.mxu0 0.0
    %1313 = vmatprep.subr.mxu0 0.0
    %1314 = vmatpush2.msra.mxu0 0.0
    %1315 = vmatprep.subr.mxu0 0.0
    %1316 = vmatpush2.msra.mxu0 0.0
    %1317 = vmatprep.subr.mxu0 0.0
    %1318 = vmatpush2.msra.mxu0 0.0
    %1319 = vmatprep.subr.mxu0 0.0
    %1320 = vmatpush2.msra.mxu0 0.0
    %1321 = vmatprep.subr.mxu0 0.0
    %1322 = vmatpush2.msra.mxu0 0.0
    %1323 = vmatprep.subr.mxu0 0.0
    %1324 = vmatpush2.msra.mxu0 0.0
    %1325 = vmatprep.subr.mxu0 0.0
    %1326 = vmatpush2.msra.mxu0 0.0
    %1327 = vmatprep.subr.mxu0 0.0
    %1328 = vmatpush2.msra.mxu0 0.0
    %1329 = vmatprep.subr.mxu0 0.0
    %1330 = vmatpush2.msra.mxu0 0.0
    %1331 = vmatprep.subr.mxu0 0.0
    %1332 = vmatpush2.msra.mxu0 0.0
    %1333 = vmatprep.subr.mxu0 0.0
    %1334 = vmatpush2.msra.mxu0 0.0
    %1335 = vmatprep.subr.mxu0 0.0
    %1336 = vmatpush2.msra.mxu0 0.0
    %1337 = vmatprep.subr.mxu0 0.0
    %1338 = vmatpush2.msra.mxu0 0.0
    %1339 = vmatprep.subr.mxu0 0.0
    %1340 = vmatpush2.msra.mxu0 0.0
    %1341 = vmatprep.subr.mxu0 0.0
    %1342 = vmatpush2.msra.mxu0 0.0
    %1343 = vmatprep.mubr.f32.mxu0 0.0
    %v1344 = vand.u32 %v1050, 4294901760
    %v1345 = vsub.f32 %v1050, %v1344
    %v1346 = vand.u32 %v1345, 4294901760
    %1347 = vmatmul.mubr.f32.gmra.mxu0 %v1346
    %v1348 = vpop.f32.mrf.mxu0
    %v1349 = vadd.f32 %v1275, %v1348
    %v1350 = vpop.f32.mrf.mxu0
    %1351 = vdwg.mxu0
    %1352 = vmatprep.subr.mxu0 0.0
    %1353 = vmatpush1.msra.mxu0 0.0
    %1354 = vmatprep.subr.mxu0 0.0
    %1355 = vmatpush1.msra.mxu0 0.0
    %1356 = vmatprep.subr.mxu0 0.0
    %1357 = vmatpush1.msra.mxu0 0.0
    %1358 = vmatprep.subr.mxu0 0.0
    %1359 = vmatpush1.msra.mxu0 0.0
    %1360 = vmatprep.subr.mxu0 0.0
    %1361 = vmatpush1.msra.mxu0 0.0
    %1362 = vmatprep.subr.mxu0 0.0
    %1363 = vmatpush1.msra.mxu0 0.0
    %1364 = vmatprep.subr.mxu0 0.0
    %1365 = vmatpush1.msra.mxu0 0.0
    %1366 = vmatprep.subr.mxu0 0.0
    %1367 = vmatpush1.msra.mxu0 0.0
    %1368 = vmatprep.subr.mxu0 0.0
    %1369 = vmatpush1.msra.mxu0 0.0
    %1370 = vmatprep.subr.mxu0 0.0
    %1371 = vmatpush1.msra.mxu0 0.0
    %1372 = vmatprep.subr.mxu0 0.0
    %1373 = vmatpush1.msra.mxu0 0.0
    %1374 = vmatprep.subr.mxu0 0.0
    %1375 = vmatpush1.msra.mxu0 0.0
    %1376 = vmatprep.subr.mxu0 0.0
    %1377 = vmatpush1.msra.mxu0 0.0
    %1378 = vmatprep.subr.mxu0 0.0
    %1379 = vmatpush1.msra.mxu0 0.0
    %1380 = vmatprep.subr.mxu0 0.0
    %1381 = vmatpush1.msra.mxu0 0.0
    %1382 = vmatprep.subr.mxu0 0.0
    %v1383 = vand.u32 %v74, 4294901760
    %v1384 = vsub.f32 %v74, %v1383
    %v1385 = vand.u32 %v1384, 4294901760
    %1386 = vmatpush1.msra.mxu0 %v1385
    %1387 = vmatprep.subr.mxu0 0.0
    %1388 = vmatpush2.msra.mxu0 0.0
    %1389 = vmatprep.subr.mxu0 0.0
    %1390 = vmatpush2.msra.mxu0 0.0
    %1391 = vmatprep.subr.mxu0 0.0
    %1392 = vmatpush2.msra.mxu0 0.0
    %1393 = vmatprep.subr.mxu0 0.0
    %1394 = vmatpush2.msra.mxu0 0.0
    %1395 = vmatprep.subr.mxu0 0.0
    %1396 = vmatpush2.msra.mxu0 0.0
    %1397 = vmatprep.subr.mxu0 0.0
    %1398 = vmatpush2.msra.mxu0 0.0
    %1399 = vmatprep.subr.mxu0 0.0
    %1400 = vmatpush2.msra.mxu0 0.0
    %1401 = vmatprep.subr.mxu0 0.0
    %1402 = vmatpush2.msra.mxu0 0.0
    %1403 = vmatprep.subr.mxu0 0.0
    %1404 = vmatpush2.msra.mxu0 0.0
    %1405 = vmatprep.subr.mxu0 0.0
    %1406 = vmatpush2.msra.mxu0 0.0
    %1407 = vmatprep.subr.mxu0 0.0
    %1408 = vmatpush2.msra.mxu0 0.0
    %1409 = vmatprep.subr.mxu0 0.0
    %1410 = vmatpush2.msra.mxu0 0.0
    %1411 = vmatprep.subr.mxu0 0.0
    %1412 = vmatpush2.msra.mxu0 0.0
    %1413 = vmatprep.subr.mxu0 0.0
    %1414 = vmatpush2.msra.mxu0 0.0
    %1415 = vmatprep.subr.mxu0 0.0
    %1416 = vmatpush2.msra.mxu0 0.0
    %1417 = vmatprep.subr.mxu0 0.0
    %1418 = vmatpush2.msra.mxu0 0.0
    %1419 = vmatprep.mubr.f32.mxu0 0.0
    %v1420 = vand.u32 %v1050, 4294901760
    %1421 = vmatmul.mubr.f32.gmra.mxu0 %v1420
    %v1422 = vpop.f32.mrf.mxu0
    %v1423 = vadd.f32 %v1349, %v1422
    %v1424 = vpop.f32.mrf.mxu0
    %1425 = vdwg.mxu0
    %1426 = vmatprep.subr.mxu0 0.0
    %1427 = vmatpush1.msra.mxu0 0.0
    %1428 = vmatprep.subr.mxu0 0.0
    %1429 = vmatpush1.msra.mxu0 0.0
    %1430 = vmatprep.subr.mxu0 0.0
    %1431 = vmatpush1.msra.mxu0 0.0
    %1432 = vmatprep.subr.mxu0 0.0
    %1433 = vmatpush1.msra.mxu0 0.0
    %1434 = vmatprep.subr.mxu0 0.0
    %1435 = vmatpush1.msra.mxu0 0.0
    %1436 = vmatprep.subr.mxu0 0.0
    %1437 = vmatpush1.msra.mxu0 0.0
    %1438 = vmatprep.subr.mxu0 0.0
    %1439 = vmatpush1.msra.mxu0 0.0
    %1440 = vmatprep.subr.mxu0 0.0
    %1441 = vmatpush1.msra.mxu0 0.0
    %1442 = vmatprep.subr.mxu0 0.0
    %1443 = vmatpush1.msra.mxu0 0.0
    %1444 = vmatprep.subr.mxu0 0.0
    %1445 = vmatpush1.msra.mxu0 0.0
    %1446 = vmatprep.subr.mxu0 0.0
    %1447 = vmatpush1.msra.mxu0 0.0
    %1448 = vmatprep.subr.mxu0 0.0
    %1449 = vmatpush1.msra.mxu0 0.0
    %1450 = vmatprep.subr.mxu0 0.0
    %1451 = vmatpush1.msra.mxu0 0.0
    %1452 = vmatprep.subr.mxu0 0.0
    %1453 = vmatpush1.msra.mxu0 0.0
    %1454 = vmatprep.subr.mxu0 0.0
    %1455 = vmatpush1.msra.mxu0 0.0
    %1456 = vmatprep.subr.mxu0 0.0
    %v1457 = vand.u32 %v74, 4294901760
    %1458 = vmatpush1.msra.mxu0 %v1457
    %1459 = vmatprep.subr.mxu0 0.0
    %1460 = vmatpush2.msra.mxu0 0.0
    %1461 = vmatprep.subr.mxu0 0.0
    %1462 = vmatpush2.msra.mxu0 0.0
    %1463 = vmatprep.subr.mxu0 0.0
    %1464 = vmatpush2.msra.mxu0 0.0
    %1465 = vmatprep.subr.mxu0 0.0
    %1466 = vmatpush2.msra.mxu0 0.0
    %1467 = vmatprep.subr.mxu0 0.0
    %1468 = vmatpush2.msra.mxu0 0.0
    %1469 = vmatprep.subr.mxu0 0.0
    %1470 = vmatpush2.msra.mxu0 0.0
    %1471 = vmatprep.subr.mxu0 0.0
    %1472 = vmatpush2.msra.mxu0 0.0
    %1473 = vmatprep.subr.mxu0 0.0
    %1474 = vmatpush2.msra.mxu0 0.0
    %1475 = vmatprep.subr.mxu0 0.0
    %1476 = vmatpush2.msra.mxu0 0.0
    %1477 = vmatprep.subr.mxu0 0.0
    %1478 = vmatpush2.msra.mxu0 0.0
    %1479 = vmatprep.subr.mxu0 0.0
    %1480 = vmatpush2.msra.mxu0 0.0
    %1481 = vmatprep.subr.mxu0 0.0
    %1482 = vmatpush2.msra.mxu0 0.0
    %1483 = vmatprep.subr.mxu0 0.0
    %1484 = vmatpush2.msra.mxu0 0.0
    %1485 = vmatprep.subr.mxu0 0.0
    %1486 = vmatpush2.msra.mxu0 0.0
    %1487 = vmatprep.subr.mxu0 0.0
    %1488 = vmatpush2.msra.mxu0 0.0
    %1489 = vmatprep.subr.mxu0 0.0
    %1490 = vmatpush2.msra.mxu0 0.0
    %1491 = vmatprep.mubr.f32.mxu0 0.0
    %v1492 = vand.u32 %v1050, 4294901760
    %1493 = vmatmul.mubr.f32.gmra.mxu0 %v1492
    %v1494 = vpop.f32.mrf.mxu0
    %v1495 = vadd.f32 %v1423, %v1494
    %v1496 = vpop.f32.mrf.mxu0
    %1497 = vdwg.mxu0
    %v1498 = vadd.f32 %v1040, %v1495
    %v1499 = vmax.f32 %v1498, 0.0
    %v1500 = vld [vmem:[%s7] sm:$0xff]
    %v1501 = vld [vmem:[%s8] sm:$0xff]
    %v1502 = vld [vmem:[%s9] sm:$0xff]
    %v1503 = vld [vmem:[%s10] sm:$0xff]
    %1504 = vrot.lane.b32.xlu0 %v1499, 32
    %v1505 = vpop.permute.xlu0 %1504
    %v1506 = vsel %vm79, %v1505, %v1499
    %1507 = vrot.lane.b32.xlu0 %v1506, 32
    %v1508 = vpop.permute.xlu0 %1507
    %v1509 = vsel %vm79, %v1508, %v1499
    %v1510 = vsel %vm72, 1, 0
    %vm1511 = vcmp.eq.s32.totalorder %v1510, 1
    %1513 = vrot.lane.b32.xlu0 %v1509, 98
    %v1514 = vpop.permute.xlu0 %1513
    %v1516 = vsel %vm1511, %v1514, 0.0
    %1518 = vset.pattern.permute.xlu0 0
    %1519 = vperm.xlu0 %1518, %v1501
    %v1520 = vpop.permute.xlu0 %1519
    %v1523 = vsel %vm98, %v1500, 0
    %1525 = vmatprep.subr.mxu0 0.0
    %1526 = vmatpush1.msra.mxu0 0.0
    %1527 = vmatprep.subr.mxu0 0.0
    %1528 = vmatpush1.msra.mxu0 0.0
    %1529 = vmatprep.subr.mxu0 0.0
    %1530 = vmatpush1.msra.mxu0 0.0
    %1531 = vmatprep.subr.mxu0 0.0
    %1532 = vmatpush1.msra.mxu0 0.0
    %1533 = vmatprep.subr.mxu0 0.0
    %1534 = vmatpush1.msra.mxu0 0.0
    %1535 = vmatprep.subr.mxu0 0.0
    %1536 = vmatpush1.msra.mxu0 0.0
    %1537 = vmatprep.subr.mxu0 0.0
    %1538 = vmatpush1.msra.mxu0 0.0
    %1539 = vmatprep.subr.mxu0 0.0
    %1540 = vmatpush1.msra.mxu0 0.0
    %1541 = vmatprep.subr.mxu0 0.0
    %1542 = vmatpush1.msra.mxu0 0.0
    %1543 = vmatprep.subr.mxu0 0.0
    %1544 = vmatpush1.msra.mxu0 0.0
    %1545 = vmatprep.subr.mxu0 0.0
    %1546 = vmatpush1.msra.mxu0 0.0
    %1547 = vmatprep.subr.mxu0 0.0
    %1548 = vmatpush1.msra.mxu0 0.0
    %1549 = vmatprep.subr.mxu0 0.0
    %1550 = vmatpush1.msra.mxu0 0.0
    %1551 = vmatprep.subr.mxu0 0.0
    %1552 = vmatpush1.msra.mxu0 0.0
    %1553 = vmatprep.subr.mxu0 0.0
    %v1554 = vand.u32 %v1499, 4294901760
    %1555 = vmatpush1.msra.mxu0 %v1554
    %1556 = vmatprep.subr.mxu0 0.0
    %v1557 = vand.u32 %v1516, 4294901760
    %1558 = vmatpush1.msra.mxu0 %v1557
    %1559 = vmatprep.subr.mxu0 0.0
    %1560 = vmatpush2.msra.mxu0 0.0
    %1561 = vmatprep.subr.mxu0 0.0
    %1562 = vmatpush2.msra.mxu0 0.0
    %1563 = vmatprep.subr.mxu0 0.0
    %1564 = vmatpush2.msra.mxu0 0.0
    %1565 = vmatprep.subr.mxu0 0.0
    %1566 = vmatpush2.msra.mxu0 0.0
    %1567 = vmatprep.subr.mxu0 0.0
    %1568 = vmatpush2.msra.mxu0 0.0
    %1569 = vmatprep.subr.mxu0 0.0
    %1570 = vmatpush2.msra.mxu0 0.0
    %1571 = vmatprep.subr.mxu0 0.0
    %1572 = vmatpush2.msra.mxu0 0.0
    %1573 = vmatprep.subr.mxu0 0.0
    %1574 = vmatpush2.msra.mxu0 0.0
    %1575 = vmatprep.subr.mxu0 0.0
    %1576 = vmatpush2.msra.mxu0 0.0
    %1577 = vmatprep.subr.mxu0 0.0
    %1578 = vmatpush2.msra.mxu0 0.0
    %1579 = vmatprep.subr.mxu0 0.0
    %1580 = vmatpush2.msra.mxu0 0.0
    %1581 = vmatprep.subr.mxu0 0.0
    %1582 = vmatpush2.msra.mxu0 0.0
    %1583 = vmatprep.subr.mxu0 0.0
    %1584 = vmatpush2.msra.mxu0 0.0
    %1585 = vmatprep.subr.mxu0 0.0
    %1586 = vmatpush2.msra.mxu0 0.0
    %1587 = vmatprep.subr.mxu0 0.0
    %1588 = vmatpush2.msra.mxu0 0.0
    %1589 = vmatprep.subr.mxu0 0.0
    %1590 = vmatpush2.msra.mxu0 0.0
    %1591 = vmatprep.mubr.f32.mxu0 0.0
    %v1592 = vand.u32 %v1523, 4294901760
    %v1593 = vsub.f32 %v1523, %v1592
    %v1594 = vand.u32 %v1593, 4294901760
    %v1595 = vsub.f32 %v1593, %v1594
    %v1596 = vand.u32 %v1595, 4294901760
    %1597 = vmatmul.mubr.f32.gmra.mxu0 %v1596
    %v1598 = vpop.f32.mrf.mxu0
    %v1599 = vadd.f32 %v1520, %v1598
    %v1600 = vpop.f32.mrf.mxu0
    %1601 = vdwg.mxu0
    %1602 = vmatprep.subr.mxu0 0.0
    %1603 = vmatpush1.msra.mxu0 0.0
    %1604 = vmatprep.subr.mxu0 0.0
    %1605 = vmatpush1.msra.mxu0 0.0
    %1606 = vmatprep.subr.mxu0 0.0
    %1607 = vmatpush1.msra.mxu0 0.0
    %1608 = vmatprep.subr.mxu0 0.0
    %1609 = vmatpush1.msra.mxu0 0.0
    %1610 = vmatprep.subr.mxu0 0.0
    %1611 = vmatpush1.msra.mxu0 0.0
    %1612 = vmatprep.subr.mxu0 0.0
    %1613 = vmatpush1.msra.mxu0 0.0
    %1614 = vmatprep.subr.mxu0 0.0
    %1615 = vmatpush1.msra.mxu0 0.0
    %1616 = vmatprep.subr.mxu0 0.0
    %1617 = vmatpush1.msra.mxu0 0.0
    %1618 = vmatprep.subr.mxu0 0.0
    %1619 = vmatpush1.msra.mxu0 0.0
    %1620 = vmatprep.subr.mxu0 0.0
    %1621 = vmatpush1.msra.mxu0 0.0
    %1622 = vmatprep.subr.mxu0 0.0
    %1623 = vmatpush1.msra.mxu0 0.0
    %1624 = vmatprep.subr.mxu0 0.0
    %1625 = vmatpush1.msra.mxu0 0.0
    %1626 = vmatprep.subr.mxu0 0.0
    %1627 = vmatpush1.msra.mxu0 0.0
    %1628 = vmatprep.subr.mxu0 0.0
    %1629 = vmatpush1.msra.mxu0 0.0
    %1630 = vmatprep.subr.mxu0 0.0
    %v1631 = vand.u32 %v1499, 4294901760
    %v1632 = vsub.f32 %v1499, %v1631
    %v1633 = vand.u32 %v1632, 4294901760
    %v1634 = vsub.f32 %v1632, %v1633
    %v1635 = vand.u32 %v1634, 4294901760
    %1636 = vmatpush1.msra.mxu0 %v1635
    %1637 = vmatprep.subr.mxu0 0.0
    %v1638 = vand.u32 %v1516, 4294901760
    %v1639 = vsub.f32 %v1516, %v1638
    %v1640 = vand.u32 %v1639, 4294901760
    %v1641 = vsub.f32 %v1639, %v1640
    %v1642 = vand.u32 %v1641, 4294901760
    %1643 = vmatpush1.msra.mxu0 %v1642
    %1644 = vmatprep.subr.mxu0 0.0
    %1645 = vmatpush2.msra.mxu0 0.0
    %1646 = vmatprep.subr.mxu0 0.0
    %1647 = vmatpush2.msra.mxu0 0.0
    %1648 = vmatprep.subr.mxu0 0.0
    %1649 = vmatpush2.msra.mxu0 0.0
    %1650 = vmatprep.subr.mxu0 0.0
    %1651 = vmatpush2.msra.mxu0 0.0
    %1652 = vmatprep.subr.mxu0 0.0
    %1653 = vmatpush2.msra.mxu0 0.0
    %1654 = vmatprep.subr.mxu0 0.0
    %1655 = vmatpush2.msra.mxu0 0.0
    %1656 = vmatprep.subr.mxu0 0.0
    %1657 = vmatpush2.msra.mxu0 0.0
    %1658 = vmatprep.subr.mxu0 0.0
    %1659 = vmatpush2.msra.mxu0 0.0
    %1660 = vmatprep.subr.mxu0 0.0
    %1661 = vmatpush2.msra.mxu0 0.0
    %1662 = vmatprep.subr.mxu0 0.0
    %1663 = vmatpush2.msra.mxu0 0.0
    %1664 = vmatprep.subr.mxu0 0.0
    %1665 = vmatpush2.msra.mxu0 0.0
    %1666 = vmatprep.subr.mxu0 0.0
    %1667 = vmatpush2.msra.mxu0 0.0
    %1668 = vmatprep.subr.mxu0 0.0
    %1669 = vmatpush2.msra.mxu0 0.0
    %1670 = vmatprep.subr.mxu0 0.0
    %1671 = vmatpush2.msra.mxu0 0.0
    %1672 = vmatprep.subr.mxu0 0.0
    %1673 = vmatpush2.msra.mxu0 0.0
    %1674 = vmatprep.subr.mxu0 0.0
    %1675 = vmatpush2.msra.mxu0 0.0
    %1676 = vmatprep.mubr.f32.mxu0 0.0
    %v1677 = vand.u32 %v1523, 4294901760
    %1678 = vmatmul.mubr.f32.gmra.mxu0 %v1677
    %v1679 = vpop.f32.mrf.mxu0
    %v1680 = vadd.f32 %v1599, %v1679
    %v1681 = vpop.f32.mrf.mxu0
    %1682 = vdwg.mxu0
    %1683 = vmatprep.subr.mxu0 0.0
    %1684 = vmatpush1.msra.mxu0 0.0
    %1685 = vmatprep.subr.mxu0 0.0
    %1686 = vmatpush1.msra.mxu0 0.0
    %1687 = vmatprep.subr.mxu0 0.0
    %1688 = vmatpush1.msra.mxu0 0.0
    %1689 = vmatprep.subr.mxu0 0.0
    %1690 = vmatpush1.msra.mxu0 0.0
    %1691 = vmatprep.subr.mxu0 0.0
    %1692 = vmatpush1.msra.mxu0 0.0
    %1693 = vmatprep.subr.mxu0 0.0
    %1694 = vmatpush1.msra.mxu0 0.0
    %1695 = vmatprep.subr.mxu0 0.0
    %1696 = vmatpush1.msra.mxu0 0.0
    %1697 = vmatprep.subr.mxu0 0.0
    %1698 = vmatpush1.msra.mxu0 0.0
    %1699 = vmatprep.subr.mxu0 0.0
    %1700 = vmatpush1.msra.mxu0 0.0
    %1701 = vmatprep.subr.mxu0 0.0
    %1702 = vmatpush1.msra.mxu0 0.0
    %1703 = vmatprep.subr.mxu0 0.0
    %1704 = vmatpush1.msra.mxu0 0.0
    %1705 = vmatprep.subr.mxu0 0.0
    %1706 = vmatpush1.msra.mxu0 0.0
    %1707 = vmatprep.subr.mxu0 0.0
    %1708 = vmatpush1.msra.mxu0 0.0
    %1709 = vmatprep.subr.mxu0 0.0
    %1710 = vmatpush1.msra.mxu0 0.0
    %1711 = vmatprep.subr.mxu0 0.0
    %v1712 = vand.u32 %v1499, 4294901760
    %v1713 = vsub.f32 %v1499, %v1712
    %1714 = vmatpush1.msra.mxu0 %v1713
    %1715 = vmatprep.subr.mxu0 0.0
    %v1716 = vand.u32 %v1516, 4294901760
    %v1717 = vsub.f32 %v1516, %v1716
    %1718 = vmatpush1.msra.mxu0 %v1717
    %1719 = vmatprep.subr.mxu0 0.0
    %1720 = vmatpush2.msra.mxu0 0.0
    %1721 = vmatprep.subr.mxu0 0.0
    %1722 = vmatpush2.msra.mxu0 0.0
    %1723 = vmatprep.subr.mxu0 0.0
    %1724 = vmatpush2.msra.mxu0 0.0
    %1725 = vmatprep.subr.mxu0 0.0
    %1726 = vmatpush2.msra.mxu0 0.0
    %1727 = vmatprep.subr.mxu0 0.0
    %1728 = vmatpush2.msra.mxu0 0.0
    %1729 = vmatprep.subr.mxu0 0.0
    %1730 = vmatpush2.msra.mxu0 0.0
    %1731 = vmatprep.subr.mxu0 0.0
    %1732 = vmatpush2.msra.mxu0 0.0
    %1733 = vmatprep.subr.mxu0 0.0
    %1734 = vmatpush2.msra.mxu0 0.0
    %1735 = vmatprep.subr.mxu0 0.0
    %1736 = vmatpush2.msra.mxu0 0.0
    %1737 = vmatprep.subr.mxu0 0.0
    %1738 = vmatpush2.msra.mxu0 0.0
    %1739 = vmatprep.subr.mxu0 0.0
    %1740 = vmatpush2.msra.mxu0 0.0
    %1741 = vmatprep.subr.mxu0 0.0
    %1742 = vmatpush2.msra.mxu0 0.0
    %1743 = vmatprep.subr.mxu0 0.0
    %1744 = vmatpush2.msra.mxu0 0.0
    %1745 = vmatprep.subr.mxu0 0.0
    %1746 = vmatpush2.msra.mxu0 0.0
    %1747 = vmatprep.subr.mxu0 0.0
    %1748 = vmatpush2.msra.mxu0 0.0
    %1749 = vmatprep.subr.mxu0 0.0
    %1750 = vmatpush2.msra.mxu0 0.0
    %1751 = vmatprep.mubr.f32.mxu0 0.0
    %v1752 = vand.u32 %v1523, 4294901760
    %v1753 = vsub.f32 %v1523, %v1752
    %1754 = vmatmul.mubr.f32.gmra.mxu0 %v1753
    %v1755 = vpop.f32.mrf.mxu0
    %v1756 = vadd.f32 %v1680, %v1755
    %v1757 = vpop.f32.mrf.mxu0
    %1758 = vdwg.mxu0
    %1759 = vmatprep.subr.mxu0 0.0
    %1760 = vmatpush1.msra.mxu0 0.0
    %1761 = vmatprep.subr.mxu0 0.0
    %1762 = vmatpush1.msra.mxu0 0.0
    %1763 = vmatprep.subr.mxu0 0.0
    %1764 = vmatpush1.msra.mxu0 0.0
    %1765 = vmatprep.subr.mxu0 0.0
    %1766 = vmatpush1.msra.mxu0 0.0
    %1767 = vmatprep.subr.mxu0 0.0
    %1768 = vmatpush1.msra.mxu0 0.0
    %1769 = vmatprep.subr.mxu0 0.0
    %1770 = vmatpush1.msra.mxu0 0.0
    %1771 = vmatprep.subr.mxu0 0.0
    %1772 = vmatpush1.msra.mxu0 0.0
    %1773 = vmatprep.subr.mxu0 0.0
    %1774 = vmatpush1.msra.mxu0 0.0
    %1775 = vmatprep.subr.mxu0 0.0
    %1776 = vmatpush1.msra.mxu0 0.0
    %1777 = vmatprep.subr.mxu0 0.0
    %1778 = vmatpush1.msra.mxu0 0.0
    %1779 = vmatprep.subr.mxu0 0.0
    %1780 = vmatpush1.msra.mxu0 0.0
    %1781 = vmatprep.subr.mxu0 0.0
    %1782 = vmatpush1.msra.mxu0 0.0
    %1783 = vmatprep.subr.mxu0 0.0
    %1784 = vmatpush1.msra.mxu0 0.0
    %1785 = vmatprep.subr.mxu0 0.0
    %1786 = vmatpush1.msra.mxu0 0.0
    %1787 = vmatprep.subr.mxu0 0.0
    %v1788 = vand.u32 %v1499, 4294901760
    %1789 = vmatpush1.msra.mxu0 %v1788
    %1790 = vmatprep.subr.mxu0 0.0
    %v1791 = vand.u32 %v1516, 4294901760
    %1792 = vmatpush1.msra.mxu0 %v1791
    %1793 = vmatprep.subr.mxu0 0.0
    %1794 = vmatpush2.msra.mxu0 0.0
    %1795 = vmatprep.subr.mxu0 0.0
    %1796 = vmatpush2.msra.mxu0 0.0
    %1797 = vmatprep.subr.mxu0 0.0
    %1798 = vmatpush2.msra.mxu0 0.0
    %1799 = vmatprep.subr.mxu0 0.0
    %1800 = vmatpush2.msra.mxu0 0.0
    %1801 = vmatprep.subr.mxu0 0.0
    %1802 = vmatpush2.msra.mxu0 0.0
    %1803 = vmatprep.subr.mxu0 0.0
    %1804 = vmatpush2.msra.mxu0 0.0
    %1805 = vmatprep.subr.mxu0 0.0
    %1806 = vmatpush2.msra.mxu0 0.0
    %1807 = vmatprep.subr.mxu0 0.0
    %1808 = vmatpush2.msra.mxu0 0.0
    %1809 = vmatprep.subr.mxu0 0.0
    %1810 = vmatpush2.msra.mxu0 0.0
    %1811 = vmatprep.subr.mxu0 0.0
    %1812 = vmatpush2.msra.mxu0 0.0
    %1813 = vmatprep.subr.mxu0 0.0
    %1814 = vmatpush2.msra.mxu0 0.0
    %1815 = vmatprep.subr.mxu0 0.0
    %1816 = vmatpush2.msra.mxu0 0.0
    %1817 = vmatprep.subr.mxu0 0.0
    %1818 = vmatpush2.msra.mxu0 0.0
    %1819 = vmatprep.subr.mxu0 0.0
    %1820 = vmatpush2.msra.mxu0 0.0
    %1821 = vmatprep.subr.mxu0 0.0
    %1822 = vmatpush2.msra.mxu0 0.0
    %1823 = vmatprep.subr.mxu0 0.0
    %1824 = vmatpush2.msra.mxu0 0.0
    %1825 = vmatprep.mubr.f32.mxu0 0.0
    %v1826 = vand.u32 %v1523, 4294901760
    %v1827 = vsub.f32 %v1523, %v1826
    %v1828 = vand.u32 %v1827, 4294901760
    %1829 = vmatmul.mubr.f32.gmra.mxu0 %v1828
    %v1830 = vpop.f32.mrf.mxu0
    %v1831 = vadd.f32 %v1756, %v1830
    %v1832 = vpop.f32.mrf.mxu0
    %1833 = vdwg.mxu0
    %1834 = vmatprep.subr.mxu0 0.0
    %1835 = vmatpush1.msra.mxu0 0.0
    %1836 = vmatprep.subr.mxu0 0.0
    %1837 = vmatpush1.msra.mxu0 0.0
    %1838 = vmatprep.subr.mxu0 0.0
    %1839 = vmatpush1.msra.mxu0 0.0
    %1840 = vmatprep.subr.mxu0 0.0
    %1841 = vmatpush1.msra.mxu0 0.0
    %1842 = vmatprep.subr.mxu0 0.0
    %1843 = vmatpush1.msra.mxu0 0.0
    %1844 = vmatprep.subr.mxu0 0.0
    %1845 = vmatpush1.msra.mxu0 0.0
    %1846 = vmatprep.subr.mxu0 0.0
    %1847 = vmatpush1.msra.mxu0 0.0
    %1848 = vmatprep.subr.mxu0 0.0
    %1849 = vmatpush1.msra.mxu0 0.0
    %1850 = vmatprep.subr.mxu0 0.0
    %1851 = vmatpush1.msra.mxu0 0.0
    %1852 = vmatprep.subr.mxu0 0.0
    %1853 = vmatpush1.msra.mxu0 0.0
    %1854 = vmatprep.subr.mxu0 0.0
    %1855 = vmatpush1.msra.mxu0 0.0
    %1856 = vmatprep.subr.mxu0 0.0
    %1857 = vmatpush1.msra.mxu0 0.0
    %1858 = vmatprep.subr.mxu0 0.0
    %1859 = vmatpush1.msra.mxu0 0.0
    %1860 = vmatprep.subr.mxu0 0.0
    %1861 = vmatpush1.msra.mxu0 0.0
    %1862 = vmatprep.subr.mxu0 0.0
    %v1863 = vand.u32 %v1499, 4294901760
    %v1864 = vsub.f32 %v1499, %v1863
    %v1865 = vand.u32 %v1864, 4294901760
    %1866 = vmatpush1.msra.mxu0 %v1865
    %1867 = vmatprep.subr.mxu0 0.0
    %v1868 = vand.u32 %v1516, 4294901760
    %v1869 = vsub.f32 %v1516, %v1868
    %v1870 = vand.u32 %v1869, 4294901760
    %1871 = vmatpush1.msra.mxu0 %v1870
    %1872 = vmatprep.subr.mxu0 0.0
    %1873 = vmatpush2.msra.mxu0 0.0
    %1874 = vmatprep.subr.mxu0 0.0
    %1875 = vmatpush2.msra.mxu0 0.0
    %1876 = vmatprep.subr.mxu0 0.0
    %1877 = vmatpush2.msra.mxu0 0.0
    %1878 = vmatprep.subr.mxu0 0.0
    %1879 = vmatpush2.msra.mxu0 0.0
    %1880 = vmatprep.subr.mxu0 0.0
    %1881 = vmatpush2.msra.mxu0 0.0
    %1882 = vmatprep.subr.mxu0 0.0
    %1883 = vmatpush2.msra.mxu0 0.0
    %1884 = vmatprep.subr.mxu0 0.0
    %1885 = vmatpush2.msra.mxu0 0.0
    %1886 = vmatprep.subr.mxu0 0.0
    %1887 = vmatpush2.msra.mxu0 0.0
    %1888 = vmatprep.subr.mxu0 0.0
    %1889 = vmatpush2.msra.mxu0 0.0
    %1890 = vmatprep.subr.mxu0 0.0
    %1891 = vmatpush2.msra.mxu0 0.0
    %1892 = vmatprep.subr.mxu0 0.0
    %1893 = vmatpush2.msra.mxu0 0.0
    %1894 = vmatprep.subr.mxu0 0.0
    %1895 = vmatpush2.msra.mxu0 0.0
    %1896 = vmatprep.subr.mxu0 0.0
    %1897 = vmatpush2.msra.mxu0 0.0
    %1898 = vmatprep.subr.mxu0 0.0
    %1899 = vmatpush2.msra.mxu0 0.0
    %1900 = vmatprep.subr.mxu0 0.0
    %1901 = vmatpush2.msra.mxu0 0.0
    %1902 = vmatprep.subr.mxu0 0.0
    %1903 = vmatpush2.msra.mxu0 0.0
    %1904 = vmatprep.mubr.f32.mxu0 0.0
    %v1905 = vand.u32 %v1523, 4294901760
    %1906 = vmatmul.mubr.f32.gmra.mxu0 %v1905
    %v1907 = vpop.f32.mrf.mxu0
    %v1908 = vadd.f32 %v1831, %v1907
    %v1909 = vpop.f32.mrf.mxu0
    %1910 = vdwg.mxu0
    %1911 = vmatprep.subr.mxu0 0.0
    %1912 = vmatpush1.msra.mxu0 0.0
    %1913 = vmatprep.subr.mxu0 0.0
    %1914 = vmatpush1.msra.mxu0 0.0
    %1915 = vmatprep.subr.mxu0 0.0
    %1916 = vmatpush1.msra.mxu0 0.0
    %1917 = vmatprep.subr.mxu0 0.0
    %1918 = vmatpush1.msra.mxu0 0.0
    %1919 = vmatprep.subr.mxu0 0.0
    %1920 = vmatpush1.msra.mxu0 0.0
    %1921 = vmatprep.subr.mxu0 0.0
    %1922 = vmatpush1.msra.mxu0 0.0
    %1923 = vmatprep.subr.mxu0 0.0
    %1924 = vmatpush1.msra.mxu0 0.0
    %1925 = vmatprep.subr.mxu0 0.0
    %1926 = vmatpush1.msra.mxu0 0.0
    %1927 = vmatprep.subr.mxu0 0.0
    %1928 = vmatpush1.msra.mxu0 0.0
    %1929 = vmatprep.subr.mxu0 0.0
    %1930 = vmatpush1.msra.mxu0 0.0
    %1931 = vmatprep.subr.mxu0 0.0
    %1932 = vmatpush1.msra.mxu0 0.0
    %1933 = vmatprep.subr.mxu0 0.0
    %1934 = vmatpush1.msra.mxu0 0.0
    %1935 = vmatprep.subr.mxu0 0.0
    %1936 = vmatpush1.msra.mxu0 0.0
    %1937 = vmatprep.subr.mxu0 0.0
    %1938 = vmatpush1.msra.mxu0 0.0
    %1939 = vmatprep.subr.mxu0 0.0
    %v1940 = vand.u32 %v1499, 4294901760
    %1941 = vmatpush1.msra.mxu0 %v1940
    %1942 = vmatprep.subr.mxu0 0.0
    %v1943 = vand.u32 %v1516, 4294901760
    %1944 = vmatpush1.msra.mxu0 %v1943
    %1945 = vmatprep.subr.mxu0 0.0
    %1946 = vmatpush2.msra.mxu0 0.0
    %1947 = vmatprep.subr.mxu0 0.0
    %1948 = vmatpush2.msra.mxu0 0.0
    %1949 = vmatprep.subr.mxu0 0.0
    %1950 = vmatpush2.msra.mxu0 0.0
    %1951 = vmatprep.subr.mxu0 0.0
    %1952 = vmatpush2.msra.mxu0 0.0
    %1953 = vmatprep.subr.mxu0 0.0
    %1954 = vmatpush2.msra.mxu0 0.0
    %1955 = vmatprep.subr.mxu0 0.0
    %1956 = vmatpush2.msra.mxu0 0.0
    %1957 = vmatprep.subr.mxu0 0.0
    %1958 = vmatpush2.msra.mxu0 0.0
    %1959 = vmatprep.subr.mxu0 0.0
    %1960 = vmatpush2.msra.mxu0 0.0
    %1961 = vmatprep.subr.mxu0 0.0
    %1962 = vmatpush2.msra.mxu0 0.0
    %1963 = vmatprep.subr.mxu0 0.0
    %1964 = vmatpush2.msra.mxu0 0.0
    %1965 = vmatprep.subr.mxu0 0.0
    %1966 = vmatpush2.msra.mxu0 0.0
    %1967 = vmatprep.subr.mxu0 0.0
    %1968 = vmatpush2.msra.mxu0 0.0
    %1969 = vmatprep.subr.mxu0 0.0
    %1970 = vmatpush2.msra.mxu0 0.0
    %1971 = vmatprep.subr.mxu0 0.0
    %1972 = vmatpush2.msra.mxu0 0.0
    %1973 = vmatprep.subr.mxu0 0.0
    %1974 = vmatpush2.msra.mxu0 0.0
    %1975 = vmatprep.subr.mxu0 0.0
    %1976 = vmatpush2.msra.mxu0 0.0
    %1977 = vmatprep.mubr.f32.mxu0 0.0
    %v1978 = vand.u32 %v1523, 4294901760
    %1979 = vmatmul.mubr.f32.gmra.mxu0 %v1978
    %v1980 = vpop.f32.mrf.mxu0
    %v1981 = vadd.f32 %v1908, %v1980
    %v1982 = vpop.f32.mrf.mxu0
    %1983 = vdwg.mxu0
    %v1984 = vmax.f32 %v1981, 0.0
    %1985 = vrot.lane.b32.xlu0 %v1984, 32
    %v1986 = vpop.permute.xlu0 %1985
    %v1987 = vsel %vm79, %v1986, %v1984
    %1988 = vrot.lane.b32.xlu0 %v1987, 32
    %v1989 = vpop.permute.xlu0 %1988
    %v1990 = vsel %vm79, %v1989, %v1984
    %1992 = vrot.lane.b32.xlu0 %v1990, 98
    %v1993 = vpop.permute.xlu0 %1992
    %v1995 = vsel %vm1511, %v1993, 0.0
    %1997 = vset.pattern.permute.xlu0 0
    %1998 = vperm.xlu0 %1997, %v1503
    %v1999 = vpop.permute.xlu0 %1998
    %v2002 = vsel %vm98, %v1502, 0
    %2004 = vmatprep.subr.mxu0 0.0
    %2005 = vmatpush1.msra.mxu0 0.0
    %2006 = vmatprep.subr.mxu0 0.0
    %2007 = vmatpush1.msra.mxu0 0.0
    %2008 = vmatprep.subr.mxu0 0.0
    %2009 = vmatpush1.msra.mxu0 0.0
    %2010 = vmatprep.subr.mxu0 0.0
    %2011 = vmatpush1.msra.mxu0 0.0
    %2012 = vmatprep.subr.mxu0 0.0
    %2013 = vmatpush1.msra.mxu0 0.0
    %2014 = vmatprep.subr.mxu0 0.0
    %2015 = vmatpush1.msra.mxu0 0.0
    %2016 = vmatprep.subr.mxu0 0.0
    %2017 = vmatpush1.msra.mxu0 0.0
    %2018 = vmatprep.subr.mxu0 0.0
    %2019 = vmatpush1.msra.mxu0 0.0
    %2020 = vmatprep.subr.mxu0 0.0
    %2021 = vmatpush1.msra.mxu0 0.0
    %2022 = vmatprep.subr.mxu0 0.0
    %2023 = vmatpush1.msra.mxu0 0.0
    %2024 = vmatprep.subr.mxu0 0.0
    %2025 = vmatpush1.msra.mxu0 0.0
    %2026 = vmatprep.subr.mxu0 0.0
    %2027 = vmatpush1.msra.mxu0 0.0
    %2028 = vmatprep.subr.mxu0 0.0
    %2029 = vmatpush1.msra.mxu0 0.0
    %2030 = vmatprep.subr.mxu0 0.0
    %2031 = vmatpush1.msra.mxu0 0.0
    %2032 = vmatprep.subr.mxu0 0.0
    %v2033 = vand.u32 %v1984, 4294901760
    %2034 = vmatpush1.msra.mxu0 %v2033
    %2035 = vmatprep.subr.mxu0 0.0
    %v2036 = vand.u32 %v1995, 4294901760
    %2037 = vmatpush1.msra.mxu0 %v2036
    %2038 = vmatprep.subr.mxu0 0.0
    %2039 = vmatpush2.msra.mxu0 0.0
    %2040 = vmatprep.subr.mxu0 0.0
    %2041 = vmatpush2.msra.mxu0 0.0
    %2042 = vmatprep.subr.mxu0 0.0
    %2043 = vmatpush2.msra.mxu0 0.0
    %2044 = vmatprep.subr.mxu0 0.0
    %2045 = vmatpush2.msra.mxu0 0.0
    %2046 = vmatprep.subr.mxu0 0.0
    %2047 = vmatpush2.msra.mxu0 0.0
    %2048 = vmatprep.subr.mxu0 0.0
    %2049 = vmatpush2.msra.mxu0 0.0
    %2050 = vmatprep.subr.mxu0 0.0
    %2051 = vmatpush2.msra.mxu0 0.0
    %2052 = vmatprep.subr.mxu0 0.0
    %2053 = vmatpush2.msra.mxu0 0.0
    %2054 = vmatprep.subr.mxu0 0.0
    %2055 = vmatpush2.msra.mxu0 0.0
    %2056 = vmatprep.subr.mxu0 0.0
    %2057 = vmatpush2.msra.mxu0 0.0
    %2058 = vmatprep.subr.mxu0 0.0
    %2059 = vmatpush2.msra.mxu0 0.0
    %2060 = vmatprep.subr.mxu0 0.0
    %2061 = vmatpush2.msra.mxu0 0.0
    %2062 = vmatprep.subr.mxu0 0.0
    %2063 = vmatpush2.msra.mxu0 0.0
    %2064 = vmatprep.subr.mxu0 0.0
    %2065 = vmatpush2.msra.mxu0 0.0
    %2066 = vmatprep.subr.mxu0 0.0
    %2067 = vmatpush2.msra.mxu0 0.0
    %2068 = vmatprep.subr.mxu0 0.0
    %2069 = vmatpush2.msra.mxu0 0.0
    %2070 = vmatprep.mubr.f32.mxu0 0.0
    %v2071 = vand.u32 %v2002, 4294901760
    %v2072 = vsub.f32 %v2002, %v2071
    %v2073 = vand.u32 %v2072, 4294901760
    %v2074 = vsub.f32 %v2072, %v2073
    %v2075 = vand.u32 %v2074, 4294901760
    %2076 = vmatmul.mubr.f32.gmra.mxu0 %v2075
    %v2077 = vpop.f32.mrf.mxu0
    %v2078 = vadd.f32 %v1999, %v2077
    %v2079 = vpop.f32.mrf.mxu0
    %2080 = vdwg.mxu0
    %2081 = vmatprep.subr.mxu0 0.0
    %2082 = vmatpush1.msra.mxu0 0.0
    %2083 = vmatprep.subr.mxu0 0.0
    %2084 = vmatpush1.msra.mxu0 0.0
    %2085 = vmatprep.subr.mxu0 0.0
    %2086 = vmatpush1.msra.mxu0 0.0
    %2087 = vmatprep.subr.mxu0 0.0
    %2088 = vmatpush1.msra.mxu0 0.0
    %2089 = vmatprep.subr.mxu0 0.0
    %2090 = vmatpush1.msra.mxu0 0.0
    %2091 = vmatprep.subr.mxu0 0.0
    %2092 = vmatpush1.msra.mxu0 0.0
    %2093 = vmatprep.subr.mxu0 0.0
    %2094 = vmatpush1.msra.mxu0 0.0
    %2095 = vmatprep.subr.mxu0 0.0
    %2096 = vmatpush1.msra.mxu0 0.0
    %2097 = vmatprep.subr.mxu0 0.0
    %2098 = vmatpush1.msra.mxu0 0.0
    %2099 = vmatprep.subr.mxu0 0.0
    %2100 = vmatpush1.msra.mxu0 0.0
    %2101 = vmatprep.subr.mxu0 0.0
    %2102 = vmatpush1.msra.mxu0 0.0
    %2103 = vmatprep.subr.mxu0 0.0
    %2104 = vmatpush1.msra.mxu0 0.0
    %2105 = vmatprep.subr.mxu0 0.0
    %2106 = vmatpush1.msra.mxu0 0.0
    %2107 = vmatprep.subr.mxu0 0.0
    %2108 = vmatpush1.msra.mxu0 0.0
    %2109 = vmatprep.subr.mxu0 0.0
    %v2110 = vand.u32 %v1984, 4294901760
    %v2111 = vsub.f32 %v1984, %v2110
    %v2112 = vand.u32 %v2111, 4294901760
    %v2113 = vsub.f32 %v2111, %v2112
    %v2114 = vand.u32 %v2113, 4294901760
    %2115 = vmatpush1.msra.mxu0 %v2114
    %2116 = vmatprep.subr.mxu0 0.0
    %v2117 = vand.u32 %v1995, 4294901760
    %v2118 = vsub.f32 %v1995, %v2117
    %v2119 = vand.u32 %v2118, 4294901760
    %v2120 = vsub.f32 %v2118, %v2119
    %v2121 = vand.u32 %v2120, 4294901760
    %2122 = vmatpush1.msra.mxu0 %v2121
    %2123 = vmatprep.subr.mxu0 0.0
    %2124 = vmatpush2.msra.mxu0 0.0
    %2125 = vmatprep.subr.mxu0 0.0
    %2126 = vmatpush2.msra.mxu0 0.0
    %2127 = vmatprep.subr.mxu0 0.0
    %2128 = vmatpush2.msra.mxu0 0.0
    %2129 = vmatprep.subr.mxu0 0.0
    %2130 = vmatpush2.msra.mxu0 0.0
    %2131 = vmatprep.subr.mxu0 0.0
    %2132 = vmatpush2.msra.mxu0 0.0
    %2133 = vmatprep.subr.mxu0 0.0
    %2134 = vmatpush2.msra.mxu0 0.0
    %2135 = vmatprep.subr.mxu0 0.0
    %2136 = vmatpush2.msra.mxu0 0.0
    %2137 = vmatprep.subr.mxu0 0.0
    %2138 = vmatpush2.msra.mxu0 0.0
    %2139 = vmatprep.subr.mxu0 0.0
    %2140 = vmatpush2.msra.mxu0 0.0
    %2141 = vmatprep.subr.mxu0 0.0
    %2142 = vmatpush2.msra.mxu0 0.0
    %2143 = vmatprep.subr.mxu0 0.0
    %2144 = vmatpush2.msra.mxu0 0.0
    %2145 = vmatprep.subr.mxu0 0.0
    %2146 = vmatpush2.msra.mxu0 0.0
    %2147 = vmatprep.subr.mxu0 0.0
    %2148 = vmatpush2.msra.mxu0 0.0
    %2149 = vmatprep.subr.mxu0 0.0
    %2150 = vmatpush2.msra.mxu0 0.0
    %2151 = vmatprep.subr.mxu0 0.0
    %2152 = vmatpush2.msra.mxu0 0.0
    %2153 = vmatprep.subr.mxu0 0.0
    %2154 = vmatpush2.msra.mxu0 0.0
    %2155 = vmatprep.mubr.f32.mxu0 0.0
    %v2156 = vand.u32 %v2002, 4294901760
    %2157 = vmatmul.mubr.f32.gmra.mxu0 %v2156
    %v2158 = vpop.f32.mrf.mxu0
    %v2159 = vadd.f32 %v2078, %v2158
    %v2160 = vpop.f32.mrf.mxu0
    %2161 = vdwg.mxu0
    %2162 = vmatprep.subr.mxu0 0.0
    %2163 = vmatpush1.msra.mxu0 0.0
    %2164 = vmatprep.subr.mxu0 0.0
    %2165 = vmatpush1.msra.mxu0 0.0
    %2166 = vmatprep.subr.mxu0 0.0
    %2167 = vmatpush1.msra.mxu0 0.0
    %2168 = vmatprep.subr.mxu0 0.0
    %2169 = vmatpush1.msra.mxu0 0.0
    %2170 = vmatprep.subr.mxu0 0.0
    %2171 = vmatpush1.msra.mxu0 0.0
    %2172 = vmatprep.subr.mxu0 0.0
    %2173 = vmatpush1.msra.mxu0 0.0
    %2174 = vmatprep.subr.mxu0 0.0
    %2175 = vmatpush1.msra.mxu0 0.0
    %2176 = vmatprep.subr.mxu0 0.0
    %2177 = vmatpush1.msra.mxu0 0.0
    %2178 = vmatprep.subr.mxu0 0.0
    %2179 = vmatpush1.msra.mxu0 0.0
    %2180 = vmatprep.subr.mxu0 0.0
    %2181 = vmatpush1.msra.mxu0 0.0
    %2182 = vmatprep.subr.mxu0 0.0
    %2183 = vmatpush1.msra.mxu0 0.0
    %2184 = vmatprep.subr.mxu0 0.0
    %2185 = vmatpush1.msra.mxu0 0.0
    %2186 = vmatprep.subr.mxu0 0.0
    %2187 = vmatpush1.msra.mxu0 0.0
    %2188 = vmatprep.subr.mxu0 0.0
    %2189 = vmatpush1.msra.mxu0 0.0
    %2190 = vmatprep.subr.mxu0 0.0
    %v2191 = vand.u32 %v1984, 4294901760
    %v2192 = vsub.f32 %v1984, %v2191
    %2193 = vmatpush1.msra.mxu0 %v2192
    %2194 = vmatprep.subr.mxu0 0.0
    %v2195 = vand.u32 %v1995, 4294901760
    %v2196 = vsub.f32 %v1995, %v2195
    %2197 = vmatpush1.msra.mxu0 %v2196
    %2198 = vmatprep.subr.mxu0 0.0
    %2199 = vmatpush2.msra.mxu0 0.0
    %2200 = vmatprep.subr.mxu0 0.0
    %2201 = vmatpush2.msra.mxu0 0.0
    %2202 = vmatprep.subr.mxu0 0.0
    %2203 = vmatpush2.msra.mxu0 0.0
    %2204 = vmatprep.subr.mxu0 0.0
    %2205 = vmatpush2.msra.mxu0 0.0
    %2206 = vmatprep.subr.mxu0 0.0
    %2207 = vmatpush2.msra.mxu0 0.0
    %2208 = vmatprep.subr.mxu0 0.0
    %2209 = vmatpush2.msra.mxu0 0.0
    %2210 = vmatprep.subr.mxu0 0.0
    %2211 = vmatpush2.msra.mxu0 0.0
    %2212 = vmatprep.subr.mxu0 0.0
    %2213 = vmatpush2.msra.mxu0 0.0
    %2214 = vmatprep.subr.mxu0 0.0
    %2215 = vmatpush2.msra.mxu0 0.0
    %2216 = vmatprep.subr.mxu0 0.0
    %2217 = vmatpush2.msra.mxu0 0.0
    %2218 = vmatprep.subr.mxu0 0.0
    %2219 = vmatpush2.msra.mxu0 0.0
    %2220 = vmatprep.subr.mxu0 0.0
    %2221 = vmatpush2.msra.mxu0 0.0
    %2222 = vmatprep.subr.mxu0 0.0
    %2223 = vmatpush2.msra.mxu0 0.0
    %2224 = vmatprep.subr.mxu0 0.0
    %2225 = vmatpush2.msra.mxu0 0.0
    %2226 = vmatprep.subr.mxu0 0.0
    %2227 = vmatpush2.msra.mxu0 0.0
    %2228 = vmatprep.subr.mxu0 0.0
    %2229 = vmatpush2.msra.mxu0 0.0
    %2230 = vmatprep.mubr.f32.mxu0 0.0
    %v2231 = vand.u32 %v2002, 4294901760
    %v2232 = vsub.f32 %v2002, %v2231
    %2233 = vmatmul.mubr.f32.gmra.mxu0 %v2232
    %v2234 = vpop.f32.mrf.mxu0
    %v2235 = vadd.f32 %v2159, %v2234
    %v2236 = vpop.f32.mrf.mxu0
    %2237 = vdwg.mxu0
    %2238 = vmatprep.subr.mxu0 0.0
    %2239 = vmatpush1.msra.mxu0 0.0
    %2240 = vmatprep.subr.mxu0 0.0
    %2241 = vmatpush1.msra.mxu0 0.0
    %2242 = vmatprep.subr.mxu0 0.0
    %2243 = vmatpush1.msra.mxu0 0.0
    %2244 = vmatprep.subr.mxu0 0.0
    %2245 = vmatpush1.msra.mxu0 0.0
    %2246 = vmatprep.subr.mxu0 0.0
    %2247 = vmatpush1.msra.mxu0 0.0
    %2248 = vmatprep.subr.mxu0 0.0
    %2249 = vmatpush1.msra.mxu0 0.0
    %2250 = vmatprep.subr.mxu0 0.0
    %2251 = vmatpush1.msra.mxu0 0.0
    %2252 = vmatprep.subr.mxu0 0.0
    %2253 = vmatpush1.msra.mxu0 0.0
    %2254 = vmatprep.subr.mxu0 0.0
    %2255 = vmatpush1.msra.mxu0 0.0
    %2256 = vmatprep.subr.mxu0 0.0
    %2257 = vmatpush1.msra.mxu0 0.0
    %2258 = vmatprep.subr.mxu0 0.0
    %2259 = vmatpush1.msra.mxu0 0.0
    %2260 = vmatprep.subr.mxu0 0.0
    %2261 = vmatpush1.msra.mxu0 0.0
    %2262 = vmatprep.subr.mxu0 0.0
    %2263 = vmatpush1.msra.mxu0 0.0
    %2264 = vmatprep.subr.mxu0 0.0
    %2265 = vmatpush1.msra.mxu0 0.0
    %2266 = vmatprep.subr.mxu0 0.0
    %v2267 = vand.u32 %v1984, 4294901760
    %2268 = vmatpush1.msra.mxu0 %v2267
    %2269 = vmatprep.subr.mxu0 0.0
    %v2270 = vand.u32 %v1995, 4294901760
    %2271 = vmatpush1.msra.mxu0 %v2270
    %2272 = vmatprep.subr.mxu0 0.0
    %2273 = vmatpush2.msra.mxu0 0.0
    %2274 = vmatprep.subr.mxu0 0.0
    %2275 = vmatpush2.msra.mxu0 0.0
    %2276 = vmatprep.subr.mxu0 0.0
    %2277 = vmatpush2.msra.mxu0 0.0
    %2278 = vmatprep.subr.mxu0 0.0
    %2279 = vmatpush2.msra.mxu0 0.0
    %2280 = vmatprep.subr.mxu0 0.0
    %2281 = vmatpush2.msra.mxu0 0.0
    %2282 = vmatprep.subr.mxu0 0.0
    %2283 = vmatpush2.msra.mxu0 0.0
    %2284 = vmatprep.subr.mxu0 0.0
    %2285 = vmatpush2.msra.mxu0 0.0
    %2286 = vmatprep.subr.mxu0 0.0
    %2287 = vmatpush2.msra.mxu0 0.0
    %2288 = vmatprep.subr.mxu0 0.0
    %2289 = vmatpush2.msra.mxu0 0.0
    %2290 = vmatprep.subr.mxu0 0.0
    %2291 = vmatpush2.msra.mxu0 0.0
    %2292 = vmatprep.subr.mxu0 0.0
    %2293 = vmatpush2.msra.mxu0 0.0
    %2294 = vmatprep.subr.mxu0 0.0
    %2295 = vmatpush2.msra.mxu0 0.0
    %2296 = vmatprep.subr.mxu0 0.0
    %2297 = vmatpush2.msra.mxu0 0.0
    %2298 = vmatprep.subr.mxu0 0.0
    %2299 = vmatpush2.msra.mxu0 0.0
    %2300 = vmatprep.subr.mxu0 0.0
    %2301 = vmatpush2.msra.mxu0 0.0
    %2302 = vmatprep.subr.mxu0 0.0
    %2303 = vmatpush2.msra.mxu0 0.0
    %2304 = vmatprep.mubr.f32.mxu0 0.0
    %v2305 = vand.u32 %v2002, 4294901760
    %v2306 = vsub.f32 %v2002, %v2305
    %v2307 = vand.u32 %v2306, 4294901760
    %2308 = vmatmul.mubr.f32.gmra.mxu0 %v2307
    %v2309 = vpop.f32.mrf.mxu0
    %v2310 = vadd.f32 %v2235, %v2309
    %v2311 = vpop.f32.mrf.mxu0
    %2312 = vdwg.mxu0
    %2313 = vmatprep.subr.mxu0 0.0
    %2314 = vmatpush1.msra.mxu0 0.0
    %2315 = vmatprep.subr.mxu0 0.0
    %2316 = vmatpush1.msra.mxu0 0.0
    %2317 = vmatprep.subr.mxu0 0.0
    %2318 = vmatpush1.msra.mxu0 0.0
    %2319 = vmatprep.subr.mxu0 0.0
    %2320 = vmatpush1.msra.mxu0 0.0
    %2321 = vmatprep.subr.mxu0 0.0
    %2322 = vmatpush1.msra.mxu0 0.0
    %2323 = vmatprep.subr.mxu0 0.0
    %2324 = vmatpush1.msra.mxu0 0.0
    %2325 = vmatprep.subr.mxu0 0.0
    %2326 = vmatpush1.msra.mxu0 0.0
    %2327 = vmatprep.subr.mxu0 0.0
    %2328 = vmatpush1.msra.mxu0 0.0
    %2329 = vmatprep.subr.mxu0 0.0
    %2330 = vmatpush1.msra.mxu0 0.0
    %2331 = vmatprep.subr.mxu0 0.0
    %2332 = vmatpush1.msra.mxu0 0.0
    %2333 = vmatprep.subr.mxu0 0.0
    %2334 = vmatpush1.msra.mxu0 0.0
    %2335 = vmatprep.subr.mxu0 0.0
    %2336 = vmatpush1.msra.mxu0 0.0
    %2337 = vmatprep.subr.mxu0 0.0
    %2338 = vmatpush1.msra.mxu0 0.0
    %2339 = vmatprep.subr.mxu0 0.0
    %2340 = vmatpush1.msra.mxu0 0.0
    %2341 = vmatprep.subr.mxu0 0.0
    %v2342 = vand.u32 %v1984, 4294901760
    %v2343 = vsub.f32 %v1984, %v2342
    %v2344 = vand.u32 %v2343, 4294901760
    %2345 = vmatpush1.msra.mxu0 %v2344
    %2346 = vmatprep.subr.mxu0 0.0
    %v2347 = vand.u32 %v1995, 4294901760
    %v2348 = vsub.f32 %v1995, %v2347
    %v2349 = vand.u32 %v2348, 4294901760
    %2350 = vmatpush1.msra.mxu0 %v2349
    %2351 = vmatprep.subr.mxu0 0.0
    %2352 = vmatpush2.msra.mxu0 0.0
    %2353 = vmatprep.subr.mxu0 0.0
    %2354 = vmatpush2.msra.mxu0 0.0
    %2355 = vmatprep.subr.mxu0 0.0
    %2356 = vmatpush2.msra.mxu0 0.0
    %2357 = vmatprep.subr.mxu0 0.0
    %2358 = vmatpush2.msra.mxu0 0.0
    %2359 = vmatprep.subr.mxu0 0.0
    %2360 = vmatpush2.msra.mxu0 0.0
    %2361 = vmatprep.subr.mxu0 0.0
    %2362 = vmatpush2.msra.mxu0 0.0
    %2363 = vmatprep.subr.mxu0 0.0
    %2364 = vmatpush2.msra.mxu0 0.0
    %2365 = vmatprep.subr.mxu0 0.0
    %2366 = vmatpush2.msra.mxu0 0.0
    %2367 = vmatprep.subr.mxu0 0.0
    %2368 = vmatpush2.msra.mxu0 0.0
    %2369 = vmatprep.subr.mxu0 0.0
    %2370 = vmatpush2.msra.mxu0 0.0
    %2371 = vmatprep.subr.mxu0 0.0
    %2372 = vmatpush2.msra.mxu0 0.0
    %2373 = vmatprep.subr.mxu0 0.0
    %2374 = vmatpush2.msra.mxu0 0.0
    %2375 = vmatprep.subr.mxu0 0.0
    %2376 = vmatpush2.msra.mxu0 0.0
    %2377 = vmatprep.subr.mxu0 0.0
    %2378 = vmatpush2.msra.mxu0 0.0
    %2379 = vmatprep.subr.mxu0 0.0
    %2380 = vmatpush2.msra.mxu0 0.0
    %2381 = vmatprep.subr.mxu0 0.0
    %2382 = vmatpush2.msra.mxu0 0.0
    %2383 = vmatprep.mubr.f32.mxu0 0.0
    %v2384 = vand.u32 %v2002, 4294901760
    %2385 = vmatmul.mubr.f32.gmra.mxu0 %v2384
    %v2386 = vpop.f32.mrf.mxu0
    %v2387 = vadd.f32 %v2310, %v2386
    %v2388 = vpop.f32.mrf.mxu0
    %2389 = vdwg.mxu0
    %2390 = vmatprep.subr.mxu0 0.0
    %2391 = vmatpush1.msra.mxu0 0.0
    %2392 = vmatprep.subr.mxu0 0.0
    %2393 = vmatpush1.msra.mxu0 0.0
    %2394 = vmatprep.subr.mxu0 0.0
    %2395 = vmatpush1.msra.mxu0 0.0
    %2396 = vmatprep.subr.mxu0 0.0
    %2397 = vmatpush1.msra.mxu0 0.0
    %2398 = vmatprep.subr.mxu0 0.0
    %2399 = vmatpush1.msra.mxu0 0.0
    %2400 = vmatprep.subr.mxu0 0.0
    %2401 = vmatpush1.msra.mxu0 0.0
    %2402 = vmatprep.subr.mxu0 0.0
    %2403 = vmatpush1.msra.mxu0 0.0
    %2404 = vmatprep.subr.mxu0 0.0
    %2405 = vmatpush1.msra.mxu0 0.0
    %2406 = vmatprep.subr.mxu0 0.0
    %2407 = vmatpush1.msra.mxu0 0.0
    %2408 = vmatprep.subr.mxu0 0.0
    %2409 = vmatpush1.msra.mxu0 0.0
    %2410 = vmatprep.subr.mxu0 0.0
    %2411 = vmatpush1.msra.mxu0 0.0
    %2412 = vmatprep.subr.mxu0 0.0
    %2413 = vmatpush1.msra.mxu0 0.0
    %2414 = vmatprep.subr.mxu0 0.0
    %2415 = vmatpush1.msra.mxu0 0.0
    %2416 = vmatprep.subr.mxu0 0.0
    %2417 = vmatpush1.msra.mxu0 0.0
    %2418 = vmatprep.subr.mxu0 0.0
    %v2419 = vand.u32 %v1984, 4294901760
    %2420 = vmatpush1.msra.mxu0 %v2419
    %2421 = vmatprep.subr.mxu0 0.0
    %v2422 = vand.u32 %v1995, 4294901760
    %2423 = vmatpush1.msra.mxu0 %v2422
    %2424 = vmatprep.subr.mxu0 0.0
    %2425 = vmatpush2.msra.mxu0 0.0
    %2426 = vmatprep.subr.mxu0 0.0
    %2427 = vmatpush2.msra.mxu0 0.0
    %2428 = vmatprep.subr.mxu0 0.0
    %2429 = vmatpush2.msra.mxu0 0.0
    %2430 = vmatprep.subr.mxu0 0.0
    %2431 = vmatpush2.msra.mxu0 0.0
    %2432 = vmatprep.subr.mxu0 0.0
    %2433 = vmatpush2.msra.mxu0 0.0
    %2434 = vmatprep.subr.mxu0 0.0
    %2435 = vmatpush2.msra.mxu0 0.0
    %2436 = vmatprep.subr.mxu0 0.0
    %2437 = vmatpush2.msra.mxu0 0.0
    %2438 = vmatprep.subr.mxu0 0.0
    %2439 = vmatpush2.msra.mxu0 0.0
    %2440 = vmatprep.subr.mxu0 0.0
    %2441 = vmatpush2.msra.mxu0 0.0
    %2442 = vmatprep.subr.mxu0 0.0
    %2443 = vmatpush2.msra.mxu0 0.0
    %2444 = vmatprep.subr.mxu0 0.0
    %2445 = vmatpush2.msra.mxu0 0.0
    %2446 = vmatprep.subr.mxu0 0.0
    %2447 = vmatpush2.msra.mxu0 0.0
    %2448 = vmatprep.subr.mxu0 0.0
    %2449 = vmatpush2.msra.mxu0 0.0
    %2450 = vmatprep.subr.mxu0 0.0
    %2451 = vmatpush2.msra.mxu0 0.0
    %2452 = vmatprep.subr.mxu0 0.0
    %2453 = vmatpush2.msra.mxu0 0.0
    %2454 = vmatprep.subr.mxu0 0.0
    %2455 = vmatpush2.msra.mxu0 0.0
    %2456 = vmatprep.mubr.f32.mxu0 0.0
    %v2457 = vand.u32 %v2002, 4294901760
    %2458 = vmatmul.mubr.f32.gmra.mxu0 %v2457
    %v2459 = vpop.f32.mrf.mxu0
    %v2460 = vadd.f32 %v2387, %v2459
    %v2461 = vpop.f32.mrf.mxu0
    %2462 = vdwg.mxu0
    %v2463 = vmax.f32 %v2460, 0.0
    %v2464 = vadd.f32 %v2463, %v1499
    %v2465 = vmax.f32 %v2464, 0.0
    %v2466 = vld [vmem:[%s11] sm:$0xff]
    %v2467 = vld [vmem:[%s11 + $0x8] sm:$0xff]
    %v2468 = vld [vmem:[%s12] sm:$0xff]
    %v2469 = vld [vmem:[%s12 + $0x8] sm:$0xff]
    %v2470 = vld [vmem:[%s13] sm:$0xff]
    %v2471 = vld [vmem:[%s13 + $0x8] sm:$0xff]
    %v2472 = vld [vmem:[%s14] sm:$0xff]
    %v2473 = vld [vmem:[%s14 + $0x8] sm:$0xff]
    %2474 = vrot.lane.b32.xlu0 %v2465, 32
    %v2475 = vpop.permute.xlu0 %2474
    %v2476 = vsel %vm79, %v2475, %v2465
    %2477 = vrot.lane.b32.xlu0 %v2476, 32
    %v2478 = vpop.permute.xlu0 %2477
    %v2479 = vsel %vm79, %v2478, %v2465
    %v2480 = vsel %vm73, 1, 0
    %vm2481 = vcmp.eq.s32.totalorder %v2480, 1
    %2483 = vrot.lane.b32.xlu0 %v2479, 100
    %v2484 = vpop.permute.xlu0 %2483
    %v2486 = vsel %vm2481, %v2484, 0.0
    %2488 = vset.pattern.permute.xlu0 0
    %2489 = vperm.xlu0 %2488, %v2468
    %v2490 = vpop.permute.xlu0 %2489
    %2493 = vset.pattern.permute.xlu0 0
    %2494 = vperm.xlu0 %2493, %v2469
    %v2495 = vpop.permute.xlu0 %2494
    %v2498 = vsel %vm98, %v2466, 0
    %v2501 = vsel %vm98, %v2467, 0
    %2503 = vmatprep.subr.mxu0 0.0
    %2504 = vmatpush1.msra.mxu0 0.0
    %2505 = vmatprep.subr.mxu0 0.0
    %2506 = vmatpush1.msra.mxu0 0.0
    %2507 = vmatprep.subr.mxu0 0.0
    %2508 = vmatpush1.msra.mxu0 0.0
    %2509 = vmatprep.subr.mxu0 0.0
    %2510 = vmatpush1.msra.mxu0 0.0
    %2511 = vmatprep.subr.mxu0 0.0
    %2512 = vmatpush1.msra.mxu0 0.0
    %2513 = vmatprep.subr.mxu0 0.0
    %2514 = vmatpush1.msra.mxu0 0.0
    %2515 = vmatprep.subr.mxu0 0.0
    %2516 = vmatpush1.msra.mxu0 0.0
    %2517 = vmatprep.subr.mxu0 0.0
    %2518 = vmatpush1.msra.mxu0 0.0
    %2519 = vmatprep.subr.mxu0 0.0
    %2520 = vmatpush1.msra.mxu0 0.0
    %2521 = vmatprep.subr.mxu0 0.0
    %2522 = vmatpush1.msra.mxu0 0.0
    %2523 = vmatprep.subr.mxu0 0.0
    %2524 = vmatpush1.msra.mxu0 0.0
    %2525 = vmatprep.subr.mxu0 0.0
    %2526 = vmatpush1.msra.mxu0 0.0
    %2527 = vmatprep.subr.mxu0 0.0
    %2528 = vmatpush1.msra.mxu0 0.0
    %2529 = vmatprep.subr.mxu0 0.0
    %2530 = vmatpush1.msra.mxu0 0.0
    %2531 = vmatprep.subr.mxu0 0.0
    %v2532 = vand.u32 %v2465, 4294901760
    %2533 = vmatpush1.msra.mxu0 %v2532
    %2534 = vmatprep.subr.mxu0 0.0
    %v2535 = vand.u32 %v2486, 4294901760
    %2536 = vmatpush1.msra.mxu0 %v2535
    %2537 = vmatprep.subr.mxu0 0.0
    %2538 = vmatpush2.msra.mxu0 0.0
    %2539 = vmatprep.subr.mxu0 0.0
    %2540 = vmatpush2.msra.mxu0 0.0
    %2541 = vmatprep.subr.mxu0 0.0
    %2542 = vmatpush2.msra.mxu0 0.0
    %2543 = vmatprep.subr.mxu0 0.0
    %2544 = vmatpush2.msra.mxu0 0.0
    %2545 = vmatprep.subr.mxu0 0.0
    %2546 = vmatpush2.msra.mxu0 0.0
    %2547 = vmatprep.subr.mxu0 0.0
    %2548 = vmatpush2.msra.mxu0 0.0
    %2549 = vmatprep.subr.mxu0 0.0
    %2550 = vmatpush2.msra.mxu0 0.0
    %2551 = vmatprep.subr.mxu0 0.0
    %2552 = vmatpush2.msra.mxu0 0.0
    %2553 = vmatprep.subr.mxu0 0.0
    %2554 = vmatpush2.msra.mxu0 0.0
    %2555 = vmatprep.subr.mxu0 0.0
    %2556 = vmatpush2.msra.mxu0 0.0
    %2557 = vmatprep.subr.mxu0 0.0
    %2558 = vmatpush2.msra.mxu0 0.0
    %2559 = vmatprep.subr.mxu0 0.0
    %2560 = vmatpush2.msra.mxu0 0.0
    %2561 = vmatprep.subr.mxu0 0.0
    %2562 = vmatpush2.msra.mxu0 0.0
    %2563 = vmatprep.subr.mxu0 0.0
    %2564 = vmatpush2.msra.mxu0 0.0
    %2565 = vmatprep.subr.mxu0 0.0
    %2566 = vmatpush2.msra.mxu0 0.0
    %2567 = vmatprep.subr.mxu0 0.0
    %2568 = vmatpush2.msra.mxu0 0.0
    %2569 = vmatprep.mubr.f32.mxu0 0.0
    %v2570 = vand.u32 %v2498, 4294901760
    %v2571 = vsub.f32 %v2498, %v2570
    %v2572 = vand.u32 %v2571, 4294901760
    %v2573 = vsub.f32 %v2571, %v2572
    %v2574 = vand.u32 %v2573, 4294901760
    %2575 = vmatmul.mubr.f32.gmra.mxu0 %v2574
    %v2576 = vpop.f32.mrf.mxu0
    %v2577 = vadd.f32 %v2490, %v2576
    %v2578 = vpop.f32.mrf.mxu0
    %2579 = vmatprep.mubr.f32.mxu0 0.0
    %v2580 = vand.u32 %v2501, 4294901760
    %v2581 = vsub.f32 %v2501, %v2580
    %v2582 = vand.u32 %v2581, 4294901760
    %v2583 = vsub.f32 %v2581, %v2582
    %v2584 = vand.u32 %v2583, 4294901760
    %2585 = vmatmul.mubr.f32.gmra.mxu0 %v2584
    %v2586 = vpop.f32.mrf.mxu0
    %v2587 = vadd.f32 %v2495, %v2586
    %v2588 = vpop.f32.mrf.mxu0
    %2589 = vdwg.mxu0
    %2590 = vmatprep.subr.mxu0 0.0
    %2591 = vmatpush1.msra.mxu0 0.0
    %2592 = vmatprep.subr.mxu0 0.0
    %2593 = vmatpush1.msra.mxu0 0.0
    %2594 = vmatprep.subr.mxu0 0.0
    %2595 = vmatpush1.msra.mxu0 0.0
    %2596 = vmatprep.subr.mxu0 0.0
    %2597 = vmatpush1.msra.mxu0 0.0
    %2598 = vmatprep.subr.mxu0 0.0
    %2599 = vmatpush1.msra.mxu0 0.0
    %2600 = vmatprep.subr.mxu0 0.0
    %2601 = vmatpush1.msra.mxu0 0.0
    %2602 = vmatprep.subr.mxu0 0.0
    %2603 = vmatpush1.msra.mxu0 0.0
    %2604 = vmatprep.subr.mxu0 0.0
    %2605 = vmatpush1.msra.mxu0 0.0
    %2606 = vmatprep.subr.mxu0 0.0
    %2607 = vmatpush1.msra.mxu0 0.0
    %2608 = vmatprep.subr.mxu0 0.0
    %2609 = vmatpush1.msra.mxu0 0.0
    %2610 = vmatprep.subr.mxu0 0.0
    %2611 = vmatpush1.msra.mxu0 0.0
    %2612 = vmatprep.subr.mxu0 0.0
    %2613 = vmatpush1.msra.mxu0 0.0
    %2614 = vmatprep.subr.mxu0 0.0
    %2615 = vmatpush1.msra.mxu0 0.0
    %2616 = vmatprep.subr.mxu0 0.0
    %2617 = vmatpush1.msra.mxu0 0.0
    %2618 = vmatprep.subr.mxu0 0.0
    %v2619 = vand.u32 %v2465, 4294901760
    %v2620 = vsub.f32 %v2465, %v2619
    %v2621 = vand.u32 %v2620, 4294901760
    %v2622 = vsub.f32 %v2620, %v2621
    %v2623 = vand.u32 %v2622, 4294901760
    %2624 = vmatpush1.msra.mxu0 %v2623
    %2625 = vmatprep.subr.mxu0 0.0
    %v2626 = vand.u32 %v2486, 4294901760
    %v2627 = vsub.f32 %v2486, %v2626
    %v2628 = vand.u32 %v2627, 4294901760
    %v2629 = vsub.f32 %v2627, %v2628
    %v2630 = vand.u32 %v2629, 4294901760
    %2631 = vmatpush1.msra.mxu0 %v2630
    %2632 = vmatprep.subr.mxu0 0.0
    %2633 = vmatpush2.msra.mxu0 0.0
    %2634 = vmatprep.subr.mxu0 0.0
    %2635 = vmatpush2.msra.mxu0 0.0
    %2636 = vmatprep.subr.mxu0 0.0
    %2637 = vmatpush2.msra.mxu0 0.0
    %2638 = vmatprep.subr.mxu0 0.0
    %2639 = vmatpush2.msra.mxu0 0.0
    %2640 = vmatprep.subr.mxu0 0.0
    %2641 = vmatpush2.msra.mxu0 0.0
    %2642 = vmatprep.subr.mxu0 0.0
    %2643 = vmatpush2.msra.mxu0 0.0
    %2644 = vmatprep.subr.mxu0 0.0
    %2645 = vmatpush2.msra.mxu0 0.0
    %2646 = vmatprep.subr.mxu0 0.0
    %2647 = vmatpush2.msra.mxu0 0.0
    %2648 = vmatprep.subr.mxu0 0.0
    %2649 = vmatpush2.msra.mxu0 0.0
    %2650 = vmatprep.subr.mxu0 0.0
    %2651 = vmatpush2.msra.mxu0 0.0
    %2652 = vmatprep.subr.mxu0 0.0
    %2653 = vmatpush2.msra.mxu0 0.0
    %2654 = vmatprep.subr.mxu0 0.0
    %2655 = vmatpush2.msra.mxu0 0.0
    %2656 = vmatprep.subr.mxu0 0.0
    %2657 = vmatpush2.msra.mxu0 0.0
    %2658 = vmatprep.subr.mxu0 0.0
    %2659 = vmatpush2.msra.mxu0 0.0
    %2660 = vmatprep.subr.mxu0 0.0
    %2661 = vmatpush2.msra.mxu0 0.0
    %2662 = vmatprep.subr.mxu0 0.0
    %2663 = vmatpush2.msra.mxu0 0.0
    %2664 = vmatprep.mubr.f32.mxu0 0.0
    %v2665 = vand.u32 %v2498, 4294901760
    %2666 = vmatmul.mubr.f32.gmra.mxu0 %v2665
    %v2667 = vpop.f32.mrf.mxu0
    %v2668 = vadd.f32 %v2577, %v2667
    %v2669 = vpop.f32.mrf.mxu0
    %2670 = vmatprep.mubr.f32.mxu0 0.0
    %v2671 = vand.u32 %v2501, 4294901760
    %2672 = vmatmul.mubr.f32.gmra.mxu0 %v2671
    %v2673 = vpop.f32.mrf.mxu0
    %v2674 = vadd.f32 %v2587, %v2673
    %v2675 = vpop.f32.mrf.mxu0
    %2676 = vdwg.mxu0
    %2677 = vmatprep.subr.mxu0 0.0
    %2678 = vmatpush1.msra.mxu0 0.0
    %2679 = vmatprep.subr.mxu0 0.0
    %2680 = vmatpush1.msra.mxu0 0.0
    %2681 = vmatprep.subr.mxu0 0.0
    %2682 = vmatpush1.msra.mxu0 0.0
    %2683 = vmatprep.subr.mxu0 0.0
    %2684 = vmatpush1.msra.mxu0 0.0
    %2685 = vmatprep.subr.mxu0 0.0
    %2686 = vmatpush1.msra.mxu0 0.0
    %2687 = vmatprep.subr.mxu0 0.0
    %2688 = vmatpush1.msra.mxu0 0.0
    %2689 = vmatprep.subr.mxu0 0.0
    %2690 = vmatpush1.msra.mxu0 0.0
    %2691 = vmatprep.subr.mxu0 0.0
    %2692 = vmatpush1.msra.mxu0 0.0
    %2693 = vmatprep.subr.mxu0 0.0
    %2694 = vmatpush1.msra.mxu0 0.0
    %2695 = vmatprep.subr.mxu0 0.0
    %2696 = vmatpush1.msra.mxu0 0.0
    %2697 = vmatprep.subr.mxu0 0.0
    %2698 = vmatpush1.msra.mxu0 0.0
    %2699 = vmatprep.subr.mxu0 0.0
    %2700 = vmatpush1.msra.mxu0 0.0
    %2701 = vmatprep.subr.mxu0 0.0
    %2702 = vmatpush1.msra.mxu0 0.0
    %2703 = vmatprep.subr.mxu0 0.0
    %2704 = vmatpush1.msra.mxu0 0.0
    %2705 = vmatprep.subr.mxu0 0.0
    %v2706 = vand.u32 %v2465, 4294901760
    %v2707 = vsub.f32 %v2465, %v2706
    %2708 = vmatpush1.msra.mxu0 %v2707
    %2709 = vmatprep.subr.mxu0 0.0
    %v2710 = vand.u32 %v2486, 4294901760
    %v2711 = vsub.f32 %v2486, %v2710
    %2712 = vmatpush1.msra.mxu0 %v2711
    %2713 = vmatprep.subr.mxu0 0.0
    %2714 = vmatpush2.msra.mxu0 0.0
    %2715 = vmatprep.subr.mxu0 0.0
    %2716 = vmatpush2.msra.mxu0 0.0
    %2717 = vmatprep.subr.mxu0 0.0
    %2718 = vmatpush2.msra.mxu0 0.0
    %2719 = vmatprep.subr.mxu0 0.0
    %2720 = vmatpush2.msra.mxu0 0.0
    %2721 = vmatprep.subr.mxu0 0.0
    %2722 = vmatpush2.msra.mxu0 0.0
    %2723 = vmatprep.subr.mxu0 0.0
    %2724 = vmatpush2.msra.mxu0 0.0
    %2725 = vmatprep.subr.mxu0 0.0
    %2726 = vmatpush2.msra.mxu0 0.0
    %2727 = vmatprep.subr.mxu0 0.0
    %2728 = vmatpush2.msra.mxu0 0.0
    %2729 = vmatprep.subr.mxu0 0.0
    %2730 = vmatpush2.msra.mxu0 0.0
    %2731 = vmatprep.subr.mxu0 0.0
    %2732 = vmatpush2.msra.mxu0 0.0
    %2733 = vmatprep.subr.mxu0 0.0
    %2734 = vmatpush2.msra.mxu0 0.0
    %2735 = vmatprep.subr.mxu0 0.0
    %2736 = vmatpush2.msra.mxu0 0.0
    %2737 = vmatprep.subr.mxu0 0.0
    %2738 = vmatpush2.msra.mxu0 0.0
    %2739 = vmatprep.subr.mxu0 0.0
    %2740 = vmatpush2.msra.mxu0 0.0
    %2741 = vmatprep.subr.mxu0 0.0
    %2742 = vmatpush2.msra.mxu0 0.0
    %2743 = vmatprep.subr.mxu0 0.0
    %2744 = vmatpush2.msra.mxu0 0.0
    %2745 = vmatprep.mubr.f32.mxu0 0.0
    %v2746 = vand.u32 %v2498, 4294901760
    %v2747 = vsub.f32 %v2498, %v2746
    %2748 = vmatmul.mubr.f32.gmra.mxu0 %v2747
    %v2749 = vpop.f32.mrf.mxu0
    %v2750 = vadd.f32 %v2668, %v2749
    %v2751 = vpop.f32.mrf.mxu0
    %2752 = vmatprep.mubr.f32.mxu0 0.0
    %v2753 = vand.u32 %v2501, 4294901760
    %v2754 = vsub.f32 %v2501, %v2753
    %2755 = vmatmul.mubr.f32.gmra.mxu0 %v2754
    %v2756 = vpop.f32.mrf.mxu0
    %v2757 = vadd.f32 %v2674, %v2756
    %v2758 = vpop.f32.mrf.mxu0
    %2759 = vdwg.mxu0
    %2760 = vmatprep.subr.mxu0 0.0
    %2761 = vmatpush1.msra.mxu0 0.0
    %2762 = vmatprep.subr.mxu0 0.0
    %2763 = vmatpush1.msra.mxu0 0.0
    %2764 = vmatprep.subr.mxu0 0.0
    %2765 = vmatpush1.msra.mxu0 0.0
    %2766 = vmatprep.subr.mxu0 0.0
    %2767 = vmatpush1.msra.mxu0 0.0
    %2768 = vmatprep.subr.mxu0 0.0
    %2769 = vmatpush1.msra.mxu0 0.0
    %2770 = vmatprep.subr.mxu0 0.0
    %2771 = vmatpush1.msra.mxu0 0.0
    %2772 = vmatprep.subr.mxu0 0.0
    %2773 = vmatpush1.msra.mxu0 0.0
    %2774 = vmatprep.subr.mxu0 0.0
    %2775 = vmatpush1.msra.mxu0 0.0
    %2776 = vmatprep.subr.mxu0 0.0
    %2777 = vmatpush1.msra.mxu0 0.0
    %2778 = vmatprep.subr.mxu0 0.0
    %2779 = vmatpush1.msra.mxu0 0.0
    %2780 = vmatprep.subr.mxu0 0.0
    %2781 = vmatpush1.msra.mxu0 0.0
    %2782 = vmatprep.subr.mxu0 0.0
    %2783 = vmatpush1.msra.mxu0 0.0
    %2784 = vmatprep.subr.mxu0 0.0
    %2785 = vmatpush1.msra.mxu0 0.0
    %2786 = vmatprep.subr.mxu0 0.0
    %2787 = vmatpush1.msra.mxu0 0.0
    %2788 = vmatprep.subr.mxu0 0.0
    %v2789 = vand.u32 %v2465, 4294901760
    %2790 = vmatpush1.msra.mxu0 %v2789
    %2791 = vmatprep.subr.mxu0 0.0
    %v2792 = vand.u32 %v2486, 4294901760
    %2793 = vmatpush1.msra.mxu0 %v2792
    %2794 = vmatprep.subr.mxu0 0.0
    %2795 = vmatpush2.msra.mxu0 0.0
    %2796 = vmatprep.subr.mxu0 0.0
    %2797 = vmatpush2.msra.mxu0 0.0
    %2798 = vmatprep.subr.mxu0 0.0
    %2799 = vmatpush2.msra.mxu0 0.0
    %2800 = vmatprep.subr.mxu0 0.0
    %2801 = vmatpush2.msra.mxu0 0.0
    %2802 = vmatprep.subr.mxu0 0.0
    %2803 = vmatpush2.msra.mxu0 0.0
    %2804 = vmatprep.subr.mxu0 0.0
    %2805 = vmatpush2.msra.mxu0 0.0
    %2806 = vmatprep.subr.mxu0 0.0
    %2807 = vmatpush2.msra.mxu0 0.0
    %2808 = vmatprep.subr.mxu0 0.0
    %2809 = vmatpush2.msra.mxu0 0.0
    %2810 = vmatprep.subr.mxu0 0.0
    %2811 = vmatpush2.msra.mxu0 0.0
    %2812 = vmatprep.subr.mxu0 0.0
    %2813 = vmatpush2.msra.mxu0 0.0
    %2814 = vmatprep.subr.mxu0 0.0
    %2815 = vmatpush2.msra.mxu0 0.0
    %2816 = vmatprep.subr.mxu0 0.0
    %2817 = vmatpush2.msra.mxu0 0.0
    %2818 = vmatprep.subr.mxu0 0.0
    %2819 = vmatpush2.msra.mxu0 0.0
    %2820 = vmatprep.subr.mxu0 0.0
    %2821 = vmatpush2.msra.mxu0 0.0
    %2822 = vmatprep.subr.mxu0 0.0
    %2823 = vmatpush2.msra.mxu0 0.0
    %2824 = vmatprep.subr.mxu0 0.0
    %2825 = vmatpush2.msra.mxu0 0.0
    %2826 = vmatprep.mubr.f32.mxu0 0.0
    %v2827 = vand.u32 %v2498, 4294901760
    %v2828 = vsub.f32 %v2498, %v2827
    %v2829 = vand.u32 %v2828, 4294901760
    %2830 = vmatmul.mubr.f32.gmra.mxu0 %v2829
    %v2831 = vpop.f32.mrf.mxu0
    %v2832 = vadd.f32 %v2750, %v2831
    %v2833 = vpop.f32.mrf.mxu0
    %2834 = vmatprep.mubr.f32.mxu0 0.0
    %v2835 = vand.u32 %v2501, 4294901760
    %v2836 = vsub.f32 %v2501, %v2835
    %v2837 = vand.u32 %v2836, 4294901760
    %2838 = vmatmul.mubr.f32.gmra.mxu0 %v2837
    %v2839 = vpop.f32.mrf.mxu0
    %v2840 = vadd.f32 %v2757, %v2839
    %v2841 = vpop.f32.mrf.mxu0
    %2842 = vdwg.mxu0
    %2843 = vmatprep.subr.mxu0 0.0
    %2844 = vmatpush1.msra.mxu0 0.0
    %2845 = vmatprep.subr.mxu0 0.0
    %2846 = vmatpush1.msra.mxu0 0.0
    %2847 = vmatprep.subr.mxu0 0.0
    %2848 = vmatpush1.msra.mxu0 0.0
    %2849 = vmatprep.subr.mxu0 0.0
    %2850 = vmatpush1.msra.mxu0 0.0
    %2851 = vmatprep.subr.mxu0 0.0
    %2852 = vmatpush1.msra.mxu0 0.0
    %2853 = vmatprep.subr.mxu0 0.0
    %2854 = vmatpush1.msra.mxu0 0.0
    %2855 = vmatprep.subr.mxu0 0.0
    %2856 = vmatpush1.msra.mxu0 0.0
    %2857 = vmatprep.subr.mxu0 0.0
    %2858 = vmatpush1.msra.mxu0 0.0
    %2859 = vmatprep.subr.mxu0 0.0
    %2860 = vmatpush1.msra.mxu0 0.0
    %2861 = vmatprep.subr.mxu0 0.0
    %2862 = vmatpush1.msra.mxu0 0.0
    %2863 = vmatprep.subr.mxu0 0.0
    %2864 = vmatpush1.msra.mxu0 0.0
    %2865 = vmatprep.subr.mxu0 0.0
    %2866 = vmatpush1.msra.mxu0 0.0
    %2867 = vmatprep.subr.mxu0 0.0
    %2868 = vmatpush1.msra.mxu0 0.0
    %2869 = vmatprep.subr.mxu0 0.0
    %2870 = vmatpush1.msra.mxu0 0.0
    %2871 = vmatprep.subr.mxu0 0.0
    %v2872 = vand.u32 %v2465, 4294901760
    %v2873 = vsub.f32 %v2465, %v2872
    %v2874 = vand.u32 %v2873, 4294901760
    %2875 = vmatpush1.msra.mxu0 %v2874
    %2876 = vmatprep.subr.mxu0 0.0
    %v2877 = vand.u32 %v2486, 4294901760
    %v2878 = vsub.f32 %v2486, %v2877
    %v2879 = vand.u32 %v2878, 4294901760
    %2880 = vmatpush1.msra.mxu0 %v2879
    %2881 = vmatprep.subr.mxu0 0.0
    %2882 = vmatpush2.msra.mxu0 0.0
    %2883 = vmatprep.subr.mxu0 0.0
    %2884 = vmatpush2.msra.mxu0 0.0
    %2885 = vmatprep.subr.mxu0 0.0
    %2886 = vmatpush2.msra.mxu0 0.0
    %2887 = vmatprep.subr.mxu0 0.0
    %2888 = vmatpush2.msra.mxu0 0.0
    %2889 = vmatprep.subr.mxu0 0.0
    %2890 = vmatpush2.msra.mxu0 0.0
    %2891 = vmatprep.subr.mxu0 0.0
    %2892 = vmatpush2.msra.mxu0 0.0
    %2893 = vmatprep.subr.mxu0 0.0
    %2894 = vmatpush2.msra.mxu0 0.0
    %2895 = vmatprep.subr.mxu0 0.0
    %2896 = vmatpush2.msra.mxu0 0.0
    %2897 = vmatprep.subr.mxu0 0.0
    %2898 = vmatpush2.msra.mxu0 0.0
    %2899 = vmatprep.subr.mxu0 0.0
    %2900 = vmatpush2.msra.mxu0 0.0
    %2901 = vmatprep.subr.mxu0 0.0
    %2902 = vmatpush2.msra.mxu0 0.0
    %2903 = vmatprep.subr.mxu0 0.0
    %2904 = vmatpush2.msra.mxu0 0.0
    %2905 = vmatprep.subr.mxu0 0.0
    %2906 = vmatpush2.msra.mxu0 0.0
    %2907 = vmatprep.subr.mxu0 0.0
    %2908 = vmatpush2.msra.mxu0 0.0
    %2909 = vmatprep.subr.mxu0 0.0
    %2910 = vmatpush2.msra.mxu0 0.0
    %2911 = vmatprep.subr.mxu0 0.0
    %2912 = vmatpush2.msra.mxu0 0.0
    %2913 = vmatprep.mubr.f32.mxu0 0.0
    %v2914 = vand.u32 %v2498, 4294901760
    %2915 = vmatmul.mubr.f32.gmra.mxu0 %v2914
    %v2916 = vpop.f32.mrf.mxu0
    %v2917 = vadd.f32 %v2832, %v2916
    %v2918 = vpop.f32.mrf.mxu0
    %2919 = vmatprep.mubr.f32.mxu0 0.0
    %v2920 = vand.u32 %v2501, 4294901760
    %2921 = vmatmul.mubr.f32.gmra.mxu0 %v2920
    %v2922 = vpop.f32.mrf.mxu0
    %v2923 = vadd.f32 %v2840, %v2922
    %v2924 = vpop.f32.mrf.mxu0
    %2925 = vdwg.mxu0
    %2926 = vmatprep.subr.mxu0 0.0
    %2927 = vmatpush1.msra.mxu0 0.0
    %2928 = vmatprep.subr.mxu0 0.0
    %2929 = vmatpush1.msra.mxu0 0.0
    %2930 = vmatprep.subr.mxu0 0.0
    %2931 = vmatpush1.msra.mxu0 0.0
    %2932 = vmatprep.subr.mxu0 0.0
    %2933 = vmatpush1.msra.mxu0 0.0
    %2934 = vmatprep.subr.mxu0 0.0
    %2935 = vmatpush1.msra.mxu0 0.0
    %2936 = vmatprep.subr.mxu0 0.0
    %2937 = vmatpush1.msra.mxu0 0.0
    %2938 = vmatprep.subr.mxu0 0.0
    %2939 = vmatpush1.msra.mxu0 0.0
    %2940 = vmatprep.subr.mxu0 0.0
    %2941 = vmatpush1.msra.mxu0 0.0
    %2942 = vmatprep.subr.mxu0 0.0
    %2943 = vmatpush1.msra.mxu0 0.0
    %2944 = vmatprep.subr.mxu0 0.0
    %2945 = vmatpush1.msra.mxu0 0.0
    %2946 = vmatprep.subr.mxu0 0.0
    %2947 = vmatpush1.msra.mxu0 0.0
    %2948 = vmatprep.subr.mxu0 0.0
    %2949 = vmatpush1.msra.mxu0 0.0
    %2950 = vmatprep.subr.mxu0 0.0
    %2951 = vmatpush1.msra.mxu0 0.0
    %2952 = vmatprep.subr.mxu0 0.0
    %2953 = vmatpush1.msra.mxu0 0.0
    %2954 = vmatprep.subr.mxu0 0.0
    %v2955 = vand.u32 %v2465, 4294901760
    %2956 = vmatpush1.msra.mxu0 %v2955
    %2957 = vmatprep.subr.mxu0 0.0
    %v2958 = vand.u32 %v2486, 4294901760
    %2959 = vmatpush1.msra.mxu0 %v2958
    %2960 = vmatprep.subr.mxu0 0.0
    %2961 = vmatpush2.msra.mxu0 0.0
    %2962 = vmatprep.subr.mxu0 0.0
    %2963 = vmatpush2.msra.mxu0 0.0
    %2964 = vmatprep.subr.mxu0 0.0
    %2965 = vmatpush2.msra.mxu0 0.0
    %2966 = vmatprep.subr.mxu0 0.0
    %2967 = vmatpush2.msra.mxu0 0.0
    %2968 = vmatprep.subr.mxu0 0.0
    %2969 = vmatpush2.msra.mxu0 0.0
    %2970 = vmatprep.subr.mxu0 0.0
    %2971 = vmatpush2.msra.mxu0 0.0
    %2972 = vmatprep.subr.mxu0 0.0
    %2973 = vmatpush2.msra.mxu0 0.0
    %2974 = vmatprep.subr.mxu0 0.0
    %2975 = vmatpush2.msra.mxu0 0.0
    %2976 = vmatprep.subr.mxu0 0.0
    %2977 = vmatpush2.msra.mxu0 0.0
    %2978 = vmatprep.subr.mxu0 0.0
    %2979 = vmatpush2.msra.mxu0 0.0
    %2980 = vmatprep.subr.mxu0 0.0
    %2981 = vmatpush2.msra.mxu0 0.0
    %2982 = vmatprep.subr.mxu0 0.0
    %2983 = vmatpush2.msra.mxu0 0.0
    %2984 = vmatprep.subr.mxu0 0.0
    %2985 = vmatpush2.msra.mxu0 0.0
    %2986 = vmatprep.subr.mxu0 0.0
    %2987 = vmatpush2.msra.mxu0 0.0
    %2988 = vmatprep.subr.mxu0 0.0
    %2989 = vmatpush2.msra.mxu0 0.0
    %2990 = vmatprep.subr.mxu0 0.0
    %2991 = vmatpush2.msra.mxu0 0.0
    %2992 = vmatprep.mubr.f32.mxu0 0.0
    %v2993 = vand.u32 %v2498, 4294901760
    %2994 = vmatmul.mubr.f32.gmra.mxu0 %v2993
    %v2995 = vpop.f32.mrf.mxu0
    %v2996 = vadd.f32 %v2917, %v2995
    %v2997 = vpop.f32.mrf.mxu0
    %2998 = vmatprep.mubr.f32.mxu0 0.0
    %v2999 = vand.u32 %v2501, 4294901760
    %3000 = vmatmul.mubr.f32.gmra.mxu0 %v2999
    %v3001 = vpop.f32.mrf.mxu0
    %v3002 = vadd.f32 %v2923, %v3001
    %v3003 = vpop.f32.mrf.mxu0
    %3004 = vdwg.mxu0
    %v3005 = vmax.f32 %v2996, 0.0
    %v3006 = vmax.f32 %v3002, 0.0
    %3007 = vrot.lane.b32.xlu0 %v3005, 32
    %v3008 = vpop.permute.xlu0 %3007
    %v3009 = vsel %vm79, %v3008, %v3005
    %3010 = vrot.lane.b32.xlu0 %v3006, 32
    %v3011 = vpop.permute.xlu0 %3010
    %v3012 = vsel %vm79, %v3011, %v3006
    %3013 = vrot.lane.b32.xlu0 %v3009, 32
    %v3014 = vpop.permute.xlu0 %3013
    %3015 = vrot.lane.b32.xlu0 %v3012, 32
    %v3016 = vpop.permute.xlu0 %3015
    %v3017 = vsel %vm79, %v3014, %v3005
    %v3018 = vsel %vm79, %v3016, %v3006
    %3021 = vrot.lane.b32.xlu0 %v3017, 100
    %v3022 = vpop.permute.xlu0 %3021
    %3023 = vrot.lane.b32.xlu0 %v3018, 100
    %v3024 = vpop.permute.xlu0 %3023
    %v3027 = vsel %vm2481, %v3022, 0.0
    %v3028 = vsel %vm2481, %v3024, 0.0
    %3030 = vset.pattern.permute.xlu0 0
    %3031 = vperm.xlu0 %3030, %v2472
    %v3032 = vpop.permute.xlu0 %3031
    %3035 = vset.pattern.permute.xlu0 0
    %3036 = vperm.xlu0 %3035, %v2473
    %v3037 = vpop.permute.xlu0 %3036
    %vm3039 = vcmask 261120
    %v3041 = vsel %vm3039, %v2470, 0
    %v3044 = vsel %vm3039, %v2471, 0
    %3046 = vmatprep.subr.mxu0 0.0
    %3047 = vmatpush1.msra.mxu0 0.0
    %3048 = vmatprep.subr.mxu0 0.0
    %3049 = vmatpush1.msra.mxu0 0.0
    %3050 = vmatprep.subr.mxu0 0.0
    %3051 = vmatpush1.msra.mxu0 0.0
    %3052 = vmatprep.subr.mxu0 0.0
    %3053 = vmatpush1.msra.mxu0 0.0
    %3054 = vmatprep.subr.mxu0 0.0
    %3055 = vmatpush1.msra.mxu0 0.0
    %3056 = vmatprep.subr.mxu0 0.0
    %3057 = vmatpush1.msra.mxu0 0.0
    %3058 = vmatprep.subr.mxu0 0.0
    %3059 = vmatpush1.msra.mxu0 0.0
    %3060 = vmatprep.subr.mxu0 0.0
    %3061 = vmatpush1.msra.mxu0 0.0
    %3062 = vmatprep.subr.mxu0 0.0
    %3063 = vmatpush1.msra.mxu0 0.0
    %3064 = vmatprep.subr.mxu0 0.0
    %3065 = vmatpush1.msra.mxu0 0.0
    %3066 = vmatprep.subr.mxu0 0.0
    %3067 = vmatpush1.msra.mxu0 0.0
    %3068 = vmatprep.subr.mxu0 0.0
    %3069 = vmatpush1.msra.mxu0 0.0
    %3070 = vmatprep.subr.mxu0 0.0
    %v3071 = vand.u32 %v3006, 4294901760
    %3072 = vmatpush1.msra.mxu0 %v3071
    %3073 = vmatprep.subr.mxu0 0.0
    %v3074 = vand.u32 %v3005, 4294901760
    %3075 = vmatpush1.msra.mxu0 %v3074
    %3076 = vmatprep.subr.mxu0 0.0
    %v3077 = vand.u32 %v3028, 4294901760
    %3078 = vmatpush1.msra.mxu0 %v3077
    %3079 = vmatprep.subr.mxu0 0.0
    %v3080 = vand.u32 %v3027, 4294901760
    %3081 = vmatpush1.msra.mxu0 %v3080
    %3082 = vmatprep.subr.mxu0 0.0
    %3083 = vmatpush2.msra.mxu0 0.0
    %3084 = vmatprep.subr.mxu0 0.0
    %3085 = vmatpush2.msra.mxu0 0.0
    %3086 = vmatprep.subr.mxu0 0.0
    %3087 = vmatpush2.msra.mxu0 0.0
    %3088 = vmatprep.subr.mxu0 0.0
    %3089 = vmatpush2.msra.mxu0 0.0
    %3090 = vmatprep.subr.mxu0 0.0
    %3091 = vmatpush2.msra.mxu0 0.0
    %3092 = vmatprep.subr.mxu0 0.0
    %3093 = vmatpush2.msra.mxu0 0.0
    %3094 = vmatprep.subr.mxu0 0.0
    %3095 = vmatpush2.msra.mxu0 0.0
    %3096 = vmatprep.subr.mxu0 0.0
    %3097 = vmatpush2.msra.mxu0 0.0
    %3098 = vmatprep.subr.mxu0 0.0
    %3099 = vmatpush2.msra.mxu0 0.0
    %3100 = vmatprep.subr.mxu0 0.0
    %3101 = vmatpush2.msra.mxu0 0.0
    %3102 = vmatprep.subr.mxu0 0.0
    %3103 = vmatpush2.msra.mxu0 0.0
    %3104 = vmatprep.subr.mxu0 0.0
    %3105 = vmatpush2.msra.mxu0 0.0
    %3106 = vmatprep.subr.mxu0 0.0
    %3107 = vmatpush2.msra.mxu0 0.0
    %3108 = vmatprep.subr.mxu0 0.0
    %3109 = vmatpush2.msra.mxu0 0.0
    %3110 = vmatprep.subr.mxu0 0.0
    %3111 = vmatpush2.msra.mxu0 0.0
    %3112 = vmatprep.subr.mxu0 0.0
    %3113 = vmatpush2.msra.mxu0 0.0
    %3114 = vmatprep.mubr.f32.mxu0 0.0
    %v3115 = vand.u32 %v3041, 4294901760
    %v3116 = vsub.f32 %v3041, %v3115
    %v3117 = vand.u32 %v3116, 4294901760
    %v3118 = vsub.f32 %v3116, %v3117
    %v3119 = vand.u32 %v3118, 4294901760
    %3120 = vmatmul.mubr.f32.gmra.mxu0 %v3119
    %v3121 = vpop.f32.mrf.mxu0
    %v3122 = vadd.f32 %v3032, %v3121
    %v3123 = vpop.f32.mrf.mxu0
    %3124 = vmatprep.mubr.f32.mxu0 0.0
    %v3125 = vand.u32 %v3044, 4294901760
    %v3126 = vsub.f32 %v3044, %v3125
    %v3127 = vand.u32 %v3126, 4294901760
    %v3128 = vsub.f32 %v3126, %v3127
    %v3129 = vand.u32 %v3128, 4294901760
    %3130 = vmatmul.mubr.f32.gmra.mxu0 %v3129
    %v3131 = vpop.f32.mrf.mxu0
    %v3132 = vadd.f32 %v3037, %v3131
    %v3133 = vpop.f32.mrf.mxu0
    %3134 = vdwg.mxu0
    %3135 = vmatprep.subr.mxu0 0.0
    %3136 = vmatpush1.msra.mxu0 0.0
    %3137 = vmatprep.subr.mxu0 0.0
    %3138 = vmatpush1.msra.mxu0 0.0
    %3139 = vmatprep.subr.mxu0 0.0
    %3140 = vmatpush1.msra.mxu0 0.0
    %3141 = vmatprep.subr.mxu0 0.0
    %3142 = vmatpush1.msra.mxu0 0.0
    %3143 = vmatprep.subr.mxu0 0.0
    %3144 = vmatpush1.msra.mxu0 0.0
    %3145 = vmatprep.subr.mxu0 0.0
    %3146 = vmatpush1.msra.mxu0 0.0
    %3147 = vmatprep.subr.mxu0 0.0
    %3148 = vmatpush1.msra.mxu0 0.0
    %3149 = vmatprep.subr.mxu0 0.0
    %3150 = vmatpush1.msra.mxu0 0.0
    %3151 = vmatprep.subr.mxu0 0.0
    %3152 = vmatpush1.msra.mxu0 0.0
    %3153 = vmatprep.subr.mxu0 0.0
    %3154 = vmatpush1.msra.mxu0 0.0
    %3155 = vmatprep.subr.mxu0 0.0
    %3156 = vmatpush1.msra.mxu0 0.0
    %3157 = vmatprep.subr.mxu0 0.0
    %3158 = vmatpush1.msra.mxu0 0.0
    %3159 = vmatprep.subr.mxu0 0.0
    %v3160 = vand.u32 %v3006, 4294901760
    %v3161 = vsub.f32 %v3006, %v3160
    %v3162 = vand.u32 %v3161, 4294901760
    %v3163 = vsub.f32 %v3161, %v3162
    %v3164 = vand.u32 %v3163, 4294901760
    %3165 = vmatpush1.msra.mxu0 %v3164
    %3166 = vmatprep.subr.mxu0 0.0
    %v3167 = vand.u32 %v3005, 4294901760
    %v3168 = vsub.f32 %v3005, %v3167
    %v3169 = vand.u32 %v3168, 4294901760
    %v3170 = vsub.f32 %v3168, %v3169
    %v3171 = vand.u32 %v3170, 4294901760
    %3172 = vmatpush1.msra.mxu0 %v3171
    %3173 = vmatprep.subr.mxu0 0.0
    %v3174 = vand.u32 %v3028, 4294901760
    %v3175 = vsub.f32 %v3028, %v3174
    %v3176 = vand.u32 %v3175, 4294901760
    %v3177 = vsub.f32 %v3175, %v3176
    %v3178 = vand.u32 %v3177, 4294901760
    %3179 = vmatpush1.msra.mxu0 %v3178
    %3180 = vmatprep.subr.mxu0 0.0
    %v3181 = vand.u32 %v3027, 4294901760
    %v3182 = vsub.f32 %v3027, %v3181
    %v3183 = vand.u32 %v3182, 4294901760
    %v3184 = vsub.f32 %v3182, %v3183
    %v3185 = vand.u32 %v3184, 4294901760
    %3186 = vmatpush1.msra.mxu0 %v3185
    %3187 = vmatprep.subr.mxu0 0.0
    %3188 = vmatpush2.msra.mxu0 0.0
    %3189 = vmatprep.subr.mxu0 0.0
    %3190 = vmatpush2.msra.mxu0 0.0
    %3191 = vmatprep.subr.mxu0 0.0
    %3192 = vmatpush2.msra.mxu0 0.0
    %3193 = vmatprep.subr.mxu0 0.0
    %3194 = vmatpush2.msra.mxu0 0.0
    %3195 = vmatprep.subr.mxu0 0.0
    %3196 = vmatpush2.msra.mxu0 0.0
    %3197 = vmatprep.subr.mxu0 0.0
    %3198 = vmatpush2.msra.mxu0 0.0
    %3199 = vmatprep.subr.mxu0 0.0
    %3200 = vmatpush2.msra.mxu0 0.0
    %3201 = vmatprep.subr.mxu0 0.0
    %3202 = vmatpush2.msra.mxu0 0.0
    %3203 = vmatprep.subr.mxu0 0.0
    %3204 = vmatpush2.msra.mxu0 0.0
    %3205 = vmatprep.subr.mxu0 0.0
    %3206 = vmatpush2.msra.mxu0 0.0
    %3207 = vmatprep.subr.mxu0 0.0
    %3208 = vmatpush2.msra.mxu0 0.0
    %3209 = vmatprep.subr.mxu0 0.0
    %3210 = vmatpush2.msra.mxu0 0.0
    %3211 = vmatprep.subr.mxu0 0.0
    %3212 = vmatpush2.msra.mxu0 0.0
    %3213 = vmatprep.subr.mxu0 0.0
    %3214 = vmatpush2.msra.mxu0 0.0
    %3215 = vmatprep.subr.mxu0 0.0
    %3216 = vmatpush2.msra.mxu0 0.0
    %3217 = vmatprep.subr.mxu0 0.0
    %3218 = vmatpush2.msra.mxu0 0.0
    %3219 = vmatprep.mubr.f32.mxu0 0.0
    %v3220 = vand.u32 %v3041, 4294901760
    %3221 = vmatmul.mubr.f32.gmra.mxu0 %v3220
    %v3222 = vpop.f32.mrf.mxu0
    %v3223 = vadd.f32 %v3122, %v3222
    %v3224 = vpop.f32.mrf.mxu0
    %3225 = vmatprep.mubr.f32.mxu0 0.0
    %v3226 = vand.u32 %v3044, 4294901760
    %3227 = vmatmul.mubr.f32.gmra.mxu0 %v3226
    %v3228 = vpop.f32.mrf.mxu0
    %v3229 = vadd.f32 %v3132, %v3228
    %v3230 = vpop.f32.mrf.mxu0
    %3231 = vdwg.mxu0
    %3232 = vmatprep.subr.mxu0 0.0
    %3233 = vmatpush1.msra.mxu0 0.0
    %3234 = vmatprep.subr.mxu0 0.0
    %3235 = vmatpush1.msra.mxu0 0.0
    %3236 = vmatprep.subr.mxu0 0.0
    %3237 = vmatpush1.msra.mxu0 0.0
    %3238 = vmatprep.subr.mxu0 0.0
    %3239 = vmatpush1.msra.mxu0 0.0
    %3240 = vmatprep.subr.mxu0 0.0
    %3241 = vmatpush1.msra.mxu0 0.0
    %3242 = vmatprep.subr.mxu0 0.0
    %3243 = vmatpush1.msra.mxu0 0.0
    %3244 = vmatprep.subr.mxu0 0.0
    %3245 = vmatpush1.msra.mxu0 0.0
    %3246 = vmatprep.subr.mxu0 0.0
    %3247 = vmatpush1.msra.mxu0 0.0
    %3248 = vmatprep.subr.mxu0 0.0
    %3249 = vmatpush1.msra.mxu0 0.0
    %3250 = vmatprep.subr.mxu0 0.0
    %3251 = vmatpush1.msra.mxu0 0.0
    %3252 = vmatprep.subr.mxu0 0.0
    %3253 = vmatpush1.msra.mxu0 0.0
    %3254 = vmatprep.subr.mxu0 0.0
    %3255 = vmatpush1.msra.mxu0 0.0
    %3256 = vmatprep.subr.mxu0 0.0
    %v3257 = vand.u32 %v3006, 4294901760
    %v3258 = vsub.f32 %v3006, %v3257
    %3259 = vmatpush1.msra.mxu0 %v3258
    %3260 = vmatprep.subr.mxu0 0.0
    %v3261 = vand.u32 %v3005, 4294901760
    %v3262 = vsub.f32 %v3005, %v3261
    %3263 = vmatpush1.msra.mxu0 %v3262
    %3264 = vmatprep.subr.mxu0 0.0
    %v3265 = vand.u32 %v3028, 4294901760
    %v3266 = vsub.f32 %v3028, %v3265
    %3267 = vmatpush1.msra.mxu0 %v3266
    %3268 = vmatprep.subr.mxu0 0.0
    %v3269 = vand.u32 %v3027, 4294901760
    %v3270 = vsub.f32 %v3027, %v3269
    %3271 = vmatpush1.msra.mxu0 %v3270
    %3272 = vmatprep.subr.mxu0 0.0
    %3273 = vmatpush2.msra.mxu0 0.0
    %3274 = vmatprep.subr.mxu0 0.0
    %3275 = vmatpush2.msra.mxu0 0.0
    %3276 = vmatprep.subr.mxu0 0.0
    %3277 = vmatpush2.msra.mxu0 0.0
    %3278 = vmatprep.subr.mxu0 0.0
    %3279 = vmatpush2.msra.mxu0 0.0
    %3280 = vmatprep.subr.mxu0 0.0
    %3281 = vmatpush2.msra.mxu0 0.0
    %3282 = vmatprep.subr.mxu0 0.0
    %3283 = vmatpush2.msra.mxu0 0.0
    %3284 = vmatprep.subr.mxu0 0.0
    %3285 = vmatpush2.msra.mxu0 0.0
    %3286 = vmatprep.subr.mxu0 0.0
    %3287 = vmatpush2.msra.mxu0 0.0
    %3288 = vmatprep.subr.mxu0 0.0
    %3289 = vmatpush2.msra.mxu0 0.0
    %3290 = vmatprep.subr.mxu0 0.0
    %3291 = vmatpush2.msra.mxu0 0.0
    %3292 = vmatprep.subr.mxu0 0.0
    %3293 = vmatpush2.msra.mxu0 0.0
    %3294 = vmatprep.subr.mxu0 0.0
    %3295 = vmatpush2.msra.mxu0 0.0
    %3296 = vmatprep.subr.mxu0 0.0
    %3297 = vmatpush2.msra.mxu0 0.0
    %3298 = vmatprep.subr.mxu0 0.0
    %3299 = vmatpush2.msra.mxu0 0.0
    %3300 = vmatprep.subr.mxu0 0.0
    %3301 = vmatpush2.msra.mxu0 0.0
    %3302 = vmatprep.subr.mxu0 0.0
    %3303 = vmatpush2.msra.mxu0 0.0
    %3304 = vmatprep.mubr.f32.mxu0 0.0
    %v3305 = vand.u32 %v3041, 4294901760
    %v3306 = vsub.f32 %v3041, %v3305
    %3307 = vmatmul.mubr.f32.gmra.mxu0 %v3306
    %v3308 = vpop.f32.mrf.mxu0
    %v3309 = vadd.f32 %v3223, %v3308
    %v3310 = vpop.f32.mrf.mxu0
    %3311 = vmatprep.mubr.f32.mxu0 0.0
    %v3312 = vand.u32 %v3044, 4294901760
    %v3313 = vsub.f32 %v3044, %v3312
    %3314 = vmatmul.mubr.f32.gmra.mxu0 %v3313
    %v3315 = vpop.f32.mrf.mxu0
    %v3316 = vadd.f32 %v3229, %v3315
    %v3317 = vpop.f32.mrf.mxu0
    %3318 = vdwg.mxu0
    %3319 = vmatprep.subr.mxu0 0.0
    %3320 = vmatpush1.msra.mxu0 0.0
    %3321 = vmatprep.subr.mxu0 0.0
    %3322 = vmatpush1.msra.mxu0 0.0
    %3323 = vmatprep.subr.mxu0 0.0
    %3324 = vmatpush1.msra.mxu0 0.0
    %3325 = vmatprep.subr.mxu0 0.0
    %3326 = vmatpush1.msra.mxu0 0.0
    %3327 = vmatprep.subr.mxu0 0.0
    %3328 = vmatpush1.msra.mxu0 0.0
    %3329 = vmatprep.subr.mxu0 0.0
    %3330 = vmatpush1.msra.mxu0 0.0
    %3331 = vmatprep.subr.mxu0 0.0
    %3332 = vmatpush1.msra.mxu0 0.0
    %3333 = vmatprep.subr.mxu0 0.0
    %3334 = vmatpush1.msra.mxu0 0.0
    %3335 = vmatprep.subr.mxu0 0.0
    %3336 = vmatpush1.msra.mxu0 0.0
    %3337 = vmatprep.subr.mxu0 0.0
    %3338 = vmatpush1.msra.mxu0 0.0
    %3339 = vmatprep.subr.mxu0 0.0
    %3340 = vmatpush1.msra.mxu0 0.0
    %3341 = vmatprep.subr.mxu0 0.0
    %3342 = vmatpush1.msra.mxu0 0.0
    %3343 = vmatprep.subr.mxu0 0.0
    %v3344 = vand.u32 %v3006, 4294901760
    %3345 = vmatpush1.msra.mxu0 %v3344
    %3346 = vmatprep.subr.mxu0 0.0
    %v3347 = vand.u32 %v3005, 4294901760
    %3348 = vmatpush1.msra.mxu0 %v3347
    %3349 = vmatprep.subr.mxu0 0.0
    %v3350 = vand.u32 %v3028, 4294901760
    %3351 = vmatpush1.msra.mxu0 %v3350
    %3352 = vmatprep.subr.mxu0 0.0
    %v3353 = vand.u32 %v3027, 4294901760
    %3354 = vmatpush1.msra.mxu0 %v3353
    %3355 = vmatprep.subr.mxu0 0.0
    %3356 = vmatpush2.msra.mxu0 0.0
    %3357 = vmatprep.subr.mxu0 0.0
    %3358 = vmatpush2.msra.mxu0 0.0
    %3359 = vmatprep.subr.mxu0 0.0
    %3360 = vmatpush2.msra.mxu0 0.0
    %3361 = vmatprep.subr.mxu0 0.0
    %3362 = vmatpush2.msra.mxu0 0.0
    %3363 = vmatprep.subr.mxu0 0.0
    %3364 = vmatpush2.msra.mxu0 0.0
    %3365 = vmatprep.subr.mxu0 0.0
    %3366 = vmatpush2.msra.mxu0 0.0
    %3367 = vmatprep.subr.mxu0 0.0
    %3368 = vmatpush2.msra.mxu0 0.0
    %3369 = vmatprep.subr.mxu0 0.0
    %3370 = vmatpush2.msra.mxu0 0.0
    %3371 = vmatprep.subr.mxu0 0.0
    %3372 = vmatpush2.msra.mxu0 0.0
    %3373 = vmatprep.subr.mxu0 0.0
    %3374 = vmatpush2.msra.mxu0 0.0
    %3375 = vmatprep.subr.mxu0 0.0
    %3376 = vmatpush2.msra.mxu0 0.0
    %3377 = vmatprep.subr.mxu0 0.0
    %3378 = vmatpush2.msra.mxu0 0.0
    %3379 = vmatprep.subr.mxu0 0.0
    %3380 = vmatpush2.msra.mxu0 0.0
    %3381 = vmatprep.subr.mxu0 0.0
    %3382 = vmatpush2.msra.mxu0 0.0
    %3383 = vmatprep.subr.mxu0 0.0
    %3384 = vmatpush2.msra.mxu0 0.0
    %3385 = vmatprep.subr.mxu0 0.0
    %3386 = vmatpush2.msra.mxu0 0.0
    %3387 = vmatprep.mubr.f32.mxu0 0.0
    %v3388 = vand.u32 %v3041, 4294901760
    %v3389 = vsub.f32 %v3041, %v3388
    %v3390 = vand.u32 %v3389, 4294901760
    %3391 = vmatmul.mubr.f32.gmra.mxu0 %v3390
    %v3392 = vpop.f32.mrf.mxu0
    %v3393 = vadd.f32 %v3309, %v3392
    %v3394 = vpop.f32.mrf.mxu0
    %3395 = vmatprep.mubr.f32.mxu0 0.0
    %v3396 = vand.u32 %v3044, 4294901760
    %v3397 = vsub.f32 %v3044, %v3396
    %v3398 = vand.u32 %v3397, 4294901760
    %3399 = vmatmul.mubr.f32.gmra.mxu0 %v3398
    %v3400 = vpop.f32.mrf.mxu0
    %v3401 = vadd.f32 %v3316, %v3400
    %v3402 = vpop.f32.mrf.mxu0
    %3403 = vdwg.mxu0
    %3404 = vmatprep.subr.mxu0 0.0
    %3405 = vmatpush1.msra.mxu0 0.0
    %3406 = vmatprep.subr.mxu0 0.0
    %3407 = vmatpush1.msra.mxu0 0.0
    %3408 = vmatprep.subr.mxu0 0.0
    %3409 = vmatpush1.msra.mxu0 0.0
    %3410 = vmatprep.subr.mxu0 0.0
    %3411 = vmatpush1.msra.mxu0 0.0
    %3412 = vmatprep.subr.mxu0 0.0
    %3413 = vmatpush1.msra.mxu0 0.0
    %3414 = vmatprep.subr.mxu0 0.0
    %3415 = vmatpush1.msra.mxu0 0.0
    %3416 = vmatprep.subr.mxu0 0.0
    %3417 = vmatpush1.msra.mxu0 0.0
    %3418 = vmatprep.subr.mxu0 0.0
    %3419 = vmatpush1.msra.mxu0 0.0
    %3420 = vmatprep.subr.mxu0 0.0
    %3421 = vmatpush1.msra.mxu0 0.0
    %3422 = vmatprep.subr.mxu0 0.0
    %3423 = vmatpush1.msra.mxu0 0.0
    %3424 = vmatprep.subr.mxu0 0.0
    %3425 = vmatpush1.msra.mxu0 0.0
    %3426 = vmatprep.subr.mxu0 0.0
    %3427 = vmatpush1.msra.mxu0 0.0
    %3428 = vmatprep.subr.mxu0 0.0
    %v3429 = vand.u32 %v3006, 4294901760
    %v3430 = vsub.f32 %v3006, %v3429
    %v3431 = vand.u32 %v3430, 4294901760
    %3432 = vmatpush1.msra.mxu0 %v3431
    %3433 = vmatprep.subr.mxu0 0.0
    %v3434 = vand.u32 %v3005, 4294901760
    %v3435 = vsub.f32 %v3005, %v3434
    %v3436 = vand.u32 %v3435, 4294901760
    %3437 = vmatpush1.msra.mxu0 %v3436
    %3438 = vmatprep.subr.mxu0 0.0
    %v3439 = vand.u32 %v3028, 4294901760
    %v3440 = vsub.f32 %v3028, %v3439
    %v3441 = vand.u32 %v3440, 4294901760
    %3442 = vmatpush1.msra.mxu0 %v3441
    %3443 = vmatprep.subr.mxu0 0.0
    %v3444 = vand.u32 %v3027, 4294901760
    %v3445 = vsub.f32 %v3027, %v3444
    %v3446 = vand.u32 %v3445, 4294901760
    %3447 = vmatpush1.msra.mxu0 %v3446
    %3448 = vmatprep.subr.mxu0 0.0
    %3449 = vmatpush2.msra.mxu0 0.0
    %3450 = vmatprep.subr.mxu0 0.0
    %3451 = vmatpush2.msra.mxu0 0.0
    %3452 = vmatprep.subr.mxu0 0.0
    %3453 = vmatpush2.msra.mxu0 0.0
    %3454 = vmatprep.subr.mxu0 0.0
    %3455 = vmatpush2.msra.mxu0 0.0
    %3456 = vmatprep.subr.mxu0 0.0
    %3457 = vmatpush2.msra.mxu0 0.0
    %3458 = vmatprep.subr.mxu0 0.0
    %3459 = vmatpush2.msra.mxu0 0.0
    %3460 = vmatprep.subr.mxu0 0.0
    %3461 = vmatpush2.msra.mxu0 0.0
    %3462 = vmatprep.subr.mxu0 0.0
    %3463 = vmatpush2.msra.mxu0 0.0
    %3464 = vmatprep.subr.mxu0 0.0
    %3465 = vmatpush2.msra.mxu0 0.0
    %3466 = vmatprep.subr.mxu0 0.0
    %3467 = vmatpush2.msra.mxu0 0.0
    %3468 = vmatprep.subr.mxu0 0.0
    %3469 = vmatpush2.msra.mxu0 0.0
    %3470 = vmatprep.subr.mxu0 0.0
    %3471 = vmatpush2.msra.mxu0 0.0
    %3472 = vmatprep.subr.mxu0 0.0
    %3473 = vmatpush2.msra.mxu0 0.0
    %3474 = vmatprep.subr.mxu0 0.0
    %3475 = vmatpush2.msra.mxu0 0.0
    %3476 = vmatprep.subr.mxu0 0.0
    %3477 = vmatpush2.msra.mxu0 0.0
    %3478 = vmatprep.subr.mxu0 0.0
    %3479 = vmatpush2.msra.mxu0 0.0
    %3480 = vmatprep.mubr.f32.mxu0 0.0
    %v3481 = vand.u32 %v3041, 4294901760
    %3482 = vmatmul.mubr.f32.gmra.mxu0 %v3481
    %v3483 = vpop.f32.mrf.mxu0
    %v3484 = vadd.f32 %v3393, %v3483
    %v3485 = vpop.f32.mrf.mxu0
    %3486 = vmatprep.mubr.f32.mxu0 0.0
    %v3487 = vand.u32 %v3044, 4294901760
    %3488 = vmatmul.mubr.f32.gmra.mxu0 %v3487
    %v3489 = vpop.f32.mrf.mxu0
    %v3490 = vadd.f32 %v3401, %v3489
    %v3491 = vpop.f32.mrf.mxu0
    %3492 = vdwg.mxu0
    %3493 = vmatprep.subr.mxu0 0.0
    %3494 = vmatpush1.msra.mxu0 0.0
    %3495 = vmatprep.subr.mxu0 0.0
    %3496 = vmatpush1.msra.mxu0 0.0
    %3497 = vmatprep.subr.mxu0 0.0
    %3498 = vmatpush1.msra.mxu0 0.0
    %3499 = vmatprep.subr.mxu0 0.0
    %3500 = vmatpush1.msra.mxu0 0.0
    %3501 = vmatprep.subr.mxu0 0.0
    %3502 = vmatpush1.msra.mxu0 0.0
    %3503 = vmatprep.subr.mxu0 0.0
    %3504 = vmatpush1.msra.mxu0 0.0
    %3505 = vmatprep.subr.mxu0 0.0
    %3506 = vmatpush1.msra.mxu0 0.0
    %3507 = vmatprep.subr.mxu0 0.0
    %3508 = vmatpush1.msra.mxu0 0.0
    %3509 = vmatprep.subr.mxu0 0.0
    %3510 = vmatpush1.msra.mxu0 0.0
    %3511 = vmatprep.subr.mxu0 0.0
    %3512 = vmatpush1.msra.mxu0 0.0
    %3513 = vmatprep.subr.mxu0 0.0
    %3514 = vmatpush1.msra.mxu0 0.0
    %3515 = vmatprep.subr.mxu0 0.0
    %3516 = vmatpush1.msra.mxu0 0.0
    %3517 = vmatprep.subr.mxu0 0.0
    %v3518 = vand.u32 %v3006, 4294901760
    %3519 = vmatpush1.msra.mxu0 %v3518
    %3520 = vmatprep.subr.mxu0 0.0
    %v3521 = vand.u32 %v3005, 4294901760
    %3522 = vmatpush1.msra.mxu0 %v3521
    %3523 = vmatprep.subr.mxu0 0.0
    %v3524 = vand.u32 %v3028, 4294901760
    %3525 = vmatpush1.msra.mxu0 %v3524
    %3526 = vmatprep.subr.mxu0 0.0
    %v3527 = vand.u32 %v3027, 4294901760
    %3528 = vmatpush1.msra.mxu0 %v3527
    %3529 = vmatprep.subr.mxu0 0.0
    %3530 = vmatpush2.msra.mxu0 0.0
    %3531 = vmatprep.subr.mxu0 0.0
    %3532 = vmatpush2.msra.mxu0 0.0
    %3533 = vmatprep.subr.mxu0 0.0
    %3534 = vmatpush2.msra.mxu0 0.0
    %3535 = vmatprep.subr.mxu0 0.0
    %3536 = vmatpush2.msra.mxu0 0.0
    %3537 = vmatprep.subr.mxu0 0.0
    %3538 = vmatpush2.msra.mxu0 0.0
    %3539 = vmatprep.subr.mxu0 0.0
    %3540 = vmatpush2.msra.mxu0 0.0
    %3541 = vmatprep.subr.mxu0 0.0
    %3542 = vmatpush2.msra.mxu0 0.0
    %3543 = vmatprep.subr.mxu0 0.0
    %3544 = vmatpush2.msra.mxu0 0.0
    %3545 = vmatprep.subr.mxu0 0.0
    %3546 = vmatpush2.msra.mxu0 0.0
    %3547 = vmatprep.subr.mxu0 0.0
    %3548 = vmatpush2.msra.mxu0 0.0
    %3549 = vmatprep.subr.mxu0 0.0
    %3550 = vmatpush2.msra.mxu0 0.0
    %3551 = vmatprep.subr.mxu0 0.0
    %3552 = vmatpush2.msra.mxu0 0.0
    %3553 = vmatprep.subr.mxu0 0.0
    %3554 = vmatpush2.msra.mxu0 0.0
    %3555 = vmatprep.subr.mxu0 0.0
    %3556 = vmatpush2.msra.mxu0 0.0
    %3557 = vmatprep.subr.mxu0 0.0
    %3558 = vmatpush2.msra.mxu0 0.0
    %3559 = vmatprep.subr.mxu0 0.0
    %3560 = vmatpush2.msra.mxu0 0.0
    %3561 = vmatprep.mubr.f32.mxu0 0.0
    %v3562 = vand.u32 %v3041, 4294901760
    %3563 = vmatmul.mubr.f32.gmra.mxu0 %v3562
    %v3564 = vpop.f32.mrf.mxu0
    %v3565 = vadd.f32 %v3484, %v3564
    %v3566 = vpop.f32.mrf.mxu0
    %3567 = vmatprep.mubr.f32.mxu0 0.0
    %v3568 = vand.u32 %v3044, 4294901760
    %3569 = vmatmul.mubr.f32.gmra.mxu0 %v3568
    %v3570 = vpop.f32.mrf.mxu0
    %v3571 = vadd.f32 %v3490, %v3570
    %v3572 = vpop.f32.mrf.mxu0
    %3573 = vdwg.mxu0
    %v3574 = vmax.f32 %v3565, 0.0
    %v3575 = vmax.f32 %v3571, 0.0
    %v3576 = vld [vmem:[%s15] sm:$0xff]
    %v3577 = vld [vmem:[%s15 + $0x8] sm:$0xff]
    %v3578 = vld [vmem:[%s16] sm:$0xff]
    %v3579 = vld [vmem:[%s16 + $0x8] sm:$0xff]
    %3581 = vset.pattern.permute.xlu0 0
    %3582 = vperm.xlu0 %3581, %v3578
    %v3583 = vpop.permute.xlu0 %3582
    %3586 = vset.pattern.permute.xlu0 0
    %3587 = vperm.xlu0 %3586, %v3579
    %v3588 = vpop.permute.xlu0 %3587
    %v3591 = vsel %vm1048, %v3576, 0
    %v3594 = vsel %vm1048, %v3577, 0
    %3596 = vmatprep.subr.mxu0 0.0
    %3597 = vmatpush1.msra.mxu0 0.0
    %3598 = vmatprep.subr.mxu0 0.0
    %3599 = vmatpush1.msra.mxu0 0.0
    %3600 = vmatprep.subr.mxu0 0.0
    %3601 = vmatpush1.msra.mxu0 0.0
    %3602 = vmatprep.subr.mxu0 0.0
    %3603 = vmatpush1.msra.mxu0 0.0
    %3604 = vmatprep.subr.mxu0 0.0
    %3605 = vmatpush1.msra.mxu0 0.0
    %3606 = vmatprep.subr.mxu0 0.0
    %3607 = vmatpush1.msra.mxu0 0.0
    %3608 = vmatprep.subr.mxu0 0.0
    %3609 = vmatpush1.msra.mxu0 0.0
    %3610 = vmatprep.subr.mxu0 0.0
    %3611 = vmatpush1.msra.mxu0 0.0
    %3612 = vmatprep.subr.mxu0 0.0
    %3613 = vmatpush1.msra.mxu0 0.0
    %3614 = vmatprep.subr.mxu0 0.0
    %3615 = vmatpush1.msra.mxu0 0.0
    %3616 = vmatprep.subr.mxu0 0.0
    %3617 = vmatpush1.msra.mxu0 0.0
    %3618 = vmatprep.subr.mxu0 0.0
    %3619 = vmatpush1.msra.mxu0 0.0
    %3620 = vmatprep.subr.mxu0 0.0
    %3621 = vmatpush1.msra.mxu0 0.0
    %3622 = vmatprep.subr.mxu0 0.0
    %3623 = vmatpush1.msra.mxu0 0.0
    %3624 = vmatprep.subr.mxu0 0.0
    %3625 = vmatpush1.msra.mxu0 0.0
    %3626 = vmatprep.subr.mxu0 0.0
    %v3627 = vand.u32 %v2465, 4294901760
    %3628 = vmatpush1.msra.mxu0 %v3627
    %3629 = vmatprep.subr.mxu0 0.0
    %3630 = vmatpush2.msra.mxu0 0.0
    %3631 = vmatprep.subr.mxu0 0.0
    %3632 = vmatpush2.msra.mxu0 0.0
    %3633 = vmatprep.subr.mxu0 0.0
    %3634 = vmatpush2.msra.mxu0 0.0
    %3635 = vmatprep.subr.mxu0 0.0
    %3636 = vmatpush2.msra.mxu0 0.0
    %3637 = vmatprep.subr.mxu0 0.0
    %3638 = vmatpush2.msra.mxu0 0.0
    %3639 = vmatprep.subr.mxu0 0.0
    %3640 = vmatpush2.msra.mxu0 0.0
    %3641 = vmatprep.subr.mxu0 0.0
    %3642 = vmatpush2.msra.mxu0 0.0
    %3643 = vmatprep.subr.mxu0 0.0
    %3644 = vmatpush2.msra.mxu0 0.0
    %3645 = vmatprep.subr.mxu0 0.0
    %3646 = vmatpush2.msra.mxu0 0.0
    %3647 = vmatprep.subr.mxu0 0.0
    %3648 = vmatpush2.msra.mxu0 0.0
    %3649 = vmatprep.subr.mxu0 0.0
    %3650 = vmatpush2.msra.mxu0 0.0
    %3651 = vmatprep.subr.mxu0 0.0
    %3652 = vmatpush2.msra.mxu0 0.0
    %3653 = vmatprep.subr.mxu0 0.0
    %3654 = vmatpush2.msra.mxu0 0.0
    %3655 = vmatprep.subr.mxu0 0.0
    %3656 = vmatpush2.msra.mxu0 0.0
    %3657 = vmatprep.subr.mxu0 0.0
    %3658 = vmatpush2.msra.mxu0 0.0
    %3659 = vmatprep.subr.mxu0 0.0
    %3660 = vmatpush2.msra.mxu0 0.0
    %3661 = vmatprep.mubr.f32.mxu0 0.0
    %v3662 = vand.u32 %v3591, 4294901760
    %v3663 = vsub.f32 %v3591, %v3662
    %v3664 = vand.u32 %v3663, 4294901760
    %v3665 = vsub.f32 %v3663, %v3664
    %v3666 = vand.u32 %v3665, 4294901760
    %3667 = vmatmul.mubr.f32.gmra.mxu0 %v3666
    %v3668 = vpop.f32.mrf.mxu0
    %v3669 = vadd.f32 %v3583, %v3668
    %v3670 = vpop.f32.mrf.mxu0
    %3671 = vmatprep.mubr.f32.mxu0 0.0
    %v3672 = vand.u32 %v3594, 4294901760
    %v3673 = vsub.f32 %v3594, %v3672
    %v3674 = vand.u32 %v3673, 4294901760
    %v3675 = vsub.f32 %v3673, %v3674
    %v3676 = vand.u32 %v3675, 4294901760
    %3677 = vmatmul.mubr.f32.gmra.mxu0 %v3676
    %v3678 = vpop.f32.mrf.mxu0
    %v3679 = vadd.f32 %v3588, %v3678
    %v3680 = vpop.f32.mrf.mxu0
    %3681 = vdwg.mxu0
    %3682 = vmatprep.subr.mxu0 0.0
    %3683 = vmatpush1.msra.mxu0 0.0
    %3684 = vmatprep.subr.mxu0 0.0
    %3685 = vmatpush1.msra.mxu0 0.0
    %3686 = vmatprep.subr.mxu0 0.0
    %3687 = vmatpush1.msra.mxu0 0.0
    %3688 = vmatprep.subr.mxu0 0.0
    %3689 = vmatpush1.msra.mxu0 0.0
    %3690 = vmatprep.subr.mxu0 0.0
    %3691 = vmatpush1.msra.mxu0 0.0
    %3692 = vmatprep.subr.mxu0 0.0
    %3693 = vmatpush1.msra.mxu0 0.0
    %3694 = vmatprep.subr.mxu0 0.0
    %3695 = vmatpush1.msra.mxu0 0.0
    %3696 = vmatprep.subr.mxu0 0.0
    %3697 = vmatpush1.msra.mxu0 0.0
    %3698 = vmatprep.subr.mxu0 0.0
    %3699 = vmatpush1.msra.mxu0 0.0
    %3700 = vmatprep.subr.mxu0 0.0
    %3701 = vmatpush1.msra.mxu0 0.0
    %3702 = vmatprep.subr.mxu0 0.0
    %3703 = vmatpush1.msra.mxu0 0.0
    %3704 = vmatprep.subr.mxu0 0.0
    %3705 = vmatpush1.msra.mxu0 0.0
    %3706 = vmatprep.subr.mxu0 0.0
    %3707 = vmatpush1.msra.mxu0 0.0
    %3708 = vmatprep.subr.mxu0 0.0
    %3709 = vmatpush1.msra.mxu0 0.0
    %3710 = vmatprep.subr.mxu0 0.0
    %3711 = vmatpush1.msra.mxu0 0.0
    %3712 = vmatprep.subr.mxu0 0.0
    %v3713 = vand.u32 %v2465, 4294901760
    %v3714 = vsub.f32 %v2465, %v3713
    %v3715 = vand.u32 %v3714, 4294901760
    %v3716 = vsub.f32 %v3714, %v3715
    %v3717 = vand.u32 %v3716, 4294901760
    %3718 = vmatpush1.msra.mxu0 %v3717
    %3719 = vmatprep.subr.mxu0 0.0
    %3720 = vmatpush2.msra.mxu0 0.0
    %3721 = vmatprep.subr.mxu0 0.0
    %3722 = vmatpush2.msra.mxu0 0.0
    %3723 = vmatprep.subr.mxu0 0.0
    %3724 = vmatpush2.msra.mxu0 0.0
    %3725 = vmatprep.subr.mxu0 0.0
    %3726 = vmatpush2.msra.mxu0 0.0
    %3727 = vmatprep.subr.mxu0 0.0
    %3728 = vmatpush2.msra.mxu0 0.0
    %3729 = vmatprep.subr.mxu0 0.0
    %3730 = vmatpush2.msra.mxu0 0.0
    %3731 = vmatprep.subr.mxu0 0.0
    %3732 = vmatpush2.msra.mxu0 0.0
    %3733 = vmatprep.subr.mxu0 0.0
    %3734 = vmatpush2.msra.mxu0 0.0
    %3735 = vmatprep.subr.mxu0 0.0
    %3736 = vmatpush2.msra.mxu0 0.0
    %3737 = vmatprep.subr.mxu0 0.0
    %3738 = vmatpush2.msra.mxu0 0.0
    %3739 = vmatprep.subr.mxu0 0.0
    %3740 = vmatpush2.msra.mxu0 0.0
    %3741 = vmatprep.subr.mxu0 0.0
    %3742 = vmatpush2.msra.mxu0 0.0
    %3743 = vmatprep.subr.mxu0 0.0
    %3744 = vmatpush2.msra.mxu0 0.0
    %3745 = vmatprep.subr.mxu0 0.0
    %3746 = vmatpush2.msra.mxu0 0.0
    %3747 = vmatprep.subr.mxu0 0.0
    %3748 = vmatpush2.msra.mxu0 0.0
    %3749 = vmatprep.subr.mxu0 0.0
    %3750 = vmatpush2.msra.mxu0 0.0
    %3751 = vmatprep.mubr.f32.mxu0 0.0
    %v3752 = vand.u32 %v3591, 4294901760
    %3753 = vmatmul.mubr.f32.gmra.mxu0 %v3752
    %v3754 = vpop.f32.mrf.mxu0
    %v3755 = vadd.f32 %v3669, %v3754
    %v3756 = vpop.f32.mrf.mxu0
    %3757 = vmatprep.mubr.f32.mxu0 0.0
    %v3758 = vand.u32 %v3594, 4294901760
    %3759 = vmatmul.mubr.f32.gmra.mxu0 %v3758
    %v3760 = vpop.f32.mrf.mxu0
    %v3761 = vadd.f32 %v3679, %v3760
    %v3762 = vpop.f32.mrf.mxu0
    %3763 = vdwg.mxu0
    %3764 = vmatprep.subr.mxu0 0.0
    %3765 = vmatpush1.msra.mxu0 0.0
    %3766 = vmatprep.subr.mxu0 0.0
    %3767 = vmatpush1.msra.mxu0 0.0
    %3768 = vmatprep.subr.mxu0 0.0
    %3769 = vmatpush1.msra.mxu0 0.0
    %3770 = vmatprep.subr.mxu0 0.0
    %3771 = vmatpush1.msra.mxu0 0.0
    %3772 = vmatprep.subr.mxu0 0.0
    %3773 = vmatpush1.msra.mxu0 0.0
    %3774 = vmatprep.subr.mxu0 0.0
    %3775 = vmatpush1.msra.mxu0 0.0
    %3776 = vmatprep.subr.mxu0 0.0
    %3777 = vmatpush1.msra.mxu0 0.0
    %3778 = vmatprep.subr.mxu0 0.0
    %3779 = vmatpush1.msra.mxu0 0.0
    %3780 = vmatprep.subr.mxu0 0.0
    %3781 = vmatpush1.msra.mxu0 0.0
    %3782 = vmatprep.subr.mxu0 0.0
    %3783 = vmatpush1.msra.mxu0 0.0
    %3784 = vmatprep.subr.mxu0 0.0
    %3785 = vmatpush1.msra.mxu0 0.0
    %3786 = vmatprep.subr.mxu0 0.0
    %3787 = vmatpush1.msra.mxu0 0.0
    %3788 = vmatprep.subr.mxu0 0.0
    %3789 = vmatpush1.msra.mxu0 0.0
    %3790 = vmatprep.subr.mxu0 0.0
    %3791 = vmatpush1.msra.mxu0 0.0
    %3792 = vmatprep.subr.mxu0 0.0
    %3793 = vmatpush1.msra.mxu0 0.0
    %3794 = vmatprep.subr.mxu0 0.0
    %v3795 = vand.u32 %v2465, 4294901760
    %v3796 = vsub.f32 %v2465, %v3795
    %3797 = vmatpush1.msra.mxu0 %v3796
    %3798 = vmatprep.subr.mxu0 0.0
    %3799 = vmatpush2.msra.mxu0 0.0
    %3800 = vmatprep.subr.mxu0 0.0
    %3801 = vmatpush2.msra.mxu0 0.0
    %3802 = vmatprep.subr.mxu0 0.0
    %3803 = vmatpush2.msra.mxu0 0.0
    %3804 = vmatprep.subr.mxu0 0.0
    %3805 = vmatpush2.msra.mxu0 0.0
    %3806 = vmatprep.subr.mxu0 0.0
    %3807 = vmatpush2.msra.mxu0 0.0
    %3808 = vmatprep.subr.mxu0 0.0
    %3809 = vmatpush2.msra.mxu0 0.0
    %3810 = vmatprep.subr.mxu0 0.0
    %3811 = vmatpush2.msra.mxu0 0.0
    %3812 = vmatprep.subr.mxu0 0.0
    %3813 = vmatpush2.msra.mxu0 0.0
    %3814 = vmatprep.subr.mxu0 0.0
    %3815 = vmatpush2.msra.mxu0 0.0
    %3816 = vmatprep.subr.mxu0 0.0
    %3817 = vmatpush2.msra.mxu0 0.0
    %3818 = vmatprep.subr.mxu0 0.0
    %3819 = vmatpush2.msra.mxu0 0.0
    %3820 = vmatprep.subr.mxu0 0.0
    %3821 = vmatpush2.msra.mxu0 0.0
    %3822 = vmatprep.subr.mxu0 0.0
    %3823 = vmatpush2.msra.mxu0 0.0
    %3824 = vmatprep.subr.mxu0 0.0
    %3825 = vmatpush2.msra.mxu0 0.0
    %3826 = vmatprep.subr.mxu0 0.0
    %3827 = vmatpush2.msra.mxu0 0.0
    %3828 = vmatprep.subr.mxu0 0.0
    %3829 = vmatpush2.msra.mxu0 0.0
    %3830 = vmatprep.mubr.f32.mxu0 0.0
    %v3831 = vand.u32 %v3591, 4294901760
    %v3832 = vsub.f32 %v3591, %v3831
    %3833 = vmatmul.mubr.f32.gmra.mxu0 %v3832
    %v3834 = vpop.f32.mrf.mxu0
    %v3835 = vadd.f32 %v3755, %v3834
    %v3836 = vpop.f32.mrf.mxu0
    %3837 = vmatprep.mubr.f32.mxu0 0.0
    %v3838 = vand.u32 %v3594, 4294901760
    %v3839 = vsub.f32 %v3594, %v3838
    %3840 = vmatmul.mubr.f32.gmra.mxu0 %v3839
    %v3841 = vpop.f32.mrf.mxu0
    %v3842 = vadd.f32 %v3761, %v3841
    %v3843 = vpop.f32.mrf.mxu0
    %3844 = vdwg.mxu0
    %3845 = vmatprep.subr.mxu0 0.0
    %3846 = vmatpush1.msra.mxu0 0.0
    %3847 = vmatprep.subr.mxu0 0.0
    %3848 = vmatpush1.msra.mxu0 0.0
    %3849 = vmatprep.subr.mxu0 0.0
    %3850 = vmatpush1.msra.mxu0 0.0
    %3851 = vmatprep.subr.mxu0 0.0
    %3852 = vmatpush1.msra.mxu0 0.0
    %3853 = vmatprep.subr.mxu0 0.0
    %3854 = vmatpush1.msra.mxu0 0.0
    %3855 = vmatprep.subr.mxu0 0.0
    %3856 = vmatpush1.msra.mxu0 0.0
    %3857 = vmatprep.subr.mxu0 0.0
    %3858 = vmatpush1.msra.mxu0 0.0
    %3859 = vmatprep.subr.mxu0 0.0
    %3860 = vmatpush1.msra.mxu0 0.0
    %3861 = vmatprep.subr.mxu0 0.0
    %3862 = vmatpush1.msra.mxu0 0.0
    %3863 = vmatprep.subr.mxu0 0.0
    %3864 = vmatpush1.msra.mxu0 0.0
    %3865 = vmatprep.subr.mxu0 0.0
    %3866 = vmatpush1.msra.mxu0 0.0
    %3867 = vmatprep.subr.mxu0 0.0
    %3868 = vmatpush1.msra.mxu0 0.0
    %3869 = vmatprep.subr.mxu0 0.0
    %3870 = vmatpush1.msra.mxu0 0.0
    %3871 = vmatprep.subr.mxu0 0.0
    %3872 = vmatpush1.msra.mxu0 0.0
    %3873 = vmatprep.subr.mxu0 0.0
    %3874 = vmatpush1.msra.mxu0 0.0
    %3875 = vmatprep.subr.mxu0 0.0
    %v3876 = vand.u32 %v2465, 4294901760
    %3877 = vmatpush1.msra.mxu0 %v3876
    %3878 = vmatprep.subr.mxu0 0.0
    %3879 = vmatpush2.msra.mxu0 0.0
    %3880 = vmatprep.subr.mxu0 0.0
    %3881 = vmatpush2.msra.mxu0 0.0
    %3882 = vmatprep.subr.mxu0 0.0
    %3883 = vmatpush2.msra.mxu0 0.0
    %3884 = vmatprep.subr.mxu0 0.0
    %3885 = vmatpush2.msra.mxu0 0.0
    %3886 = vmatprep.subr.mxu0 0.0
    %3887 = vmatpush2.msra.mxu0 0.0
    %3888 = vmatprep.subr.mxu0 0.0
    %3889 = vmatpush2.msra.mxu0 0.0
    %3890 = vmatprep.subr.mxu0 0.0
    %3891 = vmatpush2.msra.mxu0 0.0
    %3892 = vmatprep.subr.mxu0 0.0
    %3893 = vmatpush2.msra.mxu0 0.0
    %3894 = vmatprep.subr.mxu0 0.0
    %3895 = vmatpush2.msra.mxu0 0.0
    %3896 = vmatprep.subr.mxu0 0.0
    %3897 = vmatpush2.msra.mxu0 0.0
    %3898 = vmatprep.subr.mxu0 0.0
    %3899 = vmatpush2.msra.mxu0 0.0
    %3900 = vmatprep.subr.mxu0 0.0
    %3901 = vmatpush2.msra.mxu0 0.0
    %3902 = vmatprep.subr.mxu0 0.0
    %3903 = vmatpush2.msra.mxu0 0.0
    %3904 = vmatprep.subr.mxu0 0.0
    %3905 = vmatpush2.msra.mxu0 0.0
    %3906 = vmatprep.subr.mxu0 0.0
    %3907 = vmatpush2.msra.mxu0 0.0
    %3908 = vmatprep.subr.mxu0 0.0
    %3909 = vmatpush2.msra.mxu0 0.0
    %3910 = vmatprep.mubr.f32.mxu0 0.0
    %v3911 = vand.u32 %v3591, 4294901760
    %v3912 = vsub.f32 %v3591, %v3911
    %v3913 = vand.u32 %v3912, 4294901760
    %3914 = vmatmul.mubr.f32.gmra.mxu0 %v3913
    %v3915 = vpop.f32.mrf.mxu0
    %v3916 = vadd.f32 %v3835, %v3915
    %v3917 = vpop.f32.mrf.mxu0
    %3918 = vmatprep.mubr.f32.mxu0 0.0
    %v3919 = vand.u32 %v3594, 4294901760
    %v3920 = vsub.f32 %v3594, %v3919
    %v3921 = vand.u32 %v3920, 4294901760
    %3922 = vmatmul.mubr.f32.gmra.mxu0 %v3921
    %v3923 = vpop.f32.mrf.mxu0
    %v3924 = vadd.f32 %v3842, %v3923
    %v3925 = vpop.f32.mrf.mxu0
    %3926 = vdwg.mxu0
    %3927 = vmatprep.subr.mxu0 0.0
    %3928 = vmatpush1.msra.mxu0 0.0
    %3929 = vmatprep.subr.mxu0 0.0
    %3930 = vmatpush1.msra.mxu0 0.0
    %3931 = vmatprep.subr.mxu0 0.0
    %3932 = vmatpush1.msra.mxu0 0.0
    %3933 = vmatprep.subr.mxu0 0.0
    %3934 = vmatpush1.msra.mxu0 0.0
    %3935 = vmatprep.subr.mxu0 0.0
    %3936 = vmatpush1.msra.mxu0 0.0
    %3937 = vmatprep.subr.mxu0 0.0
    %3938 = vmatpush1.msra.mxu0 0.0
    %3939 = vmatprep.subr.mxu0 0.0
    %3940 = vmatpush1.msra.mxu0 0.0
    %3941 = vmatprep.subr.mxu0 0.0
    %3942 = vmatpush1.msra.mxu0 0.0
    %3943 = vmatprep.subr.mxu0 0.0
    %3944 = vmatpush1.msra.mxu0 0.0
    %3945 = vmatprep.subr.mxu0 0.0
    %3946 = vmatpush1.msra.mxu0 0.0
    %3947 = vmatprep.subr.mxu0 0.0
    %3948 = vmatpush1.msra.mxu0 0.0
    %3949 = vmatprep.subr.mxu0 0.0
    %3950 = vmatpush1.msra.mxu0 0.0
    %3951 = vmatprep.subr.mxu0 0.0
    %3952 = vmatpush1.msra.mxu0 0.0
    %3953 = vmatprep.subr.mxu0 0.0
    %3954 = vmatpush1.msra.mxu0 0.0
    %3955 = vmatprep.subr.mxu0 0.0
    %3956 = vmatpush1.msra.mxu0 0.0
    %3957 = vmatprep.subr.mxu0 0.0
    %v3958 = vand.u32 %v2465, 4294901760
    %v3959 = vsub.f32 %v2465, %v3958
    %v3960 = vand.u32 %v3959, 4294901760
    %3961 = vmatpush1.msra.mxu0 %v3960
    %3962 = vmatprep.subr.mxu0 0.0
    %3963 = vmatpush2.msra.mxu0 0.0
    %3964 = vmatprep.subr.mxu0 0.0
    %3965 = vmatpush2.msra.mxu0 0.0
    %3966 = vmatprep.subr.mxu0 0.0
    %3967 = vmatpush2.msra.mxu0 0.0
    %3968 = vmatprep.subr.mxu0 0.0
    %3969 = vmatpush2.msra.mxu0 0.0
    %3970 = vmatprep.subr.mxu0 0.0
    %3971 = vmatpush2.msra.mxu0 0.0
    %3972 = vmatprep.subr.mxu0 0.0
    %3973 = vmatpush2.msra.mxu0 0.0
    %3974 = vmatprep.subr.mxu0 0.0
    %3975 = vmatpush2.msra.mxu0 0.0
    %3976 = vmatprep.subr.mxu0 0.0
    %3977 = vmatpush2.msra.mxu0 0.0
    %3978 = vmatprep.subr.mxu0 0.0
    %3979 = vmatpush2.msra.mxu0 0.0
    %3980 = vmatprep.subr.mxu0 0.0
    %3981 = vmatpush2.msra.mxu0 0.0
    %3982 = vmatprep.subr.mxu0 0.0
    %3983 = vmatpush2.msra.mxu0 0.0
    %3984 = vmatprep.subr.mxu0 0.0
    %3985 = vmatpush2.msra.mxu0 0.0
    %3986 = vmatprep.subr.mxu0 0.0
    %3987 = vmatpush2.msra.mxu0 0.0
    %3988 = vmatprep.subr.mxu0 0.0
    %3989 = vmatpush2.msra.mxu0 0.0
    %3990 = vmatprep.subr.mxu0 0.0
    %3991 = vmatpush2.msra.mxu0 0.0
    %3992 = vmatprep.subr.mxu0 0.0
    %3993 = vmatpush2.msra.mxu0 0.0
    %3994 = vmatprep.mubr.f32.mxu0 0.0
    %v3995 = vand.u32 %v3591, 4294901760
    %3996 = vmatmul.mubr.f32.gmra.mxu0 %v3995
    %v3997 = vpop.f32.mrf.mxu0
    %v3998 = vadd.f32 %v3916, %v3997
    %v3999 = vpop.f32.mrf.mxu0
    %4000 = vmatprep.mubr.f32.mxu0 0.0
    %v4001 = vand.u32 %v3594, 4294901760
    %4002 = vmatmul.mubr.f32.gmra.mxu0 %v4001
    %v4003 = vpop.f32.mrf.mxu0
    %v4004 = vadd.f32 %v3924, %v4003
    %v4005 = vpop.f32.mrf.mxu0
    %4006 = vdwg.mxu0
    %4007 = vmatprep.subr.mxu0 0.0
    %4008 = vmatpush1.msra.mxu0 0.0
    %4009 = vmatprep.subr.mxu0 0.0
    %4010 = vmatpush1.msra.mxu0 0.0
    %4011 = vmatprep.subr.mxu0 0.0
    %4012 = vmatpush1.msra.mxu0 0.0
    %4013 = vmatprep.subr.mxu0 0.0
    %4014 = vmatpush1.msra.mxu0 0.0
    %4015 = vmatprep.subr.mxu0 0.0
    %4016 = vmatpush1.msra.mxu0 0.0
    %4017 = vmatprep.subr.mxu0 0.0
    %4018 = vmatpush1.msra.mxu0 0.0
    %4019 = vmatprep.subr.mxu0 0.0
    %4020 = vmatpush1.msra.mxu0 0.0
    %4021 = vmatprep.subr.mxu0 0.0
    %4022 = vmatpush1.msra.mxu0 0.0
    %4023 = vmatprep.subr.mxu0 0.0
    %4024 = vmatpush1.msra.mxu0 0.0
    %4025 = vmatprep.subr.mxu0 0.0
    %4026 = vmatpush1.msra.mxu0 0.0
    %4027 = vmatprep.subr.mxu0 0.0
    %4028 = vmatpush1.msra.mxu0 0.0
    %4029 = vmatprep.subr.mxu0 0.0
    %4030 = vmatpush1.msra.mxu0 0.0
    %4031 = vmatprep.subr.mxu0 0.0
    %4032 = vmatpush1.msra.mxu0 0.0
    %4033 = vmatprep.subr.mxu0 0.0
    %4034 = vmatpush1.msra.mxu0 0.0
    %4035 = vmatprep.subr.mxu0 0.0
    %4036 = vmatpush1.msra.mxu0 0.0
    %4037 = vmatprep.subr.mxu0 0.0
    %v4038 = vand.u32 %v2465, 4294901760
    %4039 = vmatpush1.msra.mxu0 %v4038
    %4040 = vmatprep.subr.mxu0 0.0
    %4041 = vmatpush2.msra.mxu0 0.0
    %4042 = vmatprep.subr.mxu0 0.0
    %4043 = vmatpush2.msra.mxu0 0.0
    %4044 = vmatprep.subr.mxu0 0.0
    %4045 = vmatpush2.msra.mxu0 0.0
    %4046 = vmatprep.subr.mxu0 0.0
    %4047 = vmatpush2.msra.mxu0 0.0
    %4048 = vmatprep.subr.mxu0 0.0
    %4049 = vmatpush2.msra.mxu0 0.0
    %4050 = vmatprep.subr.mxu0 0.0
    %4051 = vmatpush2.msra.mxu0 0.0
    %4052 = vmatprep.subr.mxu0 0.0
    %4053 = vmatpush2.msra.mxu0 0.0
    %4054 = vmatprep.subr.mxu0 0.0
    %4055 = vmatpush2.msra.mxu0 0.0
    %4056 = vmatprep.subr.mxu0 0.0
    %4057 = vmatpush2.msra.mxu0 0.0
    %4058 = vmatprep.subr.mxu0 0.0
    %4059 = vmatpush2.msra.mxu0 0.0
    %4060 = vmatprep.subr.mxu0 0.0
    %4061 = vmatpush2.msra.mxu0 0.0
    %4062 = vmatprep.subr.mxu0 0.0
    %4063 = vmatpush2.msra.mxu0 0.0
    %4064 = vmatprep.subr.mxu0 0.0
    %4065 = vmatpush2.msra.mxu0 0.0
    %4066 = vmatprep.subr.mxu0 0.0
    %4067 = vmatpush2.msra.mxu0 0.0
    %4068 = vmatprep.subr.mxu0 0.0
    %4069 = vmatpush2.msra.mxu0 0.0
    %4070 = vmatprep.subr.mxu0 0.0
    %4071 = vmatpush2.msra.mxu0 0.0
    %4072 = vmatprep.mubr.f32.mxu0 0.0
    %v4073 = vand.u32 %v3591, 4294901760
    %4074 = vmatmul.mubr.f32.gmra.mxu0 %v4073
    %v4075 = vpop.f32.mrf.mxu0
    %v4076 = vadd.f32 %v3998, %v4075
    %v4077 = vpop.f32.mrf.mxu0
    %4078 = vmatprep.mubr.f32.mxu0 0.0
    %v4079 = vand.u32 %v3594, 4294901760
    %4080 = vmatmul.mubr.f32.gmra.mxu0 %v4079
    %v4081 = vpop.f32.mrf.mxu0
    %v4082 = vadd.f32 %v4004, %v4081
    %v4083 = vpop.f32.mrf.mxu0
    %4084 = vdwg.mxu0
    %v4085 = vadd.f32 %v3574, %v4076
    %v4086 = vadd.f32 %v3575, %v4082
    %v4087 = vmax.f32 %v4085, 0.0
    %v4088 = vmax.f32 %v4086, 0.0
    %4089 = vst.msk [vmem:[#allocation2] sm:$0xff] %vm3039, %v4087
    %4090 = vst.msk [vmem:[#allocation2 + $0x8] sm:$0xff] %vm3039, %v4088
    // Predicated region
    $region70: #{tpu_custom_call.1} parent=1 // pred_check
      _
    $region71: #{tpu_custom_call.1} parent=1 // pred_check_branch
      %4092 = sbr.rel (0) target = $region73
    $region72: #{tpu_custom_call.1} parent=1 // pred_region
      %s4094 = ssub.s32 256, 256
      %4095 = vsyncadd [#allocation3], %s4094
      %s4096 = sshll.u32 [#allocation2], 4
      %s4097 = int_to_ptr.vmem [resolvable:$true] %s4096
      %4102 = dma.vmem_to_hbm [thread:$0]  %s4097, 256, %s17, [#allocation3], 128, 128, 8
    $region73: #{tpu_custom_call.1} parent=1 // pred_fallthru
      _
    // Predicated region
    $region74: #{tpu_custom_call.1} parent=1 // pred_check
      _
    $region75: #{tpu_custom_call.1} parent=1 // pred_check_branch
      %4104 = sbr.rel (0) target = $region77
    $region76: #{tpu_custom_call.1} parent=1 // pred_region
      %4105 = dma.done [#allocation3], 256
    $region77: #{tpu_custom_call.1} parent=1 // pred_fallthru
      _
    %4106 = vsyncpa [#allocation3], 1

</llo_original>
